<compile_context>
chip_gen: v5e
topology: v5e:2x2
jax: 0.10.0
libtpu: 0.0.40
codegen_flags: <defaults>
</compile_context>

<pallas_src>
import jax
import jax.numpy as jnp
import numpy as np
from jax.experimental import pallas as pl
from jax.experimental.pallas import tpu as pltpu

SCALE = 2
C_HEAD0 = 32
C_MID = 16
C_TAIL0 = 32
C_OUT = SCALE * SCALE


# --------------------------------------------------------------------------
# Kernel
# --------------------------------------------------------------------------
def fusionnet_kernel(x_ref, A0_ref, b0_ref, BD1_ref, b1_ref, AL_ref, bL_ref,
                     BD2_ref, bt0_ref, AT_ref, bt1_ref,
                     y_ref, xpad, z2pad, z4pad):
    B, H, W = x_ref.shape
    WCm = AL_ref.shape[1]            # W * C_MID
    WCt = AT_ref.shape[1]            # W * C_TAIL0

    x = x_ref[...]                   # (B, H, W)
    x_rows = x.reshape(B * H, W)

    # Re-zero only the vertical halo rows of the padded scratch buffers each step
    # (interior rows are fully overwritten below; halo is a handful of rows).
    xpad[:, 0:2, :] = jnp.zeros((B, 2, W), jnp.float32)
    xpad[:, H + 2:H + 4, :] = jnp.zeros((B, 2, W), jnp.float32)
    z2pad[:, 0:1, :] = jnp.zeros((B, 1, WCm), jnp.float32)
    z2pad[:, H + 1:H + 2, :] = jnp.zeros((B, 1, WCm), jnp.float32)
    z4pad[:, 0:1, :] = jnp.zeros((B, 1, WCt), jnp.float32)
    z4pad[:, H + 1:H + 2, :] = jnp.zeros((B, 1, WCt), jnp.float32)

    # ---- head[0]: 5x5 conv 1->32, pad 2, ReLU (5 banded MXU matmuls) ----
    xpad[:, 2:2 + H, :] = x
    acc0 = jnp.zeros((B * H, W * C_HEAD0), jnp.float32)
    for dh in range(5):
        tap = xpad[:, dh:dh + H, :].reshape(B * H, W)
        acc0 = acc0 + jnp.dot(tap, A0_ref[dh],
                              preferred_element_type=jnp.float32)
    z1 = jnp.maximum(acc0 + b0_ref[...], 0.0)          # (B*H, W*32)

    # ---- head[1]: 1x1 conv 32->16, ReLU (block-diagonal matmul) ----
    z2 = jnp.maximum(
        jnp.dot(z1, BD1_ref[...], preferred_element_type=jnp.float32)
        + b1_ref[...], 0.0)                            # (B*H, W*16)

    # ---- branch[0] (LargeModule): 3x3 conv 16->16, pad 1, ReLU ----
    z2pad[:, 1:1 + H, :] = z2.reshape(B, H, WCm)
    accb = jnp.zeros((B * H, WCm), jnp.float32)
    for dh in range(3):
        tap = z2pad[:, dh:dh + H, :].reshape(B * H, WCm)
        accb = accb + jnp.dot(tap, AL_ref[dh],
                              preferred_element_type=jnp.float32)
    z3 = jnp.maximum(accb + bL_ref[...], 0.0)          # (B*H, W*16)

    # ---- tail[0]: 1x1 conv 16->32, ReLU (block-diagonal matmul) ----
    z4 = jnp.maximum(
        jnp.dot(z3, BD2_ref[...], preferred_element_type=jnp.float32)
        + bt0_ref[...], 0.0)                           # (B*H, W*32)

    # ---- tail[1]: 3x3 conv 32->4, pad 1 (banded matmuls, planar output) ----
    z4pad[:, 1:1 + H, :] = z4.reshape(B, H, WCt)
    acct = jnp.zeros((B * H, C_OUT * W), jnp.float32)
    for dh in range(3):
        tap = z4pad[:, dh:dh + H, :].reshape(B * H, WCt)
        acct = acct + jnp.dot(tap, AT_ref[dh],
                              preferred_element_type=jnp.float32)
    out = acct + bt1_ref[...]                          # (B*H, 4*W), column = c*W + w

    # ---- residual_stack + direct NCHW store ----
    # TODO(synk): residual_stack is not defined in the source file; the standard
    # sub-pixel residual (broadcast the LR input over the scale^2 output channels)
    # is assumed: y[:, c] = conv_out[:, c] + x.
    for c in range(C_OUT):
        plane = out[:, c * W:(c + 1) * W] + x_rows     # (B*H, W)
        y_ref[:, c:c + 1, :, :] = plane.reshape(B, 1, H, W)


# --------------------------------------------------------------------------
# Host-side construction of the structured (banded / block-diagonal) matrices
# --------------------------------------------------------------------------
def _banded_head(w, W):
    # w: (5, 5, 1, Cout).  A[dh, w_in, w_out*Cout + c] = w[dh, dw, 0, c]
    K = w.shape[0]
    Cout = w.shape[3]
    p = K // 2
    A = np.zeros((K, W, W * Cout), np.float32)
    for dh in range(K):
        for wo in range(W):
            for dw in range(K):
                wi = wo + dw - p
                if 0 <= wi < W:
                    A[dh, wi, wo * Cout:(wo + 1) * Cout] = w[dh, dw, 0, :]
    return A


def _banded(w, W):
    # w: (K, K, Cin, Cout).  A[dh, w_in*Cin+ci, w_out*Cout+co] = w[dh, dw, ci, co]
    K, _, Cin, Cout = w.shape
    p = K // 2
    A = np.zeros((K, W * Cin, W * Cout), np.float32)
    for dh in range(K):
        for wo in range(W):
            for dw in range(K):
                wi = wo + dw - p
                if 0 <= wi < W:
                    A[dh, wi * Cin:(wi + 1) * Cin,
                      wo * Cout:(wo + 1) * Cout] = w[dh, dw]
    return A


def _banded_planar(w, W):
    # Same as _banded but the output columns are planar (c*W + w_out) so the
    # kernel can slice contiguous lanes per output channel plane.
    K, _, Cin, Cout = w.shape
    p = K // 2
    A = np.zeros((K, W * Cin, Cout * W), np.float32)
    for dh in range(K):
        for wo in range(W):
            for dw in range(K):
                wi = wo + dw - p
                if 0 <= wi < W:
                    for c in range(Cout):
                        A[dh, wi * Cin:(wi + 1) * Cin, c * W + wo] = w[dh, dw, :, c]
    return A


def _block_diag(w, W):
    # w: (Cin, Cout) -> (W*Cin, W*Cout) block-diagonal (1x1 conv in row layout).
    Cin, Cout = w.shape
    A = np.zeros((W * Cin, W * Cout), np.float32)
    for i in range(W):
        A[i * Cin:(i + 1) * Cin, i * Cout:(i + 1) * Cout] = w
    return A


def build_operands(params, W):
    wh0, bh0, wh1, bh1, wL, bL, wt0, bt0, wt1, bt1 = [np.asarray(p) for p in params]
    A0 = _banded_head(wh0, W)                          # (5, W, W*32)
    b0t = np.tile(bh0, W)[None, :]                     # (1, W*32)
    BD1 = _block_diag(wh1, W)                          # (W*32, W*16)
    b1t = np.tile(bh1, W)[None, :]
    AL = _banded(wL, W)                                # (3, W*16, W*16)
    bLt = np.tile(bL, W)[None, :]
    BD2 = _block_diag(wt0, W)                          # (W*16, W*32)
    bt0t = np.tile(bt0, W)[None, :]
    AT = _banded_planar(wt1, W)                        # (3, W*32, 4*W)
    bt1t = np.repeat(bt1, W)[None, :]                  # (1, 4*W) planar
    return tuple(jnp.asarray(a, jnp.float32)
                 for a in (A0, b0t, BD1, b1t, AL, bLt, BD2, bt0t, AT, bt1t))


# --------------------------------------------------------------------------
# Wrapper
# --------------------------------------------------------------------------
def fusionnet_forward(x_nchw, params, block_batch=None):
    N, C, H, W = x_nchw.shape
    assert C == 1
    x = x_nchw[:, 0, :, :]                             # (N, H, W)

    if block_batch is None:
        block_batch = next(b for b in (8, 4, 2, 1) if N % b == 0)
    B = block_batch
    ops = build_operands(params, W)
    A0, b0t, BD1, b1t, AL, bLt, BD2, bt0t, AT, bt1t = ops

    def full(shape):
        return pl.BlockSpec(shape, lambda n: (0,) * len(shape))

    out = pl.pallas_call(
        fusionnet_kernel,
        out_shape=jax.ShapeDtypeStruct((N, C_OUT, H, W), jnp.float32),
        grid_spec=pltpu.PrefetchScalarGridSpec(
            num_scalar_prefetch=0,
            grid=(N // B,),
            in_specs=[
                pl.BlockSpec((B, H, W), lambda n: (n, 0, 0)),
                full(A0.shape), full(b0t.shape),
                full(BD1.shape), full(b1t.shape),
                full(AL.shape), full(bLt.shape),
                full(BD2.shape), full(bt0t.shape),
                full(AT.shape), full(bt1t.shape),
            ],
            out_specs=pl.BlockSpec((B, C_OUT, H, W), lambda n: (n, 0, 0, 0)),
            scratch_shapes=[
                pltpu.VMEM((B, H + 4, W), jnp.float32),             # head0 row pad
                pltpu.VMEM((B, H + 2, W * C_MID), jnp.float32),     # branch row pad
                pltpu.VMEM((B, H + 2, W * C_TAIL0), jnp.float32),   # tail1 row pad
            ],
        ),
        compiler_params=pltpu.CompilerParams(
            dimension_semantics=("parallel",)),
    )(x, A0, b0t, BD1, b1t, AL, bLt, BD2, bt0t, AT, bt1t)
    return out                                          # already NCHW (N, 4, H, W)


# -------------------- deterministic parameter init --------------------
def _xavier_uniform(key, shape_hwio):
    kh, kw, cin, cout = shape_hwio
    bound = float(np.sqrt(6.0 / (cin * kh * kw + cout * kh * kw)))
    return jax.random.uniform(key, shape_hwio, jnp.float32, -bound, bound)


def init_params(key):
    k = jax.random.split(key, 5)
    wh0 = _xavier_uniform(k[0], (5, 5, 1, C_HEAD0))
    wh1 = _xavier_uniform(k[1], (1, 1, C_HEAD0, C_MID)).reshape(C_HEAD0, C_MID)
    wL = _xavier_uniform(k[2], (3, 3, C_MID, C_MID))
    wt0 = _xavier_uniform(k[3], (1, 1, C_MID, C_TAIL0)).reshape(C_MID, C_TAIL0)
    wt1 = _xavier_uniform(k[4], (3, 3, C_TAIL0, C_OUT))
    bias = lambda c: jnp.full((c,), 0.01, jnp.float32)
    return (wh0, bias(C_HEAD0), wh1, bias(C_MID), wL, bias(C_MID),
            wt0, bias(C_TAIL0), wt1, bias(C_OUT))


# -------------------- pure-JAX reference for validation --------------------
def reference_forward(x_nchw, params):
    wh0, bh0, wh1, bh1, wL, bL, wt0, bt0, wt1, bt1 = params
    x = jnp.transpose(x_nchw, (0, 2, 3, 1))             # NHWC

    def conv(z, w_hwio, b, pad):
        y = jax.lax.conv_general_dilated(
            z, w_hwio, (1, 1), [(pad, pad), (pad, pad)],
            dimension_numbers=("NHWC", "HWIO", "NHWC"))
        return y + b.reshape(1, 1, 1, -1)

    z = jax.nn.relu(conv(x, wh0, bh0, 2))
    z = jax.nn.relu(conv(z, wh1.reshape(1, 1, C_HEAD0, C_MID), bh1, 0))
    z = jax.nn.relu(conv(z, wL, bL, 1))
    z = jax.nn.relu(conv(z, wt0.reshape(1, 1, C_MID, C_TAIL0), bt0, 0))
    z = conv(z, wt1, bt1, 1)
    y = z + x                                            # residual stack (broadcast)
    return jnp.transpose(y, (0, 3, 1, 2))


if __name__ == "__main__":
    key = jax.random.PRNGKey(0)
    kx, kp = jax.random.split(key)
    x = jax.random.normal(kx, (2, 1, 16, 16), jnp.float32)   # NCHW, 1 channel
    params = init_params(kp)

    y = fusionnet_forward(x, params)
    y = jax.block_until_ready(y)

    y_ref = reference_forward(x, params)
    np.testing.assert_allclose(np.asarray(y), np.asarray(y_ref),
                               rtol=1e-4, atol=1e-4)
    print("KERNEL_OK")
</pallas_src>

<mosaic_0001>
module attributes {stable_mosaic.version = 11 : i64} {
  func.func @fusionnet_kernel(%arg0: i32, %arg1: memref<2x16x16xf32, #tpu.memory_space<vmem>>, %arg2: memref<5x16x512xf32, #tpu.memory_space<vmem>>, %arg3: memref<1x512xf32, #tpu.memory_space<vmem>>, %arg4: memref<512x256xf32, #tpu.memory_space<vmem>>, %arg5: memref<1x256xf32, #tpu.memory_space<vmem>>, %arg6: memref<3x256x256xf32, #tpu.memory_space<vmem>>, %arg7: memref<1x256xf32, #tpu.memory_space<vmem>>, %arg8: memref<256x512xf32, #tpu.memory_space<vmem>>, %arg9: memref<1x512xf32, #tpu.memory_space<vmem>>, %arg10: memref<3x512x64xf32, #tpu.memory_space<vmem>>, %arg11: memref<1x64xf32, #tpu.memory_space<vmem>>, %arg12: memref<2x4x16x16xf32, #tpu.memory_space<vmem>>, %arg13: memref<2x20x16xf32, #tpu.memory_space<vmem>>, %arg14: memref<2x18x256xf32, #tpu.memory_space<vmem>>, %arg15: memref<2x18x512xf32, #tpu.memory_space<vmem>>) attributes {dimension_semantics = [#tpu.dimension_semantics<parallel>], iteration_bounds = array<i64: 1>, scalar_prefetch = 0 : i64, scratch_operands = 3 : i64, tpu.core_type = #tpu.core_type<tc>, window_params = [{transform_indices = @transform_0, window_bounds = array<i64: 2, 16, 16>}, {pipeline_mode = #tpu.pipeline_mode<synchronous>, transform_indices = @transform_1, window_bounds = array<i64: 5, 16, 512>}, {pipeline_mode = #tpu.pipeline_mode<synchronous>, transform_indices = @transform_2, window_bounds = array<i64: 1, 512>}, {pipeline_mode = #tpu.pipeline_mode<synchronous>, transform_indices = @transform_3, window_bounds = array<i64: 512, 256>}, {pipeline_mode = #tpu.pipeline_mode<synchronous>, transform_indices = @transform_4, window_bounds = array<i64: 1, 256>}, {pipeline_mode = #tpu.pipeline_mode<synchronous>, transform_indices = @transform_5, window_bounds = array<i64: 3, 256, 256>}, {pipeline_mode = #tpu.pipeline_mode<synchronous>, transform_indices = @transform_6, window_bounds = array<i64: 1, 256>}, {pipeline_mode = #tpu.pipeline_mode<synchronous>, transform_indices = @transform_7, window_bounds = array<i64: 256, 512>}, {pipeline_mode = #tpu.pipeline_mode<synchronous>, transform_indices = @transform_8, window_bounds = array<i64: 1, 512>}, {pipeline_mode = #tpu.pipeline_mode<synchronous>, transform_indices = @transform_9, window_bounds = array<i64: 3, 512, 64>}, {pipeline_mode = #tpu.pipeline_mode<synchronous>, transform_indices = @transform_10, window_bounds = array<i64: 1, 64>}, {transform_indices = @transform_11, window_bounds = array<i64: 2, 4, 16, 16>}]} {
    %c0 = arith.constant 0 : index
    %c0_0 = arith.constant 0 : index
    %c0_1 = arith.constant 0 : index
    %0 = vector.load %arg1[%c0, %c0_0, %c0_1] : memref<2x16x16xf32, #tpu.memory_space<vmem>>, vector<2x16x16xf32>
    %1 = vector.shape_cast %0 : vector<2x16x16xf32> to vector<32x16xf32>
    %cst = arith.constant 0.000000e+00 : f32
    %2 = vector.broadcast %cst : f32 to vector<2x2x16xf32>
    %c0_2 = arith.constant 0 : index
    %c0_3 = arith.constant 0 : index
    %c0_4 = arith.constant 0 : index
    %3 = vector.load %arg13[%c0_2, %c0_3, %c0_4] : memref<2x20x16xf32, #tpu.memory_space<vmem>>, vector<2x2x16xf32>
    tpu.vector_store %arg13[%c0_2, %c0_3, %c0_4], %2 {strides = array<i32>} : memref<2x20x16xf32, #tpu.memory_space<vmem>>, vector<2x2x16xf32>,
    %cst_5 = arith.constant 0.000000e+00 : f32
    %4 = vector.broadcast %cst_5 : f32 to vector<2x2x16xf32>
    %c0_6 = arith.constant 0 : index
    %c18 = arith.constant 18 : index
    %c0_7 = arith.constant 0 : index
    %5 = vector.load %arg13[%c0_6, %c18, %c0_7] : memref<2x20x16xf32, #tpu.memory_space<vmem>>, vector<2x2x16xf32>
    tpu.vector_store %arg13[%c0_6, %c18, %c0_7], %4 {strides = array<i32>} : memref<2x20x16xf32, #tpu.memory_space<vmem>>, vector<2x2x16xf32>,
    %cst_8 = arith.constant 0.000000e+00 : f32
    %6 = vector.broadcast %cst_8 : f32 to vector<2x1x256xf32>
    %c0_9 = arith.constant 0 : index
    %c0_10 = arith.constant 0 : index
    %c0_11 = arith.constant 0 : index
    %7 = vector.load %arg14[%c0_9, %c0_10, %c0_11] : memref<2x18x256xf32, #tpu.memory_space<vmem>>, vector<2x1x256xf32>
    tpu.vector_store %arg14[%c0_9, %c0_10, %c0_11], %6 {strides = array<i32>} : memref<2x18x256xf32, #tpu.memory_space<vmem>>, vector<2x1x256xf32>,
    %cst_12 = arith.constant 0.000000e+00 : f32
    %8 = vector.broadcast %cst_12 : f32 to vector<2x1x256xf32>
    %c0_13 = arith.constant 0 : index
    %c17 = arith.constant 17 : index
    %c0_14 = arith.constant 0 : index
    %9 = vector.load %arg14[%c0_13, %c17, %c0_14] : memref<2x18x256xf32, #tpu.memory_space<vmem>>, vector<2x1x256xf32>
    tpu.vector_store %arg14[%c0_13, %c17, %c0_14], %8 {strides = array<i32>} : memref<2x18x256xf32, #tpu.memory_space<vmem>>, vector<2x1x256xf32>,
    %cst_15 = arith.constant 0.000000e+00 : f32
    %10 = vector.broadcast %cst_15 : f32 to vector<2x1x512xf32>
    %c0_16 = arith.constant 0 : index
    %c0_17 = arith.constant 0 : index
    %c0_18 = arith.constant 0 : index
    %11 = vector.load %arg15[%c0_16, %c0_17, %c0_18] : memref<2x18x512xf32, #tpu.memory_space<vmem>>, vector<2x1x512xf32>
    tpu.vector_store %arg15[%c0_16, %c0_17, %c0_18], %10 {strides = array<i32>} : memref<2x18x512xf32, #tpu.memory_space<vmem>>, vector<2x1x512xf32>,
    %cst_19 = arith.constant 0.000000e+00 : f32
    %12 = vector.broadcast %cst_19 : f32 to vector<2x1x512xf32>
    %c0_20 = arith.constant 0 : index
    %c17_21 = arith.constant 17 : index
    %c0_22 = arith.constant 0 : index
    %13 = vector.load %arg15[%c0_20, %c17_21, %c0_22] : memref<2x18x512xf32, #tpu.memory_space<vmem>>, vector<2x1x512xf32>
    tpu.vector_store %arg15[%c0_20, %c17_21, %c0_22], %12 {strides = array<i32>} : memref<2x18x512xf32, #tpu.memory_space<vmem>>, vector<2x1x512xf32>,
    %c0_23 = arith.constant 0 : index
    %c2 = arith.constant 2 : index
    %c0_24 = arith.constant 0 : index
    %14 = vector.load %arg13[%c0_23, %c2, %c0_24] : memref<2x20x16xf32, #tpu.memory_space<vmem>>, vector<2x16x16xf32>
    tpu.vector_store %arg13[%c0_23, %c2, %c0_24], %0 {strides = array<i32>} : memref<2x20x16xf32, #tpu.memory_space<vmem>>, vector<2x16x16xf32>,
    %cst_25 = arith.constant 0.000000e+00 : f32
    %15 = vector.broadcast %cst_25 : f32 to vector<32x512xf32>
    %c0_26 = arith.constant 0 : index
    %c0_27 = arith.constant 0 : index
    %c0_28 = arith.constant 0 : index
    %16 = vector.load %arg13[%c0_26, %c0_27, %c0_28] : memref<2x20x16xf32, #tpu.memory_space<vmem>>, vector<2x16x16xf32>
    %17 = vector.shape_cast %16 : vector<2x16x16xf32> to vector<32x16xf32>
    %c0_29 = arith.constant 0 : index
    %c0_30 = arith.constant 0 : index
    %c0_31 = arith.constant 0 : index
    %18 = vector.load %arg2[%c0_29, %c0_30, %c0_31] : memref<5x16x512xf32, #tpu.memory_space<vmem>>, vector<1x16x512xf32>
    %19 = vector.shape_cast %18 : vector<1x16x512xf32> to vector<16x512xf32>
    %cst_32 = arith.constant dense<0.000000e+00> : vector<32x512xf32>
    %20 = tpu.matmul %17, %19, %cst_32 {dimension_numbers = #tpu.dot_dimension_numbers<[1], [0], [0], [1], [0, 0, 1, 1], [], []>} : vector<32x16xf32>, vector<16x512xf32>, vector<32x512xf32> -> vector<32x512xf32>
    %21 = arith.addf %15, %20 : vector<32x512xf32>
    %c0_33 = arith.constant 0 : index
    %c1 = arith.constant 1 : index
    %c0_34 = arith.constant 0 : index
    %22 = vector.load %arg13[%c0_33, %c1, %c0_34] : memref<2x20x16xf32, #tpu.memory_space<vmem>>, vector<2x16x16xf32>
    %23 = vector.shape_cast %22 : vector<2x16x16xf32> to vector<32x16xf32>
    %c1_35 = arith.constant 1 : index
    %c0_36 = arith.constant 0 : index
    %c0_37 = arith.constant 0 : index
    %24 = vector.load %arg2[%c1_35, %c0_36, %c0_37] : memref<5x16x512xf32, #tpu.memory_space<vmem>>, vector<1x16x512xf32>
    %25 = vector.shape_cast %24 : vector<1x16x512xf32> to vector<16x512xf32>
    %cst_38 = arith.constant dense<0.000000e+00> : vector<32x512xf32>
    %26 = tpu.matmul %23, %25, %cst_38 {dimension_numbers = #tpu.dot_dimension_numbers<[1], [0], [0], [1], [0, 0, 1, 1], [], []>} : vector<32x16xf32>, vector<16x512xf32>, vector<32x512xf32> -> vector<32x512xf32>
    %27 = arith.addf %21, %26 : vector<32x512xf32>
    %c0_39 = arith.constant 0 : index
    %c2_40 = arith.constant 2 : index
    %c0_41 = arith.constant 0 : index
    %28 = vector.load %arg13[%c0_39, %c2_40, %c0_41] : memref<2x20x16xf32, #tpu.memory_space<vmem>>, vector<2x16x16xf32>
    %29 = vector.shape_cast %28 : vector<2x16x16xf32> to vector<32x16xf32>
    %c2_42 = arith.constant 2 : index
    %c0_43 = arith.constant 0 : index
    %c0_44 = arith.constant 0 : index
    %30 = vector.load %arg2[%c2_42, %c0_43, %c0_44] : memref<5x16x512xf32, #tpu.memory_space<vmem>>, vector<1x16x512xf32>
    %31 = vector.shape_cast %30 : vector<1x16x512xf32> to vector<16x512xf32>
    %cst_45 = arith.constant dense<0.000000e+00> : vector<32x512xf32>
    %32 = tpu.matmul %29, %31, %cst_45 {dimension_numbers = #tpu.dot_dimension_numbers<[1], [0], [0], [1], [0, 0, 1, 1], [], []>} : vector<32x16xf32>, vector<16x512xf32>, vector<32x512xf32> -> vector<32x512xf32>
    %33 = arith.addf %27, %32 : vector<32x512xf32>
    %c0_46 = arith.constant 0 : index
    %c3 = arith.constant 3 : index
    %c0_47 = arith.constant 0 : index
    %34 = vector.load %arg13[%c0_46, %c3, %c0_47] : memref<2x20x16xf32, #tpu.memory_space<vmem>>, vector<2x16x16xf32>
    %35 = vector.shape_cast %34 : vector<2x16x16xf32> to vector<32x16xf32>
    %c3_48 = arith.constant 3 : index
    %c0_49 = arith.constant 0 : index
    %c0_50 = arith.constant 0 : index
    %36 = vector.load %arg2[%c3_48, %c0_49, %c0_50] : memref<5x16x512xf32, #tpu.memory_space<vmem>>, vector<1x16x512xf32>
    %37 = vector.shape_cast %36 : vector<1x16x512xf32> to vector<16x512xf32>
    %cst_51 = arith.constant dense<0.000000e+00> : vector<32x512xf32>
    %38 = tpu.matmul %35, %37, %cst_51 {dimension_numbers = #tpu.dot_dimension_numbers<[1], [0], [0], [1], [0, 0, 1, 1], [], []>} : vector<32x16xf32>, vector<16x512xf32>, vector<32x512xf32> -> vector<32x512xf32>
    %39 = arith.addf %33, %38 : vector<32x512xf32>
    %c0_52 = arith.constant 0 : index
    %c4 = arith.constant 4 : index
    %c0_53 = arith.constant 0 : index
    %40 = vector.load %arg13[%c0_52, %c4, %c0_53] : memref<2x20x16xf32, #tpu.memory_space<vmem>>, vector<2x16x16xf32>
    %41 = vector.shape_cast %40 : vector<2x16x16xf32> to vector<32x16xf32>
    %c4_54 = arith.constant 4 : index
    %c0_55 = arith.constant 0 : index
    %c0_56 = arith.constant 0 : index
    %42 = vector.load %arg2[%c4_54, %c0_55, %c0_56] : memref<5x16x512xf32, #tpu.memory_space<vmem>>, vector<1x16x512xf32>
    %43 = vector.shape_cast %42 : vector<1x16x512xf32> to vector<16x512xf32>
    %cst_57 = arith.constant dense<0.000000e+00> : vector<32x512xf32>
    %44 = tpu.matmul %41, %43, %cst_57 {dimension_numbers = #tpu.dot_dimension_numbers<[1], [0], [0], [1], [0, 0, 1, 1], [], []>} : vector<32x16xf32>, vector<16x512xf32>, vector<32x512xf32> -> vector<32x512xf32>
    %45 = arith.addf %39, %44 : vector<32x512xf32>
    %c0_58 = arith.constant 0 : index
    %c0_59 = arith.constant 0 : index
    %46 = vector.load %arg3[%c0_58, %c0_59] : memref<1x512xf32, #tpu.memory_space<vmem>>, vector<1x512xf32>
    %47 = vector.broadcast %46 : vector<1x512xf32> to vector<32x512xf32>
    %48 = arith.addf %45, %47 : vector<32x512xf32>
    %cst_60 = arith.constant 0.000000e+00 : f32
    %49 = vector.broadcast %cst_60 : f32 to vector<32x512xf32>
    %50 = arith.maximumf %48, %49 : vector<32x512xf32>
    %c0_61 = arith.constant 0 : index
    %c0_62 = arith.constant 0 : index
    %51 = vector.load %arg4[%c0_61, %c0_62] : memref<512x256xf32, #tpu.memory_space<vmem>>, vector<512x256xf32>
    %cst_63 = arith.constant dense<0.000000e+00> : vector<32x256xf32>
    %52 = tpu.matmul %50, %51, %cst_63 {dimension_numbers = #tpu.dot_dimension_numbers<[1], [0], [0], [1], [0, 0, 1, 1], [], []>} : vector<32x512xf32>, vector<512x256xf32>, vector<32x256xf32> -> vector<32x256xf32>
    %c0_64 = arith.constant 0 : index
    %c0_65 = arith.constant 0 : index
    %53 = vector.load %arg5[%c0_64, %c0_65] : memref<1x256xf32, #tpu.memory_space<vmem>>, vector<1x256xf32>
    %54 = vector.broadcast %53 : vector<1x256xf32> to vector<32x256xf32>
    %55 = arith.addf %52, %54 : vector<32x256xf32>
    %cst_66 = arith.constant 0.000000e+00 : f32
    %56 = vector.broadcast %cst_66 : f32 to vector<32x256xf32>
    %57 = arith.maximumf %55, %56 : vector<32x256xf32>
    %58 = vector.shape_cast %57 : vector<32x256xf32> to vector<2x16x256xf32>
    %c0_67 = arith.constant 0 : index
    %c1_68 = arith.constant 1 : index
    %c0_69 = arith.constant 0 : index
    %59 = vector.load %arg14[%c0_67, %c1_68, %c0_69] : memref<2x18x256xf32, #tpu.memory_space<vmem>>, vector<2x16x256xf32>
    tpu.vector_store %arg14[%c0_67, %c1_68, %c0_69], %58 {strides = array<i32>} : memref<2x18x256xf32, #tpu.memory_space<vmem>>, vector<2x16x256xf32>,
    %cst_70 = arith.constant 0.000000e+00 : f32
    %60 = vector.broadcast %cst_70 : f32 to vector<32x256xf32>
    %c0_71 = arith.constant 0 : index
    %c0_72 = arith.constant 0 : index
    %c0_73 = arith.constant 0 : index
    %61 = vector.load %arg14[%c0_71, %c0_72, %c0_73] : memref<2x18x256xf32, #tpu.memory_space<vmem>>, vector<2x16x256xf32>
    %62 = vector.shape_cast %61 : vector<2x16x256xf32> to vector<32x256xf32>
    %c0_74 = arith.constant 0 : index
    %c0_75 = arith.constant 0 : index
    %c0_76 = arith.constant 0 : index
    %63 = vector.load %arg6[%c0_74, %c0_75, %c0_76] : memref<3x256x256xf32, #tpu.memory_space<vmem>>, vector<1x256x256xf32>
    %64 = vector.shape_cast %63 : vector<1x256x256xf32> to vector<256x256xf32>
    %cst_77 = arith.constant dense<0.000000e+00> : vector<32x256xf32>
    %65 = tpu.matmul %62, %64, %cst_77 {dimension_numbers = #tpu.dot_dimension_numbers<[1], [0], [0], [1], [0, 0, 1, 1], [], []>} : vector<32x256xf32>, vector<256x256xf32>, vector<32x256xf32> -> vector<32x256xf32>
    %66 = arith.addf %60, %65 : vector<32x256xf32>
    %c0_78 = arith.constant 0 : index
    %c1_79 = arith.constant 1 : index
    %c0_80 = arith.constant 0 : index
    %67 = vector.load %arg14[%c0_78, %c1_79, %c0_80] : memref<2x18x256xf32, #tpu.memory_space<vmem>>, vector<2x16x256xf32>
    %68 = vector.shape_cast %67 : vector<2x16x256xf32> to vector<32x256xf32>
    %c1_81 = arith.constant 1 : index
    %c0_82 = arith.constant 0 : index
    %c0_83 = arith.constant 0 : index
    %69 = vector.load %arg6[%c1_81, %c0_82, %c0_83] : memref<3x256x256xf32, #tpu.memory_space<vmem>>, vector<1x256x256xf32>
    %70 = vector.shape_cast %69 : vector<1x256x256xf32> to vector<256x256xf32>
    %cst_84 = arith.constant dense<0.000000e+00> : vector<32x256xf32>
    %71 = tpu.matmul %68, %70, %cst_84 {dimension_numbers = #tpu.dot_dimension_numbers<[1], [0], [0], [1], [0, 0, 1, 1], [], []>} : vector<32x256xf32>, vector<256x256xf32>, vector<32x256xf32> -> vector<32x256xf32>
    %72 = arith.addf %66, %71 : vector<32x256xf32>
    %c0_85 = arith.constant 0 : index
    %c2_86 = arith.constant 2 : index
    %c0_87 = arith.constant 0 : index
    %73 = vector.load %arg14[%c0_85, %c2_86, %c0_87] : memref<2x18x256xf32, #tpu.memory_space<vmem>>, vector<2x16x256xf32>
    %74 = vector.shape_cast %73 : vector<2x16x256xf32> to vector<32x256xf32>
    %c2_88 = arith.constant 2 : index
    %c0_89 = arith.constant 0 : index
    %c0_90 = arith.constant 0 : index
    %75 = vector.load %arg6[%c2_88, %c0_89, %c0_90] : memref<3x256x256xf32, #tpu.memory_space<vmem>>, vector<1x256x256xf32>
    %76 = vector.shape_cast %75 : vector<1x256x256xf32> to vector<256x256xf32>
    %cst_91 = arith.constant dense<0.000000e+00> : vector<32x256xf32>
    %77 = tpu.matmul %74, %76, %cst_91 {dimension_numbers = #tpu.dot_dimension_numbers<[1], [0], [0], [1], [0, 0, 1, 1], [], []>} : vector<32x256xf32>, vector<256x256xf32>, vector<32x256xf32> -> vector<32x256xf32>
    %78 = arith.addf %72, %77 : vector<32x256xf32>
    %c0_92 = arith.constant 0 : index
    %c0_93 = arith.constant 0 : index
    %79 = vector.load %arg7[%c0_92, %c0_93] : memref<1x256xf32, #tpu.memory_space<vmem>>, vector<1x256xf32>
    %80 = vector.broadcast %79 : vector<1x256xf32> to vector<32x256xf32>
    %81 = arith.addf %78, %80 : vector<32x256xf32>
    %cst_94 = arith.constant 0.000000e+00 : f32
    %82 = vector.broadcast %cst_94 : f32 to vector<32x256xf32>
    %83 = arith.maximumf %81, %82 : vector<32x256xf32>
    %c0_95 = arith.constant 0 : index
    %c0_96 = arith.constant 0 : index
    %84 = vector.load %arg8[%c0_95, %c0_96] : memref<256x512xf32, #tpu.memory_space<vmem>>, vector<256x512xf32>
    %cst_97 = arith.constant dense<0.000000e+00> : vector<32x512xf32>
    %85 = tpu.matmul %83, %84, %cst_97 {dimension_numbers = #tpu.dot_dimension_numbers<[1], [0], [0], [1], [0, 0, 1, 1], [], []>} : vector<32x256xf32>, vector<256x512xf32>, vector<32x512xf32> -> vector<32x512xf32>
    %c0_98 = arith.constant 0 : index
    %c0_99 = arith.constant 0 : index
    %86 = vector.load %arg9[%c0_98, %c0_99] : memref<1x512xf32, #tpu.memory_space<vmem>>, vector<1x512xf32>
    %87 = vector.broadcast %86 : vector<1x512xf32> to vector<32x512xf32>
    %88 = arith.addf %85, %87 : vector<32x512xf32>
    %cst_100 = arith.constant 0.000000e+00 : f32
    %89 = vector.broadcast %cst_100 : f32 to vector<32x512xf32>
    %90 = arith.maximumf %88, %89 : vector<32x512xf32>
    %91 = vector.shape_cast %90 : vector<32x512xf32> to vector<2x16x512xf32>
    %c0_101 = arith.constant 0 : index
    %c1_102 = arith.constant 1 : index
    %c0_103 = arith.constant 0 : index
    %92 = vector.load %arg15[%c0_101, %c1_102, %c0_103] : memref<2x18x512xf32, #tpu.memory_space<vmem>>, vector<2x16x512xf32>
    tpu.vector_store %arg15[%c0_101, %c1_102, %c0_103], %91 {strides = array<i32>} : memref<2x18x512xf32, #tpu.memory_space<vmem>>, vector<2x16x512xf32>,
    %cst_104 = arith.constant 0.000000e+00 : f32
    %93 = vector.broadcast %cst_104 : f32 to vector<32x64xf32>
    %c0_105 = arith.constant 0 : index
    %c0_106 = arith.constant 0 : index
    %c0_107 = arith.constant 0 : index
    %94 = vector.load %arg15[%c0_105, %c0_106, %c0_107] : memref<2x18x512xf32, #tpu.memory_space<vmem>>, vector<2x16x512xf32>
    %95 = vector.shape_cast %94 : vector<2x16x512xf32> to vector<32x512xf32>
    %c0_108 = arith.constant 0 : index
    %c0_109 = arith.constant 0 : index
    %c0_110 = arith.constant 0 : index
    %96 = vector.load %arg10[%c0_108, %c0_109, %c0_110] : memref<3x512x64xf32, #tpu.memory_space<vmem>>, vector<1x512x64xf32>
    %97 = vector.shape_cast %96 : vector<1x512x64xf32> to vector<512x64xf32>
    %cst_111 = arith.constant dense<0.000000e+00> : vector<32x64xf32>
    %98 = tpu.matmul %95, %97, %cst_111 {dimension_numbers = #tpu.dot_dimension_numbers<[1], [0], [0], [1], [0, 0, 1, 1], [], []>} : vector<32x512xf32>, vector<512x64xf32>, vector<32x64xf32> -> vector<32x64xf32>
    %99 = arith.addf %93, %98 : vector<32x64xf32>
    %c0_112 = arith.constant 0 : index
    %c1_113 = arith.constant 1 : index
    %c0_114 = arith.constant 0 : index
    %100 = vector.load %arg15[%c0_112, %c1_113, %c0_114] : memref<2x18x512xf32, #tpu.memory_space<vmem>>, vector<2x16x512xf32>
    %101 = vector.shape_cast %100 : vector<2x16x512xf32> to vector<32x512xf32>
    %c1_115 = arith.constant 1 : index
    %c0_116 = arith.constant 0 : index
    %c0_117 = arith.constant 0 : index
    %102 = vector.load %arg10[%c1_115, %c0_116, %c0_117] : memref<3x512x64xf32, #tpu.memory_space<vmem>>, vector<1x512x64xf32>
    %103 = vector.shape_cast %102 : vector<1x512x64xf32> to vector<512x64xf32>
    %cst_118 = arith.constant dense<0.000000e+00> : vector<32x64xf32>
    %104 = tpu.matmul %101, %103, %cst_118 {dimension_numbers = #tpu.dot_dimension_numbers<[1], [0], [0], [1], [0, 0, 1, 1], [], []>} : vector<32x512xf32>, vector<512x64xf32>, vector<32x64xf32> -> vector<32x64xf32>
    %105 = arith.addf %99, %104 : vector<32x64xf32>
    %c0_119 = arith.constant 0 : index
    %c2_120 = arith.constant 2 : index
    %c0_121 = arith.constant 0 : index
    %106 = vector.load %arg15[%c0_119, %c2_120, %c0_121] : memref<2x18x512xf32, #tpu.memory_space<vmem>>, vector<2x16x512xf32>
    %107 = vector.shape_cast %106 : vector<2x16x512xf32> to vector<32x512xf32>
    %c2_122 = arith.constant 2 : index
    %c0_123 = arith.constant 0 : index
    %c0_124 = arith.constant 0 : index
    %108 = vector.load %arg10[%c2_122, %c0_123, %c0_124] : memref<3x512x64xf32, #tpu.memory_space<vmem>>, vector<1x512x64xf32>
    %109 = vector.shape_cast %108 : vector<1x512x64xf32> to vector<512x64xf32>
    %cst_125 = arith.constant dense<0.000000e+00> : vector<32x64xf32>
    %110 = tpu.matmul %107, %109, %cst_125 {dimension_numbers = #tpu.dot_dimension_numbers<[1], [0], [0], [1], [0, 0, 1, 1], [], []>} : vector<32x512xf32>, vector<512x64xf32>, vector<32x64xf32> -> vector<32x64xf32>
    %111 = arith.addf %105, %110 : vector<32x64xf32>
    %c0_126 = arith.constant 0 : index
    %c0_127 = arith.constant 0 : index
    %112 = vector.load %arg11[%c0_126, %c0_127] : memref<1x64xf32, #tpu.memory_space<vmem>>, vector<1x64xf32>
    %113 = vector.broadcast %112 : vector<1x64xf32> to vector<32x64xf32>
    %114 = arith.addf %111, %113 : vector<32x64xf32>
    %115 = vector.extract_strided_slice %114 {offsets = [0, 0], sizes = [32, 16], strides = [1, 1]} : vector<32x64xf32> to vector<32x16xf32>
    %116 = arith.addf %115, %1 : vector<32x16xf32>
    %117 = vector.shape_cast %116 : vector<32x16xf32> to vector<2x1x16x16xf32>
    %c0_128 = arith.constant 0 : index
    %c0_129 = arith.constant 0 : index
    %c0_130 = arith.constant 0 : index
    %c0_131 = arith.constant 0 : index
    %118 = vector.load %arg12[%c0_128, %c0_129, %c0_130, %c0_131] : memref<2x4x16x16xf32, #tpu.memory_space<vmem>>, vector<2x1x16x16xf32>
    tpu.vector_store %arg12[%c0_128, %c0_129, %c0_130, %c0_131], %117 {strides = array<i32>} : memref<2x4x16x16xf32, #tpu.memory_space<vmem>>, vector<2x1x16x16xf32>,
    %119 = vector.extract_strided_slice %114 {offsets = [0, 16], sizes = [32, 16], strides = [1, 1]} : vector<32x64xf32> to vector<32x16xf32>
    %120 = arith.addf %119, %1 : vector<32x16xf32>
    %121 = vector.shape_cast %120 : vector<32x16xf32> to vector<2x1x16x16xf32>
    %c0_132 = arith.constant 0 : index
    %c1_133 = arith.constant 1 : index
    %c0_134 = arith.constant 0 : index
    %c0_135 = arith.constant 0 : index
    %122 = vector.load %arg12[%c0_132, %c1_133, %c0_134, %c0_135] : memref<2x4x16x16xf32, #tpu.memory_space<vmem>>, vector<2x1x16x16xf32>
    tpu.vector_store %arg12[%c0_132, %c1_133, %c0_134, %c0_135], %121 {strides = array<i32>} : memref<2x4x16x16xf32, #tpu.memory_space<vmem>>, vector<2x1x16x16xf32>,
    %123 = vector.extract_strided_slice %114 {offsets = [0, 32], sizes = [32, 16], strides = [1, 1]} : vector<32x64xf32> to vector<32x16xf32>
    %124 = arith.addf %123, %1 : vector<32x16xf32>
    %125 = vector.shape_cast %124 : vector<32x16xf32> to vector<2x1x16x16xf32>
    %c0_136 = arith.constant 0 : index
    %c2_137 = arith.constant 2 : index
    %c0_138 = arith.constant 0 : index
    %c0_139 = arith.constant 0 : index
    %126 = vector.load %arg12[%c0_136, %c2_137, %c0_138, %c0_139] : memref<2x4x16x16xf32, #tpu.memory_space<vmem>>, vector<2x1x16x16xf32>
    tpu.vector_store %arg12[%c0_136, %c2_137, %c0_138, %c0_139], %125 {strides = array<i32>} : memref<2x4x16x16xf32, #tpu.memory_space<vmem>>, vector<2x1x16x16xf32>,
    %127 = vector.extract_strided_slice %114 {offsets = [0, 48], sizes = [32, 16], strides = [1, 1]} : vector<32x64xf32> to vector<32x16xf32>
    %128 = arith.addf %127, %1 : vector<32x16xf32>
    %129 = vector.shape_cast %128 : vector<32x16xf32> to vector<2x1x16x16xf32>
    %c0_140 = arith.constant 0 : index
    %c3_141 = arith.constant 3 : index
    %c0_142 = arith.constant 0 : index
    %c0_143 = arith.constant 0 : index
    %130 = vector.load %arg12[%c0_140, %c3_141, %c0_142, %c0_143] : memref<2x4x16x16xf32, #tpu.memory_space<vmem>>, vector<2x1x16x16xf32>
    tpu.vector_store %arg12[%c0_140, %c3_141, %c0_142, %c0_143], %129 {strides = array<i32>} : memref<2x4x16x16xf32, #tpu.memory_space<vmem>>, vector<2x1x16x16xf32>,
    return
  }
  func.func @transform_0(%arg0: i32) -> (i32, i32, i32) {
    %c0_i32 = arith.constant 0 : i32
    %c0_i32_0 = arith.constant 0 : i32
    %c0_i32_1 = arith.constant 0 : i32
    return %arg0, %c0_i32, %c0_i32_0 : i32, i32, i32
  }
  func.func @transform_1(%arg0: i32) -> (i32, i32, i32) {
    %c0_i32 = arith.constant 0 : i32
    %c0_i32_0 = arith.constant 0 : i32
    %c0_i32_1 = arith.constant 0 : i32
    %c0_i32_2 = arith.constant 0 : i32
    return %c0_i32, %c0_i32_0, %c0_i32_1 : i32, i32, i32
  }
  func.func @transform_2(%arg0: i32) -> (i32, i32) {
    %c0_i32 = arith.constant 0 : i32
    %c0_i32_0 = arith.constant 0 : i32
    %c0_i32_1 = arith.constant 0 : i32
    return %c0_i32, %c0_i32_0 : i32, i32
  }
  func.func @transform_3(%arg0: i32) -> (i32, i32) {
    %c0_i32 = arith.constant 0 : i32
    %c0_i32_0 = arith.constant 0 : i32
    %c0_i32_1 = arith.constant 0 : i32
    return %c0_i32, %c0_i32_0 : i32, i32
  }
  func.func @transform_4(%arg0: i32) -> (i32, i32) {
    %c0_i32 = arith.constant 0 : i32
    %c0_i32_0 = arith.constant 0 : i32
    %c0_i32_1 = arith.constant 0 : i32
    return %c0_i32, %c0_i32_0 : i32, i32
  }
  func.func @transform_5(%arg0: i32) -> (i32, i32, i32) {
    %c0_i32 = arith.constant 0 : i32
    %c0_i32_0 = arith.constant 0 : i32
    %c0_i32_1 = arith.constant 0 : i32
    %c0_i32_2 = arith.constant 0 : i32
    return %c0_i32, %c0_i32_0, %c0_i32_1 : i32, i32, i32
  }
  func.func @transform_6(%arg0: i32) -> (i32, i32) {
    %c0_i32 = arith.constant 0 : i32
    %c0_i32_0 = arith.constant 0 : i32
    %c0_i32_1 = arith.constant 0 : i32
    return %c0_i32, %c0_i32_0 : i32, i32
  }
  func.func @transform_7(%arg0: i32) -> (i32, i32) {
    %c0_i32 = arith.constant 0 : i32
    %c0_i32_0 = arith.constant 0 : i32
    %c0_i32_1 = arith.constant 0 : i32
    return %c0_i32, %c0_i32_0 : i32, i32
  }
  func.func @transform_8(%arg0: i32) -> (i32, i32) {
    %c0_i32 = arith.constant 0 : i32
    %c0_i32_0 = arith.constant 0 : i32
    %c0_i32_1 = arith.constant 0 : i32
    return %c0_i32, %c0_i32_0 : i32, i32
  }
  func.func @transform_9(%arg0: i32) -> (i32, i32, i32) {
    %c0_i32 = arith.constant 0 : i32
    %c0_i32_0 = arith.constant 0 : i32
    %c0_i32_1 = arith.constant 0 : i32
    %c0_i32_2 = arith.constant 0 : i32
    return %c0_i32, %c0_i32_0, %c0_i32_1 : i32, i32, i32
  }
  func.func @transform_10(%arg0: i32) -> (i32, i32) {
    %c0_i32 = arith.constant 0 : i32
    %c0_i32_0 = arith.constant 0 : i32
    %c0_i32_1 = arith.constant 0 : i32
    return %c0_i32, %c0_i32_0 : i32, i32
  }
  func.func @transform_11(%arg0: i32) -> (i32, i32, i32, i32) {
    %c0_i32 = arith.constant 0 : i32
    %c0_i32_0 = arith.constant 0 : i32
    %c0_i32_1 = arith.constant 0 : i32
    %c0_i32_2 = arith.constant 0 : i32
    return %arg0, %c0_i32, %c0_i32_0, %c0_i32_1 : i32, i32, i32, i32
  }
}

</mosaic_0001>

<llo_original>
// kernel: tpu_custom_call.1
$region0: #{tpu_custom_call.1}
  #allocation0 [shape = 'u32[]', space=smem, size = 0x4, offset = 0x4, fixed_abs, tag = 'smem constant byte address 0x4 - core index']
  #allocation1 [shape = 'u32[72,128]{1,0:T(1,128)}', space=vmem, size = 0x9000, scoped, tag = 'internal scratch']
  #allocation2 [shape = 'f32[2,20,16]{2,1,0:T(8,128)}', space=vmem, size = 0x6000, scoped, tag = 'scratch operand']
  #allocation3 [shape = 'f32[2,18,256]{2,1,0:T(8,128)}', space=vmem, size = 0xc000, scoped, tag = 'scratch operand']
  #allocation4 [shape = 'f32[2,18,512]{2,1,0:T(8,128)}', space=vmem, size = 0x18000, scoped, tag = 'scratch operand']
  %s0 = inlined_call_operand.vmem [shape: f32[2,16,16], index: 0, kind: input, shape index: {}]
  %s1 = inlined_call_operand.vmem [shape: f32[5,16,512], index: 1, kind: input, shape index: {}]
  %s2 = inlined_call_operand.vmem [shape: f32[1,512], index: 2, kind: input, shape index: {}]
  %s3 = inlined_call_operand.hbm [shape: f32[512,256], index: 3, kind: input, shape index: {}]
  %s4 = inlined_call_operand.vmem [shape: f32[1,256], index: 4, kind: input, shape index: {}]
  %s5 = inlined_call_operand.vmem [shape: f32[3,256,256], index: 5, kind: input, shape index: {}]
  %s6 = inlined_call_operand.vmem [shape: f32[1,256], index: 6, kind: input, shape index: {}]
  %s7 = inlined_call_operand.hbm [shape: f32[256,512], index: 7, kind: input, shape index: {}]
  %s8 = inlined_call_operand.vmem [shape: f32[1,512], index: 8, kind: input, shape index: {}]
  %s9 = inlined_call_operand.vmem [shape: f32[3,512,64], index: 9, kind: input, shape index: {}]
  %s10 = inlined_call_operand.vmem [shape: f32[1,64], index: 10, kind: input, shape index: {}]
  %s11 = inlined_call_operand.hbm [shape: f32[2,4,16,16], index: 11, kind: output, shape index: {}]
  %s12 = sld [smem:[#allocation0]]
  $region62: #{tpu_custom_call.1} parent=0
    _
  %s14 = ssub.s32 1, %s12
  %s15 = scalar_select 0, %s14, %s12
  $region1: #{tpu_custom_call.1} parent=0
    #allocation5 [shape = 'u8[524288]{0}', space=vmem, size = 0x80000, scoped, tag = 'input window, operand 3, single buffered']
    #allocation6 [shape = 's32[1]{0}', space=sflag, size = 0x4, scoped, tag = 'scoped memory for tpu_custom_call.1']
    #allocation7 [shape = 's32[1]{0}', space=sflag, size = 0x4, scoped, tag = 'scoped memory for tpu_custom_call.1']
    #allocation8 [shape = 'u8[524288]{0}', space=vmem, size = 0x80000, scoped, tag = 'input window, operand 7, single buffered']
    #allocation9 [shape = 's32[1]{0}', space=sflag, size = 0x4, scoped, tag = 'scoped memory for tpu_custom_call.1']
    #allocation10 [shape = 'u8[65536]{0}', space=vmem, size = 0x10000, scoped, tag = 'output window, operand 0, single buffered']
    %16 = vsyncpa [#allocation6], 0
    %17 = vsyncpa [#allocation9], 0
    %18 = vsyncpa [#allocation7], 0
    // Predicated region
    $region2: #{tpu_custom_call.1} parent=1 // pred_check
      _
    $region3: #{tpu_custom_call.1} parent=1 // pred_check_branch
      %20 = sbr.rel (0) target = $region5
    $region4: #{tpu_custom_call.1} parent=1 // pred_region
      _
    $region5: #{tpu_custom_call.1} parent=1 // pred_fallthru
      _
    // Predicated region
    $region6: #{tpu_custom_call.1} parent=1 // pred_check
      _
    $region7: #{tpu_custom_call.1} parent=1 // pred_check_branch
      %22 = sbr.rel (0) target = $region9
    $region8: #{tpu_custom_call.1} parent=1 // pred_region
      _
    $region9: #{tpu_custom_call.1} parent=1 // pred_fallthru
      _
    // Predicated region
    $region10: #{tpu_custom_call.1} parent=1 // pred_check
      _
    $region11: #{tpu_custom_call.1} parent=1 // pred_check_branch
      %24 = sbr.rel (0) target = $region13
    $region12: #{tpu_custom_call.1} parent=1 // pred_region
      _
    $region13: #{tpu_custom_call.1} parent=1 // pred_fallthru
      _
    // Predicated region
    $region14: #{tpu_custom_call.1} parent=1 // pred_check
      _
    $region15: #{tpu_custom_call.1} parent=1 // pred_check_branch
      %26 = sbr.rel (0) target = $region17
    $region16: #{tpu_custom_call.1} parent=1 // pred_region
      %28 = vsyncadd [#allocation6], 0
      %s29 = sshll.u32 %s3, 4
      %s30 = int_to_ptr.hbm [resolvable:$true] %s29
      %s31 = sshll.u32 [#allocation5], 4
      %s32 = int_to_ptr.vmem [resolvable:$true] %s31
      %37 = dma.hbm_to_vmem [thread:$0]  %s30, 16384, %s32, [#allocation6], 256, 256, 16
    $region17: #{tpu_custom_call.1} parent=1 // pred_fallthru
      _
    // Predicated region
    $region18: #{tpu_custom_call.1} parent=1 // pred_check
      _
    $region19: #{tpu_custom_call.1} parent=1 // pred_check_branch
      %39 = sbr.rel (0) target = $region21
    $region20: #{tpu_custom_call.1} parent=1 // pred_region
      _
    $region21: #{tpu_custom_call.1} parent=1 // pred_fallthru
      _
    // Predicated region
    $region22: #{tpu_custom_call.1} parent=1 // pred_check
      _
    $region23: #{tpu_custom_call.1} parent=1 // pred_check_branch
      %41 = sbr.rel (0) target = $region25
    $region24: #{tpu_custom_call.1} parent=1 // pred_region
      _
    $region25: #{tpu_custom_call.1} parent=1 // pred_fallthru
      _
    // Predicated region
    $region26: #{tpu_custom_call.1} parent=1 // pred_check
      _
    $region27: #{tpu_custom_call.1} parent=1 // pred_check_branch
      %43 = sbr.rel (0) target = $region29
    $region28: #{tpu_custom_call.1} parent=1 // pred_region
      _
    $region29: #{tpu_custom_call.1} parent=1 // pred_fallthru
      _
    // Predicated region
    $region30: #{tpu_custom_call.1} parent=1 // pred_check
      _
    $region31: #{tpu_custom_call.1} parent=1 // pred_check_branch
      %45 = sbr.rel (0) target = $region33
    $region32: #{tpu_custom_call.1} parent=1 // pred_region
      %47 = vsyncadd [#allocation9], 0
      %s48 = sshll.u32 %s7, 4
      %s49 = int_to_ptr.hbm [resolvable:$true] %s48
      %s50 = sshll.u32 [#allocation8], 4
      %s51 = int_to_ptr.vmem [resolvable:$true] %s50
      %56 = dma.hbm_to_vmem [thread:$0]  %s49, 16384, %s51, [#allocation9], 512, 512, 32
    $region33: #{tpu_custom_call.1} parent=1 // pred_fallthru
      _
    // Predicated region
    $region34: #{tpu_custom_call.1} parent=1 // pred_check
      _
    $region35: #{tpu_custom_call.1} parent=1 // pred_check_branch
      %58 = sbr.rel (0) target = $region37
    $region36: #{tpu_custom_call.1} parent=1 // pred_region
      _
    $region37: #{tpu_custom_call.1} parent=1 // pred_fallthru
      _
    // Predicated region
    $region38: #{tpu_custom_call.1} parent=1 // pred_check
      _
    $region39: #{tpu_custom_call.1} parent=1 // pred_check_branch
      %60 = sbr.rel (0) target = $region41
    $region40: #{tpu_custom_call.1} parent=1 // pred_region
      _
    $region41: #{tpu_custom_call.1} parent=1 // pred_fallthru
      _
    // Predicated region
    $region42: #{tpu_custom_call.1} parent=1 // pred_check
      _
    $region43: #{tpu_custom_call.1} parent=1 // pred_check_branch
      %62 = sbr.rel (0) target = $region45
    $region44: #{tpu_custom_call.1} parent=1 // pred_region
      _
    $region45: #{tpu_custom_call.1} parent=1 // pred_fallthru
      _
    // Predicated region
    $region46: #{tpu_custom_call.1} parent=1 // pred_check
      _
    $region47: #{tpu_custom_call.1} parent=1 // pred_check_branch
      %64 = sbr.rel (0) target = $region49
    $region48: #{tpu_custom_call.1} parent=1 // pred_region
      %66 = dma.done [#allocation6], 16384
    $region49: #{tpu_custom_call.1} parent=1 // pred_fallthru
      _
    // Predicated region
    $region50: #{tpu_custom_call.1} parent=1 // pred_check
      _
    $region51: #{tpu_custom_call.1} parent=1 // pred_check_branch
      %68 = sbr.rel (0) target = $region53
    $region52: #{tpu_custom_call.1} parent=1 // pred_region
      %70 = dma.done [#allocation9], 16384
    $region53: #{tpu_custom_call.1} parent=1 // pred_fallthru
      _
    %v71 = vld [vmem:[%s0] sm:$0xff]
    %v72 = vld [vmem:[%s0 + $0x8] sm:$0xff]
    %v73 = vld [vmem:[%s0 + $0x10] sm:$0xff]
    %v74 = vld [vmem:[%s0 + $0x18] sm:$0xff]
    %vm75 = vcmask 123904
    %76 = vst.msk [vmem:[#allocation2] sm:$0x3] %vm75, 0.0
    %77 = vst.msk [vmem:[#allocation2 + $0x18] sm:$0x3] %vm75, 0.0
    %78 = vst.msk [vmem:[#allocation2 + $0x12] sm:$0x3] %vm75, 0.0
    %79 = vst.msk [vmem:[#allocation2 + $0x2a] sm:$0x3] %vm75, 0.0
    %v80 = vlaneseq
    %vm81 = vcmp.ge.s32.totalorder %v80, 0
    %vm82 = vcmp.lt.s32.totalorder %v80, 256
    %vm83 = vmand %vm81, %vm82
    %84 = vst.msk [vmem:[#allocation3] ss:$8 sm:$0x3] %vm83, 0.0
    %85 = vst.msk [vmem:[#allocation3] ss:$8 sm:$0x0] %vm83, 0.0
    %s86 = scalar_lea.vmem [#allocation3], 48
    %87 = vst.msk [vmem:[%s86] ss:$8 sm:$0x3] %vm83, 0.0
    %88 = vst.msk [vmem:[%s86] ss:$8 sm:$0x0] %vm83, 0.0
    %s89 = scalar_lea.vmem [#allocation3], 33
    %90 = vst.msk [vmem:[%s89] ss:$8 sm:$0x3] %vm83, 0.0
    %91 = vst.msk [vmem:[%s89] ss:$8 sm:$0x0] %vm83, 0.0
    %s92 = scalar_lea.vmem [#allocation3], 81
    %93 = vst.msk [vmem:[%s92] ss:$8 sm:$0x3] %vm83, 0.0
    %94 = vst.msk [vmem:[%s92] ss:$8 sm:$0x0] %vm83, 0.0
    %vm95 = vcmp.lt.s32.totalorder %v80, 512
    %vm96 = vmand %vm81, %vm95
    %97 = vst.msk [vmem:[#allocation4] ss:$8 sm:$0xf] %vm96, 0.0
    %98 = vst.msk [vmem:[#allocation4] ss:$8 sm:$0x0] %vm96, 0.0
    %s99 = scalar_lea.vmem [#allocation4], 96
    %100 = vst.msk [vmem:[%s99] ss:$8 sm:$0xf] %vm96, 0.0
    %101 = vst.msk [vmem:[%s99] ss:$8 sm:$0x0] %vm96, 0.0
    %s102 = scalar_lea.vmem [#allocation4], 65
    %103 = vst.msk [vmem:[%s102] ss:$8 sm:$0xf] %vm96, 0.0
    %104 = vst.msk [vmem:[%s102] ss:$8 sm:$0x0] %vm96, 0.0
    %s105 = scalar_lea.vmem [#allocation4], 161
    %106 = vst.msk [vmem:[%s105] ss:$8 sm:$0xf] %vm96, 0.0
    %107 = vst.msk [vmem:[%s105] ss:$8 sm:$0x0] %vm96, 0.0
    %vm108 = vcmask 130048
    %109 = vst.msk [vmem:[#allocation2 + $0x2] sm:$0xff] %vm108, %v71
    %110 = vst.msk [vmem:[#allocation2 + $0xa] sm:$0xff] %vm108, %v72
    %111 = vst.msk [vmem:[#allocation2 + $0x1a] sm:$0xff] %vm108, %v73
    %112 = vst.msk [vmem:[#allocation2 + $0x22] sm:$0xff] %vm108, %v74
    %v113 = vld [vmem:[#allocation2] sm:$0xff]
    %v114 = vld [vmem:[#allocation2 + $0x8] sm:$0xff]
    %v115 = vld [vmem:[#allocation2 + $0x18] sm:$0xff]
    %v116 = vld [vmem:[#allocation2 + $0x20] sm:$0xff]
    %v117 = vld [vmem:[%s1] sm:$0xff]
    %v118 = vld [vmem:[%s1 + $0x8] sm:$0xff]
    %v119 = vld [vmem:[%s1 + $0x10] sm:$0xff]
    %v120 = vld [vmem:[%s1 + $0x18] sm:$0xff]
    %v121 = vld [vmem:[%s1 + $0x20] sm:$0xff]
    %v122 = vld [vmem:[%s1 + $0x28] sm:$0xff]
    %v123 = vld [vmem:[%s1 + $0x30] sm:$0xff]
    %v124 = vld [vmem:[%s1 + $0x38] sm:$0xff]
    %v125 = vld [vmem:[#allocation2 + $0x1] sm:$0xff]
    %v126 = vld [vmem:[#allocation2 + $0x9] sm:$0xff]
    %v127 = vld [vmem:[#allocation2 + $0x19] sm:$0xff]
    %v128 = vld [vmem:[#allocation2 + $0x21] sm:$0xff]
    %s129 = scalar_lea.vmem %s1, 64
    %v130 = vld [vmem:[%s129] sm:$0xff]
    %v131 = vld [vmem:[%s129 + $0x8] sm:$0xff]
    %v132 = vld [vmem:[%s129 + $0x10] sm:$0xff]
    %v133 = vld [vmem:[%s129 + $0x18] sm:$0xff]
    %v134 = vld [vmem:[%s129 + $0x20] sm:$0xff]
    %v135 = vld [vmem:[%s129 + $0x28] sm:$0xff]
    %v136 = vld [vmem:[%s129 + $0x30] sm:$0xff]
    %v137 = vld [vmem:[%s129 + $0x38] sm:$0xff]
    %v139 = vsel %vm108, %v125, 0
    %v142 = vsel %vm108, %v126, 0
    %v145 = vsel %vm108, %v127, 0
    %v148 = vsel %vm108, %v128, 0
    %150 = vmatpush.msra.mxu0 0.0
    %151 = vmatpush.msra.mxu0 0.0
    %152 = vmatpush.msra.mxu0 0.0
    %153 = vmatpush.msra.mxu0 0.0
    %154 = vmatpush.msra.mxu0 0.0
    %155 = vmatpush.msra.mxu0 0.0
    %156 = vmatpush.msra.mxu0 0.0
    %157 = vmatpush.msra.mxu0 0.0
    %158 = vmatpush.msra.mxu0 0.0
    %159 = vmatpush.msra.mxu0 0.0
    %160 = vmatpush.msra.mxu0 0.0
    %161 = vmatpush.msra.mxu0 0.0
    %162 = vmatpush.msra.mxu0 0.0
    %163 = vmatpush.msra.mxu0 0.0
    %164 = vmatpush.msra.mxu0 %v134
    %165 = vmatpush.msra.mxu0 %v130
    %166 = vmatmul.f32.gmra.mxu0 %v139
    %v167 = vpop.f32.mrf.mxu0
    %v168 = vadd.f32 0.0, %v167
    %169 = vmatmul.f32.gmra.mxu0 %v142
    %v170 = vpop.f32.mrf.mxu0
    %v171 = vadd.f32 0.0, %v170
    %172 = vmatmul.f32.gmra.mxu0 %v145
    %v173 = vpop.f32.mrf.mxu0
    %v174 = vadd.f32 0.0, %v173
    %175 = vmatmul.f32.gmra.mxu0 %v148
    %v176 = vpop.f32.mrf.mxu0
    %v177 = vadd.f32 0.0, %v176
    %178 = vdwg.mxu0
    %179 = vmatpush.msra.mxu0 0.0
    %180 = vmatpush.msra.mxu0 0.0
    %181 = vmatpush.msra.mxu0 0.0
    %182 = vmatpush.msra.mxu0 0.0
    %183 = vmatpush.msra.mxu0 0.0
    %184 = vmatpush.msra.mxu0 0.0
    %185 = vmatpush.msra.mxu0 0.0
    %186 = vmatpush.msra.mxu0 0.0
    %187 = vmatpush.msra.mxu0 0.0
    %188 = vmatpush.msra.mxu0 0.0
    %189 = vmatpush.msra.mxu0 0.0
    %190 = vmatpush.msra.mxu0 0.0
    %191 = vmatpush.msra.mxu0 0.0
    %192 = vmatpush.msra.mxu0 0.0
    %193 = vmatpush.msra.mxu0 %v135
    %194 = vmatpush.msra.mxu0 %v131
    %195 = vmatmul.f32.gmra.mxu0 %v139
    %v196 = vpop.f32.mrf.mxu0
    %v197 = vadd.f32 0.0, %v196
    %198 = vmatmul.f32.gmra.mxu0 %v142
    %v199 = vpop.f32.mrf.mxu0
    %v200 = vadd.f32 0.0, %v199
    %201 = vmatmul.f32.gmra.mxu0 %v145
    %v202 = vpop.f32.mrf.mxu0
    %v203 = vadd.f32 0.0, %v202
    %204 = vmatmul.f32.gmra.mxu0 %v148
    %v205 = vpop.f32.mrf.mxu0
    %v206 = vadd.f32 0.0, %v205
    %207 = vdwg.mxu0
    %208 = vmatpush.msra.mxu0 0.0
    %209 = vmatpush.msra.mxu0 0.0
    %210 = vmatpush.msra.mxu0 0.0
    %211 = vmatpush.msra.mxu0 0.0
    %212 = vmatpush.msra.mxu0 0.0
    %213 = vmatpush.msra.mxu0 0.0
    %214 = vmatpush.msra.mxu0 0.0
    %215 = vmatpush.msra.mxu0 0.0
    %216 = vmatpush.msra.mxu0 0.0
    %217 = vmatpush.msra.mxu0 0.0
    %218 = vmatpush.msra.mxu0 0.0
    %219 = vmatpush.msra.mxu0 0.0
    %220 = vmatpush.msra.mxu0 0.0
    %221 = vmatpush.msra.mxu0 0.0
    %222 = vmatpush.msra.mxu0 %v136
    %223 = vmatpush.msra.mxu0 %v132
    %224 = vmatmul.f32.gmra.mxu0 %v139
    %v225 = vpop.f32.mrf.mxu0
    %v226 = vadd.f32 0.0, %v225
    %227 = vmatmul.f32.gmra.mxu0 %v142
    %v228 = vpop.f32.mrf.mxu0
    %v229 = vadd.f32 0.0, %v228
    %230 = vmatmul.f32.gmra.mxu0 %v145
    %v231 = vpop.f32.mrf.mxu0
    %v232 = vadd.f32 0.0, %v231
    %233 = vmatmul.f32.gmra.mxu0 %v148
    %v234 = vpop.f32.mrf.mxu0
    %v235 = vadd.f32 0.0, %v234
    %236 = vdwg.mxu0
    %237 = vmatpush.msra.mxu0 0.0
    %238 = vmatpush.msra.mxu0 0.0
    %239 = vmatpush.msra.mxu0 0.0
    %240 = vmatpush.msra.mxu0 0.0
    %241 = vmatpush.msra.mxu0 0.0
    %242 = vmatpush.msra.mxu0 0.0
    %243 = vmatpush.msra.mxu0 0.0
    %244 = vmatpush.msra.mxu0 0.0
    %245 = vmatpush.msra.mxu0 0.0
    %246 = vmatpush.msra.mxu0 0.0
    %247 = vmatpush.msra.mxu0 0.0
    %248 = vmatpush.msra.mxu0 0.0
    %249 = vmatpush.msra.mxu0 0.0
    %250 = vmatpush.msra.mxu0 0.0
    %251 = vmatpush.msra.mxu0 %v137
    %252 = vmatpush.msra.mxu0 %v133
    %253 = vmatmul.f32.gmra.mxu0 %v139
    %v254 = vpop.f32.mrf.mxu0
    %v255 = vadd.f32 0.0, %v254
    %256 = vmatmul.f32.gmra.mxu0 %v142
    %v257 = vpop.f32.mrf.mxu0
    %v258 = vadd.f32 0.0, %v257
    %259 = vmatmul.f32.gmra.mxu0 %v145
    %v260 = vpop.f32.mrf.mxu0
    %v261 = vadd.f32 0.0, %v260
    %262 = vmatmul.f32.gmra.mxu0 %v148
    %v263 = vpop.f32.mrf.mxu0
    %v264 = vadd.f32 0.0, %v263
    %265 = vdwg.mxu0
    %v267 = vsel %vm108, %v113, 0
    %v270 = vsel %vm108, %v114, 0
    %v273 = vsel %vm108, %v115, 0
    %v276 = vsel %vm108, %v116, 0
    %278 = vmatpush.msra.mxu0 0.0
    %279 = vmatpush.msra.mxu0 0.0
    %280 = vmatpush.msra.mxu0 0.0
    %281 = vmatpush.msra.mxu0 0.0
    %282 = vmatpush.msra.mxu0 0.0
    %283 = vmatpush.msra.mxu0 0.0
    %284 = vmatpush.msra.mxu0 0.0
    %285 = vmatpush.msra.mxu0 0.0
    %286 = vmatpush.msra.mxu0 0.0
    %287 = vmatpush.msra.mxu0 0.0
    %288 = vmatpush.msra.mxu0 0.0
    %289 = vmatpush.msra.mxu0 0.0
    %290 = vmatpush.msra.mxu0 0.0
    %291 = vmatpush.msra.mxu0 0.0
    %292 = vmatpush.msra.mxu0 %v121
    %293 = vmatpush.msra.mxu0 %v117
    %294 = vmatmul.f32.gmra.mxu0 %v267
    %v295 = vpop.f32.mrf.mxu0
    %v296 = vadd.f32 %v168, %v295
    %297 = vmatmul.f32.gmra.mxu0 %v270
    %v298 = vpop.f32.mrf.mxu0
    %v299 = vadd.f32 %v171, %v298
    %300 = vmatmul.f32.gmra.mxu0 %v273
    %v301 = vpop.f32.mrf.mxu0
    %v302 = vadd.f32 %v174, %v301
    %303 = vmatmul.f32.gmra.mxu0 %v276
    %v304 = vpop.f32.mrf.mxu0
    %v305 = vadd.f32 %v177, %v304
    %306 = vdwg.mxu0
    %307 = vmatpush.msra.mxu0 0.0
    %308 = vmatpush.msra.mxu0 0.0
    %309 = vmatpush.msra.mxu0 0.0
    %310 = vmatpush.msra.mxu0 0.0
    %311 = vmatpush.msra.mxu0 0.0
    %312 = vmatpush.msra.mxu0 0.0
    %313 = vmatpush.msra.mxu0 0.0
    %314 = vmatpush.msra.mxu0 0.0
    %315 = vmatpush.msra.mxu0 0.0
    %316 = vmatpush.msra.mxu0 0.0
    %317 = vmatpush.msra.mxu0 0.0
    %318 = vmatpush.msra.mxu0 0.0
    %319 = vmatpush.msra.mxu0 0.0
    %320 = vmatpush.msra.mxu0 0.0
    %321 = vmatpush.msra.mxu0 %v122
    %322 = vmatpush.msra.mxu0 %v118
    %323 = vmatmul.f32.gmra.mxu0 %v267
    %v324 = vpop.f32.mrf.mxu0
    %v325 = vadd.f32 %v197, %v324
    %326 = vmatmul.f32.gmra.mxu0 %v270
    %v327 = vpop.f32.mrf.mxu0
    %v328 = vadd.f32 %v200, %v327
    %329 = vmatmul.f32.gmra.mxu0 %v273
    %v330 = vpop.f32.mrf.mxu0
    %v331 = vadd.f32 %v203, %v330
    %332 = vmatmul.f32.gmra.mxu0 %v276
    %v333 = vpop.f32.mrf.mxu0
    %v334 = vadd.f32 %v206, %v333
    %335 = vdwg.mxu0
    %336 = vmatpush.msra.mxu0 0.0
    %337 = vmatpush.msra.mxu0 0.0
    %338 = vmatpush.msra.mxu0 0.0
    %339 = vmatpush.msra.mxu0 0.0
    %340 = vmatpush.msra.mxu0 0.0
    %341 = vmatpush.msra.mxu0 0.0
    %342 = vmatpush.msra.mxu0 0.0
    %343 = vmatpush.msra.mxu0 0.0
    %344 = vmatpush.msra.mxu0 0.0
    %345 = vmatpush.msra.mxu0 0.0
    %346 = vmatpush.msra.mxu0 0.0
    %347 = vmatpush.msra.mxu0 0.0
    %348 = vmatpush.msra.mxu0 0.0
    %349 = vmatpush.msra.mxu0 0.0
    %350 = vmatpush.msra.mxu0 %v123
    %351 = vmatpush.msra.mxu0 %v119
    %352 = vmatmul.f32.gmra.mxu0 %v267
    %v353 = vpop.f32.mrf.mxu0
    %v354 = vadd.f32 %v226, %v353
    %355 = vmatmul.f32.gmra.mxu0 %v270
    %v356 = vpop.f32.mrf.mxu0
    %v357 = vadd.f32 %v229, %v356
    %358 = vmatmul.f32.gmra.mxu0 %v273
    %v359 = vpop.f32.mrf.mxu0
    %v360 = vadd.f32 %v232, %v359
    %361 = vmatmul.f32.gmra.mxu0 %v276
    %v362 = vpop.f32.mrf.mxu0
    %v363 = vadd.f32 %v235, %v362
    %364 = vdwg.mxu0
    %365 = vmatpush.msra.mxu0 0.0
    %366 = vmatpush.msra.mxu0 0.0
    %367 = vmatpush.msra.mxu0 0.0
    %368 = vmatpush.msra.mxu0 0.0
    %369 = vmatpush.msra.mxu0 0.0
    %370 = vmatpush.msra.mxu0 0.0
    %371 = vmatpush.msra.mxu0 0.0
    %372 = vmatpush.msra.mxu0 0.0
    %373 = vmatpush.msra.mxu0 0.0
    %374 = vmatpush.msra.mxu0 0.0
    %375 = vmatpush.msra.mxu0 0.0
    %376 = vmatpush.msra.mxu0 0.0
    %377 = vmatpush.msra.mxu0 0.0
    %378 = vmatpush.msra.mxu0 0.0
    %379 = vmatpush.msra.mxu0 %v124
    %380 = vmatpush.msra.mxu0 %v120
    %381 = vmatmul.f32.gmra.mxu0 %v267
    %v382 = vpop.f32.mrf.mxu0
    %v383 = vadd.f32 %v255, %v382
    %384 = vmatmul.f32.gmra.mxu0 %v270
    %v385 = vpop.f32.mrf.mxu0
    %v386 = vadd.f32 %v258, %v385
    %387 = vmatmul.f32.gmra.mxu0 %v273
    %v388 = vpop.f32.mrf.mxu0
    %v389 = vadd.f32 %v261, %v388
    %390 = vmatmul.f32.gmra.mxu0 %v276
    %v391 = vpop.f32.mrf.mxu0
    %v392 = vadd.f32 %v264, %v391
    %393 = vdwg.mxu0
    %v394 = vld [vmem:[#allocation2 + $0x2] sm:$0xff]
    %v395 = vld [vmem:[#allocation2 + $0xa] sm:$0xff]
    %v396 = vld [vmem:[#allocation2 + $0x1a] sm:$0xff]
    %v397 = vld [vmem:[#allocation2 + $0x22] sm:$0xff]
    %s398 = scalar_lea.vmem %s1, 128
    %v399 = vld [vmem:[%s398] sm:$0xff]
    %v400 = vld [vmem:[%s398 + $0x8] sm:$0xff]
    %v401 = vld [vmem:[%s398 + $0x10] sm:$0xff]
    %v402 = vld [vmem:[%s398 + $0x18] sm:$0xff]
    %v403 = vld [vmem:[%s398 + $0x20] sm:$0xff]
    %v404 = vld [vmem:[%s398 + $0x28] sm:$0xff]
    %v405 = vld [vmem:[%s398 + $0x30] sm:$0xff]
    %v406 = vld [vmem:[%s398 + $0x38] sm:$0xff]
    %v408 = vsel %vm108, %v394, 0
    %v411 = vsel %vm108, %v395, 0
    %v414 = vsel %vm108, %v396, 0
    %v417 = vsel %vm108, %v397, 0
    %419 = vmatpush.msra.mxu0 0.0
    %420 = vmatpush.msra.mxu0 0.0
    %421 = vmatpush.msra.mxu0 0.0
    %422 = vmatpush.msra.mxu0 0.0
    %423 = vmatpush.msra.mxu0 0.0
    %424 = vmatpush.msra.mxu0 0.0
    %425 = vmatpush.msra.mxu0 0.0
    %426 = vmatpush.msra.mxu0 0.0
    %427 = vmatpush.msra.mxu0 0.0
    %428 = vmatpush.msra.mxu0 0.0
    %429 = vmatpush.msra.mxu0 0.0
    %430 = vmatpush.msra.mxu0 0.0
    %431 = vmatpush.msra.mxu0 0.0
    %432 = vmatpush.msra.mxu0 0.0
    %433 = vmatpush.msra.mxu0 %v403
    %434 = vmatpush.msra.mxu0 %v399
    %435 = vmatmul.f32.gmra.mxu0 %v408
    %v436 = vpop.f32.mrf.mxu0
    %v437 = vadd.f32 0.0, %v436
    %438 = vmatmul.f32.gmra.mxu0 %v411
    %v439 = vpop.f32.mrf.mxu0
    %v440 = vadd.f32 0.0, %v439
    %441 = vmatmul.f32.gmra.mxu0 %v414
    %v442 = vpop.f32.mrf.mxu0
    %v443 = vadd.f32 0.0, %v442
    %444 = vmatmul.f32.gmra.mxu0 %v417
    %v445 = vpop.f32.mrf.mxu0
    %v446 = vadd.f32 0.0, %v445
    %447 = vdwg.mxu0
    %448 = vmatpush.msra.mxu0 0.0
    %449 = vmatpush.msra.mxu0 0.0
    %450 = vmatpush.msra.mxu0 0.0
    %451 = vmatpush.msra.mxu0 0.0
    %452 = vmatpush.msra.mxu0 0.0
    %453 = vmatpush.msra.mxu0 0.0
    %454 = vmatpush.msra.mxu0 0.0
    %455 = vmatpush.msra.mxu0 0.0
    %456 = vmatpush.msra.mxu0 0.0
    %457 = vmatpush.msra.mxu0 0.0
    %458 = vmatpush.msra.mxu0 0.0
    %459 = vmatpush.msra.mxu0 0.0
    %460 = vmatpush.msra.mxu0 0.0
    %461 = vmatpush.msra.mxu0 0.0
    %462 = vmatpush.msra.mxu0 %v404
    %463 = vmatpush.msra.mxu0 %v400
    %464 = vmatmul.f32.gmra.mxu0 %v408
    %v465 = vpop.f32.mrf.mxu0
    %v466 = vadd.f32 0.0, %v465
    %467 = vmatmul.f32.gmra.mxu0 %v411
    %v468 = vpop.f32.mrf.mxu0
    %v469 = vadd.f32 0.0, %v468
    %470 = vmatmul.f32.gmra.mxu0 %v414
    %v471 = vpop.f32.mrf.mxu0
    %v472 = vadd.f32 0.0, %v471
    %473 = vmatmul.f32.gmra.mxu0 %v417
    %v474 = vpop.f32.mrf.mxu0
    %v475 = vadd.f32 0.0, %v474
    %476 = vdwg.mxu0
    %477 = vmatpush.msra.mxu0 0.0
    %478 = vmatpush.msra.mxu0 0.0
    %479 = vmatpush.msra.mxu0 0.0
    %480 = vmatpush.msra.mxu0 0.0
    %481 = vmatpush.msra.mxu0 0.0
    %482 = vmatpush.msra.mxu0 0.0
    %483 = vmatpush.msra.mxu0 0.0
    %484 = vmatpush.msra.mxu0 0.0
    %485 = vmatpush.msra.mxu0 0.0
    %486 = vmatpush.msra.mxu0 0.0
    %487 = vmatpush.msra.mxu0 0.0
    %488 = vmatpush.msra.mxu0 0.0
    %489 = vmatpush.msra.mxu0 0.0
    %490 = vmatpush.msra.mxu0 0.0
    %491 = vmatpush.msra.mxu0 %v405
    %492 = vmatpush.msra.mxu0 %v401
    %493 = vmatmul.f32.gmra.mxu0 %v408
    %v494 = vpop.f32.mrf.mxu0
    %v495 = vadd.f32 0.0, %v494
    %496 = vmatmul.f32.gmra.mxu0 %v411
    %v497 = vpop.f32.mrf.mxu0
    %v498 = vadd.f32 0.0, %v497
    %499 = vmatmul.f32.gmra.mxu0 %v414
    %v500 = vpop.f32.mrf.mxu0
    %v501 = vadd.f32 0.0, %v500
    %502 = vmatmul.f32.gmra.mxu0 %v417
    %v503 = vpop.f32.mrf.mxu0
    %v504 = vadd.f32 0.0, %v503
    %505 = vdwg.mxu0
    %506 = vmatpush.msra.mxu0 0.0
    %507 = vmatpush.msra.mxu0 0.0
    %508 = vmatpush.msra.mxu0 0.0
    %509 = vmatpush.msra.mxu0 0.0
    %510 = vmatpush.msra.mxu0 0.0
    %511 = vmatpush.msra.mxu0 0.0
    %512 = vmatpush.msra.mxu0 0.0
    %513 = vmatpush.msra.mxu0 0.0
    %514 = vmatpush.msra.mxu0 0.0
    %515 = vmatpush.msra.mxu0 0.0
    %516 = vmatpush.msra.mxu0 0.0
    %517 = vmatpush.msra.mxu0 0.0
    %518 = vmatpush.msra.mxu0 0.0
    %519 = vmatpush.msra.mxu0 0.0
    %520 = vmatpush.msra.mxu0 %v406
    %521 = vmatpush.msra.mxu0 %v402
    %522 = vmatmul.f32.gmra.mxu0 %v408
    %v523 = vpop.f32.mrf.mxu0
    %v524 = vadd.f32 0.0, %v523
    %525 = vmatmul.f32.gmra.mxu0 %v411
    %v526 = vpop.f32.mrf.mxu0
    %v527 = vadd.f32 0.0, %v526
    %528 = vmatmul.f32.gmra.mxu0 %v414
    %v529 = vpop.f32.mrf.mxu0
    %v530 = vadd.f32 0.0, %v529
    %531 = vmatmul.f32.gmra.mxu0 %v417
    %v532 = vpop.f32.mrf.mxu0
    %v533 = vadd.f32 0.0, %v532
    %534 = vdwg.mxu0
    %v535 = vadd.f32 %v296, %v437
    %v536 = vadd.f32 %v325, %v466
    %v537 = vadd.f32 %v354, %v495
    %v538 = vadd.f32 %v383, %v524
    %v539 = vadd.f32 %v299, %v440
    %v540 = vadd.f32 %v328, %v469
    %v541 = vadd.f32 %v357, %v498
    %v542 = vadd.f32 %v386, %v527
    %v543 = vadd.f32 %v302, %v443
    %v544 = vadd.f32 %v331, %v472
    %v545 = vadd.f32 %v360, %v501
    %v546 = vadd.f32 %v389, %v530
    %v547 = vadd.f32 %v305, %v446
    %v548 = vadd.f32 %v334, %v475
    %v549 = vadd.f32 %v363, %v504
    %v550 = vadd.f32 %v392, %v533
    %v551 = vld [vmem:[#allocation2 + $0x3] sm:$0xff]
    %v552 = vld [vmem:[#allocation2 + $0xb] sm:$0xff]
    %v553 = vld [vmem:[#allocation2 + $0x1b] sm:$0xff]
    %v554 = vld [vmem:[#allocation2 + $0x23] sm:$0xff]
    %s555 = scalar_lea.vmem %s1, 192
    %v556 = vld [vmem:[%s555] sm:$0xff]
    %v557 = vld [vmem:[%s555 + $0x8] sm:$0xff]
    %v558 = vld [vmem:[%s555 + $0x10] sm:$0xff]
    %v559 = vld [vmem:[%s555 + $0x18] sm:$0xff]
    %v560 = vld [vmem:[%s555 + $0x20] sm:$0xff]
    %v561 = vld [vmem:[%s555 + $0x28] sm:$0xff]
    %v562 = vld [vmem:[%s555 + $0x30] sm:$0xff]
    %v563 = vld [vmem:[%s555 + $0x38] sm:$0xff]
    %v565 = vsel %vm108, %v551, 0
    %v568 = vsel %vm108, %v552, 0
    %v571 = vsel %vm108, %v553, 0
    %v574 = vsel %vm108, %v554, 0
    %576 = vmatpush.msra.mxu0 0.0
    %577 = vmatpush.msra.mxu0 0.0
    %578 = vmatpush.msra.mxu0 0.0
    %579 = vmatpush.msra.mxu0 0.0
    %580 = vmatpush.msra.mxu0 0.0
    %581 = vmatpush.msra.mxu0 0.0
    %582 = vmatpush.msra.mxu0 0.0
    %583 = vmatpush.msra.mxu0 0.0
    %584 = vmatpush.msra.mxu0 0.0
    %585 = vmatpush.msra.mxu0 0.0
    %586 = vmatpush.msra.mxu0 0.0
    %587 = vmatpush.msra.mxu0 0.0
    %588 = vmatpush.msra.mxu0 0.0
    %589 = vmatpush.msra.mxu0 0.0
    %590 = vmatpush.msra.mxu0 %v560
    %591 = vmatpush.msra.mxu0 %v556
    %592 = vmatmul.f32.gmra.mxu0 %v565
    %v593 = vpop.f32.mrf.mxu0
    %v594 = vadd.f32 0.0, %v593
    %595 = vmatmul.f32.gmra.mxu0 %v568
    %v596 = vpop.f32.mrf.mxu0
    %v597 = vadd.f32 0.0, %v596
    %598 = vmatmul.f32.gmra.mxu0 %v571
    %v599 = vpop.f32.mrf.mxu0
    %v600 = vadd.f32 0.0, %v599
    %601 = vmatmul.f32.gmra.mxu0 %v574
    %v602 = vpop.f32.mrf.mxu0
    %v603 = vadd.f32 0.0, %v602
    %604 = vdwg.mxu0
    %605 = vmatpush.msra.mxu0 0.0
    %606 = vmatpush.msra.mxu0 0.0
    %607 = vmatpush.msra.mxu0 0.0
    %608 = vmatpush.msra.mxu0 0.0
    %609 = vmatpush.msra.mxu0 0.0
    %610 = vmatpush.msra.mxu0 0.0
    %611 = vmatpush.msra.mxu0 0.0
    %612 = vmatpush.msra.mxu0 0.0
    %613 = vmatpush.msra.mxu0 0.0
    %614 = vmatpush.msra.mxu0 0.0
    %615 = vmatpush.msra.mxu0 0.0
    %616 = vmatpush.msra.mxu0 0.0
    %617 = vmatpush.msra.mxu0 0.0
    %618 = vmatpush.msra.mxu0 0.0
    %619 = vmatpush.msra.mxu0 %v561
    %620 = vmatpush.msra.mxu0 %v557
    %621 = vmatmul.f32.gmra.mxu0 %v565
    %v622 = vpop.f32.mrf.mxu0
    %v623 = vadd.f32 0.0, %v622
    %624 = vmatmul.f32.gmra.mxu0 %v568
    %v625 = vpop.f32.mrf.mxu0
    %v626 = vadd.f32 0.0, %v625
    %627 = vmatmul.f32.gmra.mxu0 %v571
    %v628 = vpop.f32.mrf.mxu0
    %v629 = vadd.f32 0.0, %v628
    %630 = vmatmul.f32.gmra.mxu0 %v574
    %v631 = vpop.f32.mrf.mxu0
    %v632 = vadd.f32 0.0, %v631
    %633 = vdwg.mxu0
    %634 = vmatpush.msra.mxu0 0.0
    %635 = vmatpush.msra.mxu0 0.0
    %636 = vmatpush.msra.mxu0 0.0
    %637 = vmatpush.msra.mxu0 0.0
    %638 = vmatpush.msra.mxu0 0.0
    %639 = vmatpush.msra.mxu0 0.0
    %640 = vmatpush.msra.mxu0 0.0
    %641 = vmatpush.msra.mxu0 0.0
    %642 = vmatpush.msra.mxu0 0.0
    %643 = vmatpush.msra.mxu0 0.0
    %644 = vmatpush.msra.mxu0 0.0
    %645 = vmatpush.msra.mxu0 0.0
    %646 = vmatpush.msra.mxu0 0.0
    %647 = vmatpush.msra.mxu0 0.0
    %648 = vmatpush.msra.mxu0 %v562
    %649 = vmatpush.msra.mxu0 %v558
    %650 = vmatmul.f32.gmra.mxu0 %v565
    %v651 = vpop.f32.mrf.mxu0
    %v652 = vadd.f32 0.0, %v651
    %653 = vmatmul.f32.gmra.mxu0 %v568
    %v654 = vpop.f32.mrf.mxu0
    %v655 = vadd.f32 0.0, %v654
    %656 = vmatmul.f32.gmra.mxu0 %v571
    %v657 = vpop.f32.mrf.mxu0
    %v658 = vadd.f32 0.0, %v657
    %659 = vmatmul.f32.gmra.mxu0 %v574
    %v660 = vpop.f32.mrf.mxu0
    %v661 = vadd.f32 0.0, %v660
    %662 = vdwg.mxu0
    %663 = vmatpush.msra.mxu0 0.0
    %664 = vmatpush.msra.mxu0 0.0
    %665 = vmatpush.msra.mxu0 0.0
    %666 = vmatpush.msra.mxu0 0.0
    %667 = vmatpush.msra.mxu0 0.0
    %668 = vmatpush.msra.mxu0 0.0
    %669 = vmatpush.msra.mxu0 0.0
    %670 = vmatpush.msra.mxu0 0.0
    %671 = vmatpush.msra.mxu0 0.0
    %672 = vmatpush.msra.mxu0 0.0
    %673 = vmatpush.msra.mxu0 0.0
    %674 = vmatpush.msra.mxu0 0.0
    %675 = vmatpush.msra.mxu0 0.0
    %676 = vmatpush.msra.mxu0 0.0
    %677 = vmatpush.msra.mxu0 %v563
    %678 = vmatpush.msra.mxu0 %v559
    %679 = vmatmul.f32.gmra.mxu0 %v565
    %v680 = vpop.f32.mrf.mxu0
    %v681 = vadd.f32 0.0, %v680
    %682 = vmatmul.f32.gmra.mxu0 %v568
    %v683 = vpop.f32.mrf.mxu0
    %v684 = vadd.f32 0.0, %v683
    %685 = vmatmul.f32.gmra.mxu0 %v571
    %v686 = vpop.f32.mrf.mxu0
    %v687 = vadd.f32 0.0, %v686
    %688 = vmatmul.f32.gmra.mxu0 %v574
    %v689 = vpop.f32.mrf.mxu0
    %v690 = vadd.f32 0.0, %v689
    %691 = vdwg.mxu0
    %v692 = vadd.f32 %v535, %v594
    %v693 = vadd.f32 %v536, %v623
    %v694 = vadd.f32 %v537, %v652
    %v695 = vadd.f32 %v538, %v681
    %v696 = vadd.f32 %v539, %v597
    %v697 = vadd.f32 %v540, %v626
    %v698 = vadd.f32 %v541, %v655
    %v699 = vadd.f32 %v542, %v684
    %v700 = vadd.f32 %v543, %v600
    %v701 = vadd.f32 %v544, %v629
    %v702 = vadd.f32 %v545, %v658
    %v703 = vadd.f32 %v546, %v687
    %v704 = vadd.f32 %v547, %v603
    %v705 = vadd.f32 %v548, %v632
    %v706 = vadd.f32 %v549, %v661
    %v707 = vadd.f32 %v550, %v690
    %v708 = vld [vmem:[#allocation2 + $0x4] sm:$0xff]
    %v709 = vld [vmem:[#allocation2 + $0xc] sm:$0xff]
    %v710 = vld [vmem:[#allocation2 + $0x1c] sm:$0xff]
    %v711 = vld [vmem:[#allocation2 + $0x24] sm:$0xff]
    %s712 = scalar_lea.vmem %s1, 256
    %v713 = vld [vmem:[%s712] sm:$0xff]
    %v714 = vld [vmem:[%s712 + $0x8] sm:$0xff]
    %v715 = vld [vmem:[%s712 + $0x10] sm:$0xff]
    %v716 = vld [vmem:[%s712 + $0x18] sm:$0xff]
    %v717 = vld [vmem:[%s712 + $0x20] sm:$0xff]
    %v718 = vld [vmem:[%s712 + $0x28] sm:$0xff]
    %v719 = vld [vmem:[%s712 + $0x30] sm:$0xff]
    %v720 = vld [vmem:[%s712 + $0x38] sm:$0xff]
    %v722 = vsel %vm108, %v708, 0
    %v725 = vsel %vm108, %v709, 0
    %v728 = vsel %vm108, %v710, 0
    %v731 = vsel %vm108, %v711, 0
    %733 = vmatpush.msra.mxu0 0.0
    %734 = vmatpush.msra.mxu0 0.0
    %735 = vmatpush.msra.mxu0 0.0
    %736 = vmatpush.msra.mxu0 0.0
    %737 = vmatpush.msra.mxu0 0.0
    %738 = vmatpush.msra.mxu0 0.0
    %739 = vmatpush.msra.mxu0 0.0
    %740 = vmatpush.msra.mxu0 0.0
    %741 = vmatpush.msra.mxu0 0.0
    %742 = vmatpush.msra.mxu0 0.0
    %743 = vmatpush.msra.mxu0 0.0
    %744 = vmatpush.msra.mxu0 0.0
    %745 = vmatpush.msra.mxu0 0.0
    %746 = vmatpush.msra.mxu0 0.0
    %747 = vmatpush.msra.mxu0 %v717
    %748 = vmatpush.msra.mxu0 %v713
    %749 = vmatmul.f32.gmra.mxu0 %v722
    %v750 = vpop.f32.mrf.mxu0
    %v751 = vadd.f32 0.0, %v750
    %752 = vmatmul.f32.gmra.mxu0 %v725
    %v753 = vpop.f32.mrf.mxu0
    %v754 = vadd.f32 0.0, %v753
    %755 = vmatmul.f32.gmra.mxu0 %v728
    %v756 = vpop.f32.mrf.mxu0
    %v757 = vadd.f32 0.0, %v756
    %758 = vmatmul.f32.gmra.mxu0 %v731
    %v759 = vpop.f32.mrf.mxu0
    %v760 = vadd.f32 0.0, %v759
    %761 = vdwg.mxu0
    %762 = vmatpush.msra.mxu0 0.0
    %763 = vmatpush.msra.mxu0 0.0
    %764 = vmatpush.msra.mxu0 0.0
    %765 = vmatpush.msra.mxu0 0.0
    %766 = vmatpush.msra.mxu0 0.0
    %767 = vmatpush.msra.mxu0 0.0
    %768 = vmatpush.msra.mxu0 0.0
    %769 = vmatpush.msra.mxu0 0.0
    %770 = vmatpush.msra.mxu0 0.0
    %771 = vmatpush.msra.mxu0 0.0
    %772 = vmatpush.msra.mxu0 0.0
    %773 = vmatpush.msra.mxu0 0.0
    %774 = vmatpush.msra.mxu0 0.0
    %775 = vmatpush.msra.mxu0 0.0
    %776 = vmatpush.msra.mxu0 %v718
    %777 = vmatpush.msra.mxu0 %v714
    %778 = vmatmul.f32.gmra.mxu0 %v722
    %v779 = vpop.f32.mrf.mxu0
    %v780 = vadd.f32 0.0, %v779
    %781 = vmatmul.f32.gmra.mxu0 %v725
    %v782 = vpop.f32.mrf.mxu0
    %v783 = vadd.f32 0.0, %v782
    %784 = vmatmul.f32.gmra.mxu0 %v728
    %v785 = vpop.f32.mrf.mxu0
    %v786 = vadd.f32 0.0, %v785
    %787 = vmatmul.f32.gmra.mxu0 %v731
    %v788 = vpop.f32.mrf.mxu0
    %v789 = vadd.f32 0.0, %v788
    %790 = vdwg.mxu0
    %791 = vmatpush.msra.mxu0 0.0
    %792 = vmatpush.msra.mxu0 0.0
    %793 = vmatpush.msra.mxu0 0.0
    %794 = vmatpush.msra.mxu0 0.0
    %795 = vmatpush.msra.mxu0 0.0
    %796 = vmatpush.msra.mxu0 0.0
    %797 = vmatpush.msra.mxu0 0.0
    %798 = vmatpush.msra.mxu0 0.0
    %799 = vmatpush.msra.mxu0 0.0
    %800 = vmatpush.msra.mxu0 0.0
    %801 = vmatpush.msra.mxu0 0.0
    %802 = vmatpush.msra.mxu0 0.0
    %803 = vmatpush.msra.mxu0 0.0
    %804 = vmatpush.msra.mxu0 0.0
    %805 = vmatpush.msra.mxu0 %v719
    %806 = vmatpush.msra.mxu0 %v715
    %807 = vmatmul.f32.gmra.mxu0 %v722
    %v808 = vpop.f32.mrf.mxu0
    %v809 = vadd.f32 0.0, %v808
    %810 = vmatmul.f32.gmra.mxu0 %v725
    %v811 = vpop.f32.mrf.mxu0
    %v812 = vadd.f32 0.0, %v811
    %813 = vmatmul.f32.gmra.mxu0 %v728
    %v814 = vpop.f32.mrf.mxu0
    %v815 = vadd.f32 0.0, %v814
    %816 = vmatmul.f32.gmra.mxu0 %v731
    %v817 = vpop.f32.mrf.mxu0
    %v818 = vadd.f32 0.0, %v817
    %819 = vdwg.mxu0
    %820 = vmatpush.msra.mxu0 0.0
    %821 = vmatpush.msra.mxu0 0.0
    %822 = vmatpush.msra.mxu0 0.0
    %823 = vmatpush.msra.mxu0 0.0
    %824 = vmatpush.msra.mxu0 0.0
    %825 = vmatpush.msra.mxu0 0.0
    %826 = vmatpush.msra.mxu0 0.0
    %827 = vmatpush.msra.mxu0 0.0
    %828 = vmatpush.msra.mxu0 0.0
    %829 = vmatpush.msra.mxu0 0.0
    %830 = vmatpush.msra.mxu0 0.0
    %831 = vmatpush.msra.mxu0 0.0
    %832 = vmatpush.msra.mxu0 0.0
    %833 = vmatpush.msra.mxu0 0.0
    %834 = vmatpush.msra.mxu0 %v720
    %835 = vmatpush.msra.mxu0 %v716
    %836 = vmatmul.f32.gmra.mxu0 %v722
    %v837 = vpop.f32.mrf.mxu0
    %v838 = vadd.f32 0.0, %v837
    %839 = vmatmul.f32.gmra.mxu0 %v725
    %v840 = vpop.f32.mrf.mxu0
    %v841 = vadd.f32 0.0, %v840
    %842 = vmatmul.f32.gmra.mxu0 %v728
    %v843 = vpop.f32.mrf.mxu0
    %v844 = vadd.f32 0.0, %v843
    %845 = vmatmul.f32.gmra.mxu0 %v731
    %v846 = vpop.f32.mrf.mxu0
    %v847 = vadd.f32 0.0, %v846
    %848 = vdwg.mxu0
    %v849 = vadd.f32 %v692, %v751
    %v850 = vadd.f32 %v693, %v780
    %v851 = vadd.f32 %v694, %v809
    %v852 = vadd.f32 %v695, %v838
    %v853 = vadd.f32 %v696, %v754
    %v854 = vadd.f32 %v697, %v783
    %v855 = vadd.f32 %v698, %v812
    %v856 = vadd.f32 %v699, %v841
    %v857 = vadd.f32 %v700, %v757
    %v858 = vadd.f32 %v701, %v786
    %v859 = vadd.f32 %v702, %v815
    %v860 = vadd.f32 %v703, %v844
    %v861 = vadd.f32 %v704, %v760
    %v862 = vadd.f32 %v705, %v789
    %v863 = vadd.f32 %v706, %v818
    %v864 = vadd.f32 %v707, %v847
    %v865 = vld [vmem:[%s2] sm:$0xf]
    %v867 = vperm.slane %v865, 0
    %v868 = vperm.slane %v865, 1
    %v869 = vperm.slane %v865, 2
    %v870 = vperm.slane %v865, 3
    %v875 = vadd.f32 %v849, %v867
    %v876 = vadd.f32 %v850, %v868
    %v877 = vadd.f32 %v851, %v869
    %v878 = vadd.f32 %v852, %v870
    %v879 = vadd.f32 %v853, %v867
    %v880 = vadd.f32 %v854, %v868
    %v881 = vadd.f32 %v855, %v869
    %v882 = vadd.f32 %v856, %v870
    %v883 = vadd.f32 %v857, %v867
    %v884 = vadd.f32 %v858, %v868
    %v885 = vadd.f32 %v859, %v869
    %v886 = vadd.f32 %v860, %v870
    %v887 = vadd.f32 %v861, %v867
    %v888 = vadd.f32 %v862, %v868
    %v889 = vadd.f32 %v863, %v869
    %v890 = vadd.f32 %v864, %v870
    %v891 = vmax.f32 %v875, 0.0
    %v892 = vmax.f32 %v876, 0.0
    %v893 = vmax.f32 %v877, 0.0
    %v894 = vmax.f32 %v878, 0.0
    %v895 = vmax.f32 %v879, 0.0
    %v896 = vmax.f32 %v880, 0.0
    %v897 = vmax.f32 %v881, 0.0
    %v898 = vmax.f32 %v882, 0.0
    %v899 = vmax.f32 %v883, 0.0
    %v900 = vmax.f32 %v884, 0.0
    %v901 = vmax.f32 %v885, 0.0
    %v902 = vmax.f32 %v886, 0.0
    %v903 = vmax.f32 %v887, 0.0
    %v904 = vmax.f32 %v888, 0.0
    %v905 = vmax.f32 %v889, 0.0
    %v906 = vmax.f32 %v890, 0.0
    %v907 = vld [vmem:[#allocation5] sm:$0xff]
    %v908 = vld [vmem:[#allocation5 + $0x8] sm:$0xff]
    %v909 = vld [vmem:[#allocation5 + $0x10] sm:$0xff]
    %v910 = vld [vmem:[#allocation5 + $0x18] sm:$0xff]
    %v911 = vld [vmem:[#allocation5 + $0x20] sm:$0xff]
    %v912 = vld [vmem:[#allocation5 + $0x28] sm:$0xff]
    %v913 = vld [vmem:[#allocation5 + $0x30] sm:$0xff]
    %v914 = vld [vmem:[#allocation5 + $0x38] sm:$0xff]
    %v915 = vld [vmem:[#allocation5 + $0x40] sm:$0xff]
    %v916 = vld [vmem:[#allocation5 + $0x48] sm:$0xff]
    %v917 = vld [vmem:[#allocation5 + $0x50] sm:$0xff]
    %v918 = vld [vmem:[#allocation5 + $0x58] sm:$0xff]
    %v919 = vld [vmem:[#allocation5 + $0x60] sm:$0xff]
    %v920 = vld [vmem:[#allocation5 + $0x68] sm:$0xff]
    %v921 = vld [vmem:[#allocation5 + $0x70] sm:$0xff]
    %v922 = vld [vmem:[#allocation5 + $0x78] sm:$0xff]
    %v923 = vld [vmem:[#allocation5 + $0x80] sm:$0xff]
    %v924 = vld [vmem:[#allocation5 + $0x88] sm:$0xff]
    %v925 = vld [vmem:[#allocation5 + $0x90] sm:$0xff]
    %v926 = vld [vmem:[#allocation5 + $0x98] sm:$0xff]
    %v927 = vld [vmem:[#allocation5 + $0xa0] sm:$0xff]
    %v928 = vld [vmem:[#allocation5 + $0xa8] sm:$0xff]
    %v929 = vld [vmem:[#allocation5 + $0xb0] sm:$0xff]
    %v930 = vld [vmem:[#allocation5 + $0xb8] sm:$0xff]
    %v931 = vld [vmem:[#allocation5 + $0xc0] sm:$0xff]
    %v932 = vld [vmem:[#allocation5 + $0xc8] sm:$0xff]
    %v933 = vld [vmem:[#allocation5 + $0xd0] sm:$0xff]
    %v934 = vld [vmem:[#allocation5 + $0xd8] sm:$0xff]
    %v935 = vld [vmem:[#allocation5 + $0xe0] sm:$0xff]
    %v936 = vld [vmem:[#allocation5 + $0xe8] sm:$0xff]
    %v937 = vld [vmem:[#allocation5 + $0xf0] sm:$0xff]
    %v938 = vld [vmem:[#allocation5 + $0xf8] sm:$0xff]
    %v939 = vld [vmem:[#allocation5 + $0x100] sm:$0xff]
    %v940 = vld [vmem:[#allocation5 + $0x108] sm:$0xff]
    %v941 = vld [vmem:[#allocation5 + $0x110] sm:$0xff]
    %v942 = vld [vmem:[#allocation5 + $0x118] sm:$0xff]
    %v943 = vld [vmem:[#allocation5 + $0x120] sm:$0xff]
    %v944 = vld [vmem:[#allocation5 + $0x128] sm:$0xff]
    %v945 = vld [vmem:[#allocation5 + $0x130] sm:$0xff]
    %v946 = vld [vmem:[#allocation5 + $0x138] sm:$0xff]
    %v947 = vld [vmem:[#allocation5 + $0x140] sm:$0xff]
    %v948 = vld [vmem:[#allocation5 + $0x148] sm:$0xff]
    %v949 = vld [vmem:[#allocation5 + $0x150] sm:$0xff]
    %v950 = vld [vmem:[#allocation5 + $0x158] sm:$0xff]
    %v951 = vld [vmem:[#allocation5 + $0x160] sm:$0xff]
    %v952 = vld [vmem:[#allocation5 + $0x168] sm:$0xff]
    %v953 = vld [vmem:[#allocation5 + $0x170] sm:$0xff]
    %v954 = vld [vmem:[#allocation5 + $0x178] sm:$0xff]
    %v955 = vld [vmem:[#allocation5 + $0x180] sm:$0xff]
    %v956 = vld [vmem:[#allocation5 + $0x188] sm:$0xff]
    %v957 = vld [vmem:[#allocation5 + $0x190] sm:$0xff]
    %v958 = vld [vmem:[#allocation5 + $0x198] sm:$0xff]
    %v959 = vld [vmem:[#allocation5 + $0x1a0] sm:$0xff]
    %v960 = vld [vmem:[#allocation5 + $0x1a8] sm:$0xff]
    %v961 = vld [vmem:[#allocation5 + $0x1b0] sm:$0xff]
    %v962 = vld [vmem:[#allocation5 + $0x1b8] sm:$0xff]
    %v963 = vld [vmem:[#allocation5 + $0x1c0] sm:$0xff]
    %v964 = vld [vmem:[#allocation5 + $0x1c8] sm:$0xff]
    %v965 = vld [vmem:[#allocation5 + $0x1d0] sm:$0xff]
    %v966 = vld [vmem:[#allocation5 + $0x1d8] sm:$0xff]
    %v967 = vld [vmem:[#allocation5 + $0x1e0] sm:$0xff]
    %v968 = vld [vmem:[#allocation5 + $0x1e8] sm:$0xff]
    %v969 = vld [vmem:[#allocation5 + $0x1f0] sm:$0xff]
    %v970 = vld [vmem:[#allocation5 + $0x1f8] sm:$0xff]
    %v971 = vld [vmem:[#allocation5 + $0x200] sm:$0xff]
    %v972 = vld [vmem:[#allocation5 + $0x208] sm:$0xff]
    %v973 = vld [vmem:[#allocation5 + $0x210] sm:$0xff]
    %v974 = vld [vmem:[#allocation5 + $0x218] sm:$0xff]
    %v975 = vld [vmem:[#allocation5 + $0x220] sm:$0xff]
    %v976 = vld [vmem:[#allocation5 + $0x228] sm:$0xff]
    %v977 = vld [vmem:[#allocation5 + $0x230] sm:$0xff]
    %v978 = vld [vmem:[#allocation5 + $0x238] sm:$0xff]
    %v979 = vld [vmem:[#allocation5 + $0x240] sm:$0xff]
    %v980 = vld [vmem:[#allocation5 + $0x248] sm:$0xff]
    %v981 = vld [vmem:[#allocation5 + $0x250] sm:$0xff]
    %v982 = vld [vmem:[#allocation5 + $0x258] sm:$0xff]
    %v983 = vld [vmem:[#allocation5 + $0x260] sm:$0xff]
    %v984 = vld [vmem:[#allocation5 + $0x268] sm:$0xff]
    %v985 = vld [vmem:[#allocation5 + $0x270] sm:$0xff]
    %v986 = vld [vmem:[#allocation5 + $0x278] sm:$0xff]
    %v987 = vld [vmem:[#allocation5 + $0x280] sm:$0xff]
    %v988 = vld [vmem:[#allocation5 + $0x288] sm:$0xff]
    %v989 = vld [vmem:[#allocation5 + $0x290] sm:$0xff]
    %v990 = vld [vmem:[#allocation5 + $0x298] sm:$0xff]
    %v991 = vld [vmem:[#allocation5 + $0x2a0] sm:$0xff]
    %v992 = vld [vmem:[#allocation5 + $0x2a8] sm:$0xff]
    %v993 = vld [vmem:[#allocation5 + $0x2b0] sm:$0xff]
    %v994 = vld [vmem:[#allocation5 + $0x2b8] sm:$0xff]
    %v995 = vld [vmem:[#allocation5 + $0x2c0] sm:$0xff]
    %v996 = vld [vmem:[#allocation5 + $0x2c8] sm:$0xff]
    %v997 = vld [vmem:[#allocation5 + $0x2d0] sm:$0xff]
    %v998 = vld [vmem:[#allocation5 + $0x2d8] sm:$0xff]
    %v999 = vld [vmem:[#allocation5 + $0x2e0] sm:$0xff]
    %v1000 = vld [vmem:[#allocation5 + $0x2e8] sm:$0xff]
    %v1001 = vld [vmem:[#allocation5 + $0x2f0] sm:$0xff]
    %v1002 = vld [vmem:[#allocation5 + $0x2f8] sm:$0xff]
    %v1003 = vld [vmem:[#allocation5 + $0x300] sm:$0xff]
    %v1004 = vld [vmem:[#allocation5 + $0x308] sm:$0xff]
    %v1005 = vld [vmem:[#allocation5 + $0x310] sm:$0xff]
    %v1006 = vld [vmem:[#allocation5 + $0x318] sm:$0xff]
    %v1007 = vld [vmem:[#allocation5 + $0x320] sm:$0xff]
    %v1008 = vld [vmem:[#allocation5 + $0x328] sm:$0xff]
    %v1009 = vld [vmem:[#allocation5 + $0x330] sm:$0xff]
    %v1010 = vld [vmem:[#allocation5 + $0x338] sm:$0xff]
    %v1011 = vld [vmem:[#allocation5 + $0x340] sm:$0xff]
    %v1012 = vld [vmem:[#allocation5 + $0x348] sm:$0xff]
    %v1013 = vld [vmem:[#allocation5 + $0x350] sm:$0xff]
    %v1014 = vld [vmem:[#allocation5 + $0x358] sm:$0xff]
    %v1015 = vld [vmem:[#allocation5 + $0x360] sm:$0xff]
    %v1016 = vld [vmem:[#allocation5 + $0x368] sm:$0xff]
    %v1017 = vld [vmem:[#allocation5 + $0x370] sm:$0xff]
    %v1018 = vld [vmem:[#allocation5 + $0x378] sm:$0xff]
    %v1019 = vld [vmem:[#allocation5 + $0x380] sm:$0xff]
    %v1020 = vld [vmem:[#allocation5 + $0x388] sm:$0xff]
    %v1021 = vld [vmem:[#allocation5 + $0x390] sm:$0xff]
    %v1022 = vld [vmem:[#allocation5 + $0x398] sm:$0xff]
    %v1023 = vld [vmem:[#allocation5 + $0x3a0] sm:$0xff]
    %v1024 = vld [vmem:[#allocation5 + $0x3a8] sm:$0xff]
    %v1025 = vld [vmem:[#allocation5 + $0x3b0] sm:$0xff]
    %v1026 = vld [vmem:[#allocation5 + $0x3b8] sm:$0xff]
    %v1027 = vld [vmem:[#allocation5 + $0x3c0] sm:$0xff]
    %v1028 = vld [vmem:[#allocation5 + $0x3c8] sm:$0xff]
    %v1029 = vld [vmem:[#allocation5 + $0x3d0] sm:$0xff]
    %v1030 = vld [vmem:[#allocation5 + $0x3d8] sm:$0xff]
    %v1031 = vld [vmem:[#allocation5 + $0x3e0] sm:$0xff]
    %v1032 = vld [vmem:[#allocation5 + $0x3e8] sm:$0xff]
    %v1033 = vld [vmem:[#allocation5 + $0x3f0] sm:$0xff]
    %v1034 = vld [vmem:[#allocation5 + $0x3f8] sm:$0xff]
    %v1035 = vld [vmem:[%s4] sm:$0x3]
    %v1037 = vperm.slane %v1035, 0
    %v1038 = vperm.slane %v1035, 1
    %1041 = vmatpush.msra.mxu0 %v937
    %1042 = vmatpush.msra.mxu0 %v935
    %1043 = vmatpush.msra.mxu0 %v933
    %1044 = vmatpush.msra.mxu0 %v931
    %1045 = vmatpush.msra.mxu0 %v929
    %1046 = vmatpush.msra.mxu0 %v927
    %1047 = vmatpush.msra.mxu0 %v925
    %1048 = vmatpush.msra.mxu0 %v923
    %1049 = vmatpush.msra.mxu0 %v921
    %1050 = vmatpush.msra.mxu0 %v919
    %1051 = vmatpush.msra.mxu0 %v917
    %1052 = vmatpush.msra.mxu0 %v915
    %1053 = vmatpush.msra.mxu0 %v913
    %1054 = vmatpush.msra.mxu0 %v911
    %1055 = vmatpush.msra.mxu0 %v909
    %1056 = vmatpush.msra.mxu0 %v907
    %1057 = vmatmul.f32.gmra.mxu0 %v891
    %v1058 = vpop.f32.mrf.mxu0
    %v1059 = vadd.f32 %v1037, %v1058
    %1060 = vmatmul.f32.gmra.mxu0 %v895
    %v1061 = vpop.f32.mrf.mxu0
    %v1062 = vadd.f32 %v1037, %v1061
    %1063 = vmatmul.f32.gmra.mxu0 %v899
    %v1064 = vpop.f32.mrf.mxu0
    %v1065 = vadd.f32 %v1037, %v1064
    %1066 = vmatmul.f32.gmra.mxu0 %v903
    %v1067 = vpop.f32.mrf.mxu0
    %v1068 = vadd.f32 %v1037, %v1067
    %1069 = vdwg.mxu0
    %1070 = vmatpush.msra.mxu0 %v969
    %1071 = vmatpush.msra.mxu0 %v967
    %1072 = vmatpush.msra.mxu0 %v965
    %1073 = vmatpush.msra.mxu0 %v963
    %1074 = vmatpush.msra.mxu0 %v961
    %1075 = vmatpush.msra.mxu0 %v959
    %1076 = vmatpush.msra.mxu0 %v957
    %1077 = vmatpush.msra.mxu0 %v955
    %1078 = vmatpush.msra.mxu0 %v953
    %1079 = vmatpush.msra.mxu0 %v951
    %1080 = vmatpush.msra.mxu0 %v949
    %1081 = vmatpush.msra.mxu0 %v947
    %1082 = vmatpush.msra.mxu0 %v945
    %1083 = vmatpush.msra.mxu0 %v943
    %1084 = vmatpush.msra.mxu0 %v941
    %1085 = vmatpush.msra.mxu0 %v939
    %1086 = vmatmul.f32.gmra.mxu0 %v892
    %v1087 = vpop.f32.mrf.mxu0
    %v1088 = vadd.f32 %v1059, %v1087
    %1089 = vmatmul.f32.gmra.mxu0 %v896
    %v1090 = vpop.f32.mrf.mxu0
    %v1091 = vadd.f32 %v1062, %v1090
    %1092 = vmatmul.f32.gmra.mxu0 %v900
    %v1093 = vpop.f32.mrf.mxu0
    %v1094 = vadd.f32 %v1065, %v1093
    %1095 = vmatmul.f32.gmra.mxu0 %v904
    %v1096 = vpop.f32.mrf.mxu0
    %v1097 = vadd.f32 %v1068, %v1096
    %1098 = vdwg.mxu0
    %1099 = vmatpush.msra.mxu0 %v1001
    %1100 = vmatpush.msra.mxu0 %v999
    %1101 = vmatpush.msra.mxu0 %v997
    %1102 = vmatpush.msra.mxu0 %v995
    %1103 = vmatpush.msra.mxu0 %v993
    %1104 = vmatpush.msra.mxu0 %v991
    %1105 = vmatpush.msra.mxu0 %v989
    %1106 = vmatpush.msra.mxu0 %v987
    %1107 = vmatpush.msra.mxu0 %v985
    %1108 = vmatpush.msra.mxu0 %v983
    %1109 = vmatpush.msra.mxu0 %v981
    %1110 = vmatpush.msra.mxu0 %v979
    %1111 = vmatpush.msra.mxu0 %v977
    %1112 = vmatpush.msra.mxu0 %v975
    %1113 = vmatpush.msra.mxu0 %v973
    %1114 = vmatpush.msra.mxu0 %v971
    %1115 = vmatmul.f32.gmra.mxu0 %v893
    %v1116 = vpop.f32.mrf.mxu0
    %v1117 = vadd.f32 %v1088, %v1116
    %1118 = vmatmul.f32.gmra.mxu0 %v897
    %v1119 = vpop.f32.mrf.mxu0
    %v1120 = vadd.f32 %v1091, %v1119
    %1121 = vmatmul.f32.gmra.mxu0 %v901
    %v1122 = vpop.f32.mrf.mxu0
    %v1123 = vadd.f32 %v1094, %v1122
    %1124 = vmatmul.f32.gmra.mxu0 %v905
    %v1125 = vpop.f32.mrf.mxu0
    %v1126 = vadd.f32 %v1097, %v1125
    %1127 = vdwg.mxu0
    %1128 = vmatpush.msra.mxu0 %v1033
    %1129 = vmatpush.msra.mxu0 %v1031
    %1130 = vmatpush.msra.mxu0 %v1029
    %1131 = vmatpush.msra.mxu0 %v1027
    %1132 = vmatpush.msra.mxu0 %v1025
    %1133 = vmatpush.msra.mxu0 %v1023
    %1134 = vmatpush.msra.mxu0 %v1021
    %1135 = vmatpush.msra.mxu0 %v1019
    %1136 = vmatpush.msra.mxu0 %v1017
    %1137 = vmatpush.msra.mxu0 %v1015
    %1138 = vmatpush.msra.mxu0 %v1013
    %1139 = vmatpush.msra.mxu0 %v1011
    %1140 = vmatpush.msra.mxu0 %v1009
    %1141 = vmatpush.msra.mxu0 %v1007
    %1142 = vmatpush.msra.mxu0 %v1005
    %1143 = vmatpush.msra.mxu0 %v1003
    %1144 = vmatmul.f32.gmra.mxu0 %v894
    %v1145 = vpop.f32.mrf.mxu0
    %v1146 = vadd.f32 %v1117, %v1145
    %1147 = vmatmul.f32.gmra.mxu0 %v898
    %v1148 = vpop.f32.mrf.mxu0
    %v1149 = vadd.f32 %v1120, %v1148
    %1150 = vmatmul.f32.gmra.mxu0 %v902
    %v1151 = vpop.f32.mrf.mxu0
    %v1152 = vadd.f32 %v1123, %v1151
    %1153 = vmatmul.f32.gmra.mxu0 %v906
    %v1154 = vpop.f32.mrf.mxu0
    %v1155 = vadd.f32 %v1126, %v1154
    %1156 = vdwg.mxu0
    %1157 = vmatpush.msra.mxu0 %v938
    %1158 = vmatpush.msra.mxu0 %v936
    %1159 = vmatpush.msra.mxu0 %v934
    %1160 = vmatpush.msra.mxu0 %v932
    %1161 = vmatpush.msra.mxu0 %v930
    %1162 = vmatpush.msra.mxu0 %v928
    %1163 = vmatpush.msra.mxu0 %v926
    %1164 = vmatpush.msra.mxu0 %v924
    %1165 = vmatpush.msra.mxu0 %v922
    %1166 = vmatpush.msra.mxu0 %v920
    %1167 = vmatpush.msra.mxu0 %v918
    %1168 = vmatpush.msra.mxu0 %v916
    %1169 = vmatpush.msra.mxu0 %v914
    %1170 = vmatpush.msra.mxu0 %v912
    %1171 = vmatpush.msra.mxu0 %v910
    %1172 = vmatpush.msra.mxu0 %v908
    %1173 = vmatmul.f32.gmra.mxu0 %v891
    %v1174 = vpop.f32.mrf.mxu0
    %v1175 = vadd.f32 %v1038, %v1174
    %1176 = vmatmul.f32.gmra.mxu0 %v895
    %v1177 = vpop.f32.mrf.mxu0
    %v1178 = vadd.f32 %v1038, %v1177
    %1179 = vmatmul.f32.gmra.mxu0 %v899
    %v1180 = vpop.f32.mrf.mxu0
    %v1181 = vadd.f32 %v1038, %v1180
    %1182 = vmatmul.f32.gmra.mxu0 %v903
    %v1183 = vpop.f32.mrf.mxu0
    %v1184 = vadd.f32 %v1038, %v1183
    %1185 = vdwg.mxu0
    %1186 = vmatpush.msra.mxu0 %v970
    %1187 = vmatpush.msra.mxu0 %v968
    %1188 = vmatpush.msra.mxu0 %v966
    %1189 = vmatpush.msra.mxu0 %v964
    %1190 = vmatpush.msra.mxu0 %v962
    %1191 = vmatpush.msra.mxu0 %v960
    %1192 = vmatpush.msra.mxu0 %v958
    %1193 = vmatpush.msra.mxu0 %v956
    %1194 = vmatpush.msra.mxu0 %v954
    %1195 = vmatpush.msra.mxu0 %v952
    %1196 = vmatpush.msra.mxu0 %v950
    %1197 = vmatpush.msra.mxu0 %v948
    %1198 = vmatpush.msra.mxu0 %v946
    %1199 = vmatpush.msra.mxu0 %v944
    %1200 = vmatpush.msra.mxu0 %v942
    %1201 = vmatpush.msra.mxu0 %v940
    %1202 = vmatmul.f32.gmra.mxu0 %v892
    %v1203 = vpop.f32.mrf.mxu0
    %v1204 = vadd.f32 %v1175, %v1203
    %1205 = vmatmul.f32.gmra.mxu0 %v896
    %v1206 = vpop.f32.mrf.mxu0
    %v1207 = vadd.f32 %v1178, %v1206
    %1208 = vmatmul.f32.gmra.mxu0 %v900
    %v1209 = vpop.f32.mrf.mxu0
    %v1210 = vadd.f32 %v1181, %v1209
    %1211 = vmatmul.f32.gmra.mxu0 %v904
    %v1212 = vpop.f32.mrf.mxu0
    %v1213 = vadd.f32 %v1184, %v1212
    %1214 = vdwg.mxu0
    %1215 = vmatpush.msra.mxu0 %v1002
    %1216 = vmatpush.msra.mxu0 %v1000
    %1217 = vmatpush.msra.mxu0 %v998
    %1218 = vmatpush.msra.mxu0 %v996
    %1219 = vmatpush.msra.mxu0 %v994
    %1220 = vmatpush.msra.mxu0 %v992
    %1221 = vmatpush.msra.mxu0 %v990
    %1222 = vmatpush.msra.mxu0 %v988
    %1223 = vmatpush.msra.mxu0 %v986
    %1224 = vmatpush.msra.mxu0 %v984
    %1225 = vmatpush.msra.mxu0 %v982
    %1226 = vmatpush.msra.mxu0 %v980
    %1227 = vmatpush.msra.mxu0 %v978
    %1228 = vmatpush.msra.mxu0 %v976
    %1229 = vmatpush.msra.mxu0 %v974
    %1230 = vmatpush.msra.mxu0 %v972
    %1231 = vmatmul.f32.gmra.mxu0 %v893
    %v1232 = vpop.f32.mrf.mxu0
    %v1233 = vadd.f32 %v1204, %v1232
    %1234 = vmatmul.f32.gmra.mxu0 %v897
    %v1235 = vpop.f32.mrf.mxu0
    %v1236 = vadd.f32 %v1207, %v1235
    %1237 = vmatmul.f32.gmra.mxu0 %v901
    %v1238 = vpop.f32.mrf.mxu0
    %v1239 = vadd.f32 %v1210, %v1238
    %1240 = vmatmul.f32.gmra.mxu0 %v905
    %v1241 = vpop.f32.mrf.mxu0
    %v1242 = vadd.f32 %v1213, %v1241
    %1243 = vdwg.mxu0
    %1244 = vmatpush.msra.mxu0 %v1034
    %1245 = vmatpush.msra.mxu0 %v1032
    %1246 = vmatpush.msra.mxu0 %v1030
    %1247 = vmatpush.msra.mxu0 %v1028
    %1248 = vmatpush.msra.mxu0 %v1026
    %1249 = vmatpush.msra.mxu0 %v1024
    %1250 = vmatpush.msra.mxu0 %v1022
    %1251 = vmatpush.msra.mxu0 %v1020
    %1252 = vmatpush.msra.mxu0 %v1018
    %1253 = vmatpush.msra.mxu0 %v1016
    %1254 = vmatpush.msra.mxu0 %v1014
    %1255 = vmatpush.msra.mxu0 %v1012
    %1256 = vmatpush.msra.mxu0 %v1010
    %1257 = vmatpush.msra.mxu0 %v1008
    %1258 = vmatpush.msra.mxu0 %v1006
    %1259 = vmatpush.msra.mxu0 %v1004
    %1260 = vmatmul.f32.gmra.mxu0 %v894
    %v1261 = vpop.f32.mrf.mxu0
    %v1262 = vadd.f32 %v1233, %v1261
    %1263 = vmatmul.f32.gmra.mxu0 %v898
    %v1264 = vpop.f32.mrf.mxu0
    %v1265 = vadd.f32 %v1236, %v1264
    %1266 = vmatmul.f32.gmra.mxu0 %v902
    %v1267 = vpop.f32.mrf.mxu0
    %v1268 = vadd.f32 %v1239, %v1267
    %1269 = vmatmul.f32.gmra.mxu0 %v906
    %v1270 = vpop.f32.mrf.mxu0
    %v1271 = vadd.f32 %v1242, %v1270
    %1272 = vdwg.mxu0
    %v1273 = vmax.f32 %v1146, 0.0
    %v1274 = vmax.f32 %v1262, 0.0
    %v1275 = vmax.f32 %v1149, 0.0
    %v1276 = vmax.f32 %v1265, 0.0
    %v1277 = vmax.f32 %v1152, 0.0
    %v1278 = vmax.f32 %v1268, 0.0
    %v1279 = vmax.f32 %v1155, 0.0
    %v1280 = vmax.f32 %v1271, 0.0
    %vm1289 = vcmask 1040384
    %v1290 = vrot.slane %v1273, 7
    %v1291 = vrot.slane %v1274, 7
    %v1292 = vrot.slane %v1275, 7
    %v1293 = vsel %vm1289, %v1290, %v1292
    %v1294 = vrot.slane %v1276, 7
    %v1295 = vsel %vm1289, %v1291, %v1294
    %v1296 = vrot.slane %v1277, 7
    %v1297 = vrot.slane %v1278, 7
    %v1298 = vrot.slane %v1279, 7
    %v1299 = vsel %vm1289, %v1296, %v1298
    %v1300 = vrot.slane %v1280, 7
    %v1301 = vsel %vm1289, %v1297, %v1300
    %1314 = vst [vmem:[#allocation3] sm:$0xfe] %v1290
    %1315 = vst [vmem:[#allocation3 + $0x8] sm:$0xfe] %v1291
    %1316 = vst [vmem:[#allocation3 + $0x10] sm:$0xff] %v1293
    %1317 = vst [vmem:[#allocation3 + $0x18] sm:$0xff] %v1295
    %1318 = vst [vmem:[#allocation3 + $0x20] sm:$0x1] %v1292
    %1319 = vst [vmem:[#allocation3 + $0x28] sm:$0x1] %v1294
    %1320 = vst [vmem:[#allocation3 + $0x30] sm:$0xfe] %v1296
    %1321 = vst [vmem:[#allocation3 + $0x38] sm:$0xfe] %v1297
    %1322 = vst [vmem:[#allocation3 + $0x40] sm:$0xff] %v1299
    %1323 = vst [vmem:[#allocation3 + $0x48] sm:$0xff] %v1301
    %1324 = vst [vmem:[#allocation3 + $0x50] sm:$0x1] %v1298
    %1325 = vst [vmem:[#allocation3 + $0x58] sm:$0x1] %v1300
    %v1326 = vld [vmem:[#allocation3] sm:$0xff]
    %v1327 = vld [vmem:[#allocation3 + $0x8] sm:$0xff]
    %v1328 = vld [vmem:[#allocation3 + $0x10] sm:$0xff]
    %v1329 = vld [vmem:[#allocation3 + $0x18] sm:$0xff]
    %v1330 = vld [vmem:[#allocation3 + $0x30] sm:$0xff]
    %v1331 = vld [vmem:[#allocation3 + $0x38] sm:$0xff]
    %v1332 = vld [vmem:[#allocation3 + $0x40] sm:$0xff]
    %v1333 = vld [vmem:[#allocation3 + $0x48] sm:$0xff]
    %v1334 = vld [vmem:[%s5] sm:$0xff]
    %v1335 = vld [vmem:[%s5 + $0x8] sm:$0xff]
    %v1336 = vld [vmem:[%s5 + $0x10] sm:$0xff]
    %v1337 = vld [vmem:[%s5 + $0x18] sm:$0xff]
    %v1338 = vld [vmem:[%s5 + $0x20] sm:$0xff]
    %v1339 = vld [vmem:[%s5 + $0x28] sm:$0xff]
    %v1340 = vld [vmem:[%s5 + $0x30] sm:$0xff]
    %v1341 = vld [vmem:[%s5 + $0x38] sm:$0xff]
    %v1342 = vld [vmem:[%s5 + $0x40] sm:$0xff]
    %v1343 = vld [vmem:[%s5 + $0x48] sm:$0xff]
    %v1344 = vld [vmem:[%s5 + $0x50] sm:$0xff]
    %v1345 = vld [vmem:[%s5 + $0x58] sm:$0xff]
    %v1346 = vld [vmem:[%s5 + $0x60] sm:$0xff]
    %v1347 = vld [vmem:[%s5 + $0x68] sm:$0xff]
    %v1348 = vld [vmem:[%s5 + $0x70] sm:$0xff]
    %v1349 = vld [vmem:[%s5 + $0x78] sm:$0xff]
    %v1350 = vld [vmem:[%s5 + $0x80] sm:$0xff]
    %v1351 = vld [vmem:[%s5 + $0x88] sm:$0xff]
    %v1352 = vld [vmem:[%s5 + $0x90] sm:$0xff]
    %v1353 = vld [vmem:[%s5 + $0x98] sm:$0xff]
    %v1354 = vld [vmem:[%s5 + $0xa0] sm:$0xff]
    %v1355 = vld [vmem:[%s5 + $0xa8] sm:$0xff]
    %v1356 = vld [vmem:[%s5 + $0xb0] sm:$0xff]
    %v1357 = vld [vmem:[%s5 + $0xb8] sm:$0xff]
    %v1358 = vld [vmem:[%s5 + $0xc0] sm:$0xff]
    %v1359 = vld [vmem:[%s5 + $0xc8] sm:$0xff]
    %v1360 = vld [vmem:[%s5 + $0xd0] sm:$0xff]
    %v1361 = vld [vmem:[%s5 + $0xd8] sm:$0xff]
    %v1362 = vld [vmem:[%s5 + $0xe0] sm:$0xff]
    %v1363 = vld [vmem:[%s5 + $0xe8] sm:$0xff]
    %v1364 = vld [vmem:[%s5 + $0xf0] sm:$0xff]
    %v1365 = vld [vmem:[%s5 + $0xf8] sm:$0xff]
    %v1366 = vld [vmem:[%s5 + $0x100] sm:$0xff]
    %v1367 = vld [vmem:[%s5 + $0x108] sm:$0xff]
    %v1368 = vld [vmem:[%s5 + $0x110] sm:$0xff]
    %v1369 = vld [vmem:[%s5 + $0x118] sm:$0xff]
    %v1370 = vld [vmem:[%s5 + $0x120] sm:$0xff]
    %v1371 = vld [vmem:[%s5 + $0x128] sm:$0xff]
    %v1372 = vld [vmem:[%s5 + $0x130] sm:$0xff]
    %v1373 = vld [vmem:[%s5 + $0x138] sm:$0xff]
    %v1374 = vld [vmem:[%s5 + $0x140] sm:$0xff]
    %v1375 = vld [vmem:[%s5 + $0x148] sm:$0xff]
    %v1376 = vld [vmem:[%s5 + $0x150] sm:$0xff]
    %v1377 = vld [vmem:[%s5 + $0x158] sm:$0xff]
    %v1378 = vld [vmem:[%s5 + $0x160] sm:$0xff]
    %v1379 = vld [vmem:[%s5 + $0x168] sm:$0xff]
    %v1380 = vld [vmem:[%s5 + $0x170] sm:$0xff]
    %v1381 = vld [vmem:[%s5 + $0x178] sm:$0xff]
    %v1382 = vld [vmem:[%s5 + $0x180] sm:$0xff]
    %v1383 = vld [vmem:[%s5 + $0x188] sm:$0xff]
    %v1384 = vld [vmem:[%s5 + $0x190] sm:$0xff]
    %v1385 = vld [vmem:[%s5 + $0x198] sm:$0xff]
    %v1386 = vld [vmem:[%s5 + $0x1a0] sm:$0xff]
    %v1387 = vld [vmem:[%s5 + $0x1a8] sm:$0xff]
    %v1388 = vld [vmem:[%s5 + $0x1b0] sm:$0xff]
    %v1389 = vld [vmem:[%s5 + $0x1b8] sm:$0xff]
    %v1390 = vld [vmem:[%s5 + $0x1c0] sm:$0xff]
    %v1391 = vld [vmem:[%s5 + $0x1c8] sm:$0xff]
    %v1392 = vld [vmem:[%s5 + $0x1d0] sm:$0xff]
    %v1393 = vld [vmem:[%s5 + $0x1d8] sm:$0xff]
    %v1394 = vld [vmem:[%s5 + $0x1e0] sm:$0xff]
    %v1395 = vld [vmem:[%s5 + $0x1e8] sm:$0xff]
    %v1396 = vld [vmem:[%s5 + $0x1f0] sm:$0xff]
    %v1397 = vld [vmem:[%s5 + $0x1f8] sm:$0xff]
    %v1398 = vld [vmem:[#allocation3] sm:$0xfe]
    %v1399 = vld [vmem:[#allocation3 + $0x8] sm:$0xfe]
    %v1400 = vld [vmem:[#allocation3 + $0x20] sm:$0x1]
    %v1401 = vld [vmem:[#allocation3 + $0x28] sm:$0x1]
    %v1402 = vld [vmem:[#allocation3 + $0x30] sm:$0xfe]
    %v1403 = vld [vmem:[#allocation3 + $0x38] sm:$0xfe]
    %v1404 = vld [vmem:[#allocation3 + $0x50] sm:$0x1]
    %v1405 = vld [vmem:[#allocation3 + $0x58] sm:$0x1]
    %vm1418 = vcmask 1046528
    %v1419 = vrot.slane %v1398, 1
    %v1420 = vrot.slane %v1328, 1
    %v1421 = vsel %vm1418, %v1419, %v1420
    %v1422 = vrot.slane %v1399, 1
    %v1423 = vrot.slane %v1329, 1
    %v1424 = vsel %vm1418, %v1422, %v1423
    %v1425 = vrot.slane %v1400, 1
    %v1426 = vsel %vm1418, %v1420, %v1425
    %v1427 = vrot.slane %v1401, 1
    %v1428 = vsel %vm1418, %v1423, %v1427
    %v1429 = vrot.slane %v1402, 1
    %v1430 = vrot.slane %v1332, 1
    %v1431 = vsel %vm1418, %v1429, %v1430
    %v1432 = vrot.slane %v1403, 1
    %v1433 = vrot.slane %v1333, 1
    %v1434 = vsel %vm1418, %v1432, %v1433
    %v1435 = vrot.slane %v1404, 1
    %v1436 = vsel %vm1418, %v1430, %v1435
    %v1437 = vrot.slane %v1405, 1
    %v1438 = vsel %vm1418, %v1433, %v1437
    %s1447 = scalar_lea.vmem %s5, 512
    %v1448 = vld [vmem:[%s1447] sm:$0xff]
    %v1449 = vld [vmem:[%s1447 + $0x8] sm:$0xff]
    %v1450 = vld [vmem:[%s1447 + $0x10] sm:$0xff]
    %v1451 = vld [vmem:[%s1447 + $0x18] sm:$0xff]
    %v1452 = vld [vmem:[%s1447 + $0x20] sm:$0xff]
    %v1453 = vld [vmem:[%s1447 + $0x28] sm:$0xff]
    %v1454 = vld [vmem:[%s1447 + $0x30] sm:$0xff]
    %v1455 = vld [vmem:[%s1447 + $0x38] sm:$0xff]
    %v1456 = vld [vmem:[%s1447 + $0x40] sm:$0xff]
    %v1457 = vld [vmem:[%s1447 + $0x48] sm:$0xff]
    %v1458 = vld [vmem:[%s1447 + $0x50] sm:$0xff]
    %v1459 = vld [vmem:[%s1447 + $0x58] sm:$0xff]
    %v1460 = vld [vmem:[%s1447 + $0x60] sm:$0xff]
    %v1461 = vld [vmem:[%s1447 + $0x68] sm:$0xff]
    %v1462 = vld [vmem:[%s1447 + $0x70] sm:$0xff]
    %v1463 = vld [vmem:[%s1447 + $0x78] sm:$0xff]
    %v1464 = vld [vmem:[%s1447 + $0x80] sm:$0xff]
    %v1465 = vld [vmem:[%s1447 + $0x88] sm:$0xff]
    %v1466 = vld [vmem:[%s1447 + $0x90] sm:$0xff]
    %v1467 = vld [vmem:[%s1447 + $0x98] sm:$0xff]
    %v1468 = vld [vmem:[%s1447 + $0xa0] sm:$0xff]
    %v1469 = vld [vmem:[%s1447 + $0xa8] sm:$0xff]
    %v1470 = vld [vmem:[%s1447 + $0xb0] sm:$0xff]
    %v1471 = vld [vmem:[%s1447 + $0xb8] sm:$0xff]
    %v1472 = vld [vmem:[%s1447 + $0xc0] sm:$0xff]
    %v1473 = vld [vmem:[%s1447 + $0xc8] sm:$0xff]
    %v1474 = vld [vmem:[%s1447 + $0xd0] sm:$0xff]
    %v1475 = vld [vmem:[%s1447 + $0xd8] sm:$0xff]
    %v1476 = vld [vmem:[%s1447 + $0xe0] sm:$0xff]
    %v1477 = vld [vmem:[%s1447 + $0xe8] sm:$0xff]
    %v1478 = vld [vmem:[%s1447 + $0xf0] sm:$0xff]
    %v1479 = vld [vmem:[%s1447 + $0xf8] sm:$0xff]
    %v1480 = vld [vmem:[%s1447 + $0x100] sm:$0xff]
    %v1481 = vld [vmem:[%s1447 + $0x108] sm:$0xff]
    %v1482 = vld [vmem:[%s1447 + $0x110] sm:$0xff]
    %v1483 = vld [vmem:[%s1447 + $0x118] sm:$0xff]
    %v1484 = vld [vmem:[%s1447 + $0x120] sm:$0xff]
    %v1485 = vld [vmem:[%s1447 + $0x128] sm:$0xff]
    %v1486 = vld [vmem:[%s1447 + $0x130] sm:$0xff]
    %v1487 = vld [vmem:[%s1447 + $0x138] sm:$0xff]
    %v1488 = vld [vmem:[%s1447 + $0x140] sm:$0xff]
    %v1489 = vld [vmem:[%s1447 + $0x148] sm:$0xff]
    %v1490 = vld [vmem:[%s1447 + $0x150] sm:$0xff]
    %v1491 = vld [vmem:[%s1447 + $0x158] sm:$0xff]
    %v1492 = vld [vmem:[%s1447 + $0x160] sm:$0xff]
    %v1493 = vld [vmem:[%s1447 + $0x168] sm:$0xff]
    %v1494 = vld [vmem:[%s1447 + $0x170] sm:$0xff]
    %v1495 = vld [vmem:[%s1447 + $0x178] sm:$0xff]
    %v1496 = vld [vmem:[%s1447 + $0x180] sm:$0xff]
    %v1497 = vld [vmem:[%s1447 + $0x188] sm:$0xff]
    %v1498 = vld [vmem:[%s1447 + $0x190] sm:$0xff]
    %v1499 = vld [vmem:[%s1447 + $0x198] sm:$0xff]
    %v1500 = vld [vmem:[%s1447 + $0x1a0] sm:$0xff]
    %v1501 = vld [vmem:[%s1447 + $0x1a8] sm:$0xff]
    %v1502 = vld [vmem:[%s1447 + $0x1b0] sm:$0xff]
    %v1503 = vld [vmem:[%s1447 + $0x1b8] sm:$0xff]
    %v1504 = vld [vmem:[%s1447 + $0x1c0] sm:$0xff]
    %v1505 = vld [vmem:[%s1447 + $0x1c8] sm:$0xff]
    %v1506 = vld [vmem:[%s1447 + $0x1d0] sm:$0xff]
    %v1507 = vld [vmem:[%s1447 + $0x1d8] sm:$0xff]
    %v1508 = vld [vmem:[%s1447 + $0x1e0] sm:$0xff]
    %v1509 = vld [vmem:[%s1447 + $0x1e8] sm:$0xff]
    %v1510 = vld [vmem:[%s1447 + $0x1f0] sm:$0xff]
    %v1511 = vld [vmem:[%s1447 + $0x1f8] sm:$0xff]
    %1512 = vmatpush.msra.mxu0 %v1478
    %1513 = vmatpush.msra.mxu0 %v1476
    %1514 = vmatpush.msra.mxu0 %v1474
    %1515 = vmatpush.msra.mxu0 %v1472
    %1516 = vmatpush.msra.mxu0 %v1470
    %1517 = vmatpush.msra.mxu0 %v1468
    %1518 = vmatpush.msra.mxu0 %v1466
    %1519 = vmatpush.msra.mxu0 %v1464
    %1520 = vmatpush.msra.mxu0 %v1462
    %1521 = vmatpush.msra.mxu0 %v1460
    %1522 = vmatpush.msra.mxu0 %v1458
    %1523 = vmatpush.msra.mxu0 %v1456
    %1524 = vmatpush.msra.mxu0 %v1454
    %1525 = vmatpush.msra.mxu0 %v1452
    %1526 = vmatpush.msra.mxu0 %v1450
    %1527 = vmatpush.msra.mxu0 %v1448
    %1528 = vmatmul.f32.gmra.mxu0 %v1421
    %v1529 = vpop.f32.mrf.mxu0
    %v1530 = vadd.f32 0.0, %v1529
    %1531 = vmatmul.f32.gmra.mxu0 %v1426
    %v1532 = vpop.f32.mrf.mxu0
    %v1533 = vadd.f32 0.0, %v1532
    %1534 = vmatmul.f32.gmra.mxu0 %v1431
    %v1535 = vpop.f32.mrf.mxu0
    %v1536 = vadd.f32 0.0, %v1535
    %1537 = vmatmul.f32.gmra.mxu0 %v1436
    %v1538 = vpop.f32.mrf.mxu0
    %v1539 = vadd.f32 0.0, %v1538
    %1540 = vdwg.mxu0
    %1541 = vmatpush.msra.mxu0 %v1510
    %1542 = vmatpush.msra.mxu0 %v1508
    %1543 = vmatpush.msra.mxu0 %v1506
    %1544 = vmatpush.msra.mxu0 %v1504
    %1545 = vmatpush.msra.mxu0 %v1502
    %1546 = vmatpush.msra.mxu0 %v1500
    %1547 = vmatpush.msra.mxu0 %v1498
    %1548 = vmatpush.msra.mxu0 %v1496
    %1549 = vmatpush.msra.mxu0 %v1494
    %1550 = vmatpush.msra.mxu0 %v1492
    %1551 = vmatpush.msra.mxu0 %v1490
    %1552 = vmatpush.msra.mxu0 %v1488
    %1553 = vmatpush.msra.mxu0 %v1486
    %1554 = vmatpush.msra.mxu0 %v1484
    %1555 = vmatpush.msra.mxu0 %v1482
    %1556 = vmatpush.msra.mxu0 %v1480
    %1557 = vmatmul.f32.gmra.mxu0 %v1424
    %v1558 = vpop.f32.mrf.mxu0
    %v1559 = vadd.f32 %v1530, %v1558
    %1560 = vmatmul.f32.gmra.mxu0 %v1428
    %v1561 = vpop.f32.mrf.mxu0
    %v1562 = vadd.f32 %v1533, %v1561
    %1563 = vmatmul.f32.gmra.mxu0 %v1434
    %v1564 = vpop.f32.mrf.mxu0
    %v1565 = vadd.f32 %v1536, %v1564
    %1566 = vmatmul.f32.gmra.mxu0 %v1438
    %v1567 = vpop.f32.mrf.mxu0
    %v1568 = vadd.f32 %v1539, %v1567
    %1569 = vdwg.mxu0
    %1570 = vmatpush.msra.mxu0 %v1479
    %1571 = vmatpush.msra.mxu0 %v1477
    %1572 = vmatpush.msra.mxu0 %v1475
    %1573 = vmatpush.msra.mxu0 %v1473
    %1574 = vmatpush.msra.mxu0 %v1471
    %1575 = vmatpush.msra.mxu0 %v1469
    %1576 = vmatpush.msra.mxu0 %v1467
    %1577 = vmatpush.msra.mxu0 %v1465
    %1578 = vmatpush.msra.mxu0 %v1463
    %1579 = vmatpush.msra.mxu0 %v1461
    %1580 = vmatpush.msra.mxu0 %v1459
    %1581 = vmatpush.msra.mxu0 %v1457
    %1582 = vmatpush.msra.mxu0 %v1455
    %1583 = vmatpush.msra.mxu0 %v1453
    %1584 = vmatpush.msra.mxu0 %v1451
    %1585 = vmatpush.msra.mxu0 %v1449
    %1586 = vmatmul.f32.gmra.mxu0 %v1421
    %v1587 = vpop.f32.mrf.mxu0
    %v1588 = vadd.f32 0.0, %v1587
    %1589 = vmatmul.f32.gmra.mxu0 %v1426
    %v1590 = vpop.f32.mrf.mxu0
    %v1591 = vadd.f32 0.0, %v1590
    %1592 = vmatmul.f32.gmra.mxu0 %v1431
    %v1593 = vpop.f32.mrf.mxu0
    %v1594 = vadd.f32 0.0, %v1593
    %1595 = vmatmul.f32.gmra.mxu0 %v1436
    %v1596 = vpop.f32.mrf.mxu0
    %v1597 = vadd.f32 0.0, %v1596
    %1598 = vdwg.mxu0
    %1599 = vmatpush.msra.mxu0 %v1511
    %1600 = vmatpush.msra.mxu0 %v1509
    %1601 = vmatpush.msra.mxu0 %v1507
    %1602 = vmatpush.msra.mxu0 %v1505
    %1603 = vmatpush.msra.mxu0 %v1503
    %1604 = vmatpush.msra.mxu0 %v1501
    %1605 = vmatpush.msra.mxu0 %v1499
    %1606 = vmatpush.msra.mxu0 %v1497
    %1607 = vmatpush.msra.mxu0 %v1495
    %1608 = vmatpush.msra.mxu0 %v1493
    %1609 = vmatpush.msra.mxu0 %v1491
    %1610 = vmatpush.msra.mxu0 %v1489
    %1611 = vmatpush.msra.mxu0 %v1487
    %1612 = vmatpush.msra.mxu0 %v1485
    %1613 = vmatpush.msra.mxu0 %v1483
    %1614 = vmatpush.msra.mxu0 %v1481
    %1615 = vmatmul.f32.gmra.mxu0 %v1424
    %v1616 = vpop.f32.mrf.mxu0
    %v1617 = vadd.f32 %v1588, %v1616
    %1618 = vmatmul.f32.gmra.mxu0 %v1428
    %v1619 = vpop.f32.mrf.mxu0
    %v1620 = vadd.f32 %v1591, %v1619
    %1621 = vmatmul.f32.gmra.mxu0 %v1434
    %v1622 = vpop.f32.mrf.mxu0
    %v1623 = vadd.f32 %v1594, %v1622
    %1624 = vmatmul.f32.gmra.mxu0 %v1438
    %v1625 = vpop.f32.mrf.mxu0
    %v1626 = vadd.f32 %v1597, %v1625
    %1627 = vdwg.mxu0
    %1628 = vmatpush.msra.mxu0 %v1364
    %1629 = vmatpush.msra.mxu0 %v1362
    %1630 = vmatpush.msra.mxu0 %v1360
    %1631 = vmatpush.msra.mxu0 %v1358
    %1632 = vmatpush.msra.mxu0 %v1356
    %1633 = vmatpush.msra.mxu0 %v1354
    %1634 = vmatpush.msra.mxu0 %v1352
    %1635 = vmatpush.msra.mxu0 %v1350
    %1636 = vmatpush.msra.mxu0 %v1348
    %1637 = vmatpush.msra.mxu0 %v1346
    %1638 = vmatpush.msra.mxu0 %v1344
    %1639 = vmatpush.msra.mxu0 %v1342
    %1640 = vmatpush.msra.mxu0 %v1340
    %1641 = vmatpush.msra.mxu0 %v1338
    %1642 = vmatpush.msra.mxu0 %v1336
    %1643 = vmatpush.msra.mxu0 %v1334
    %1644 = vmatmul.f32.gmra.mxu0 %v1326
    %v1645 = vpop.f32.mrf.mxu0
    %v1646 = vadd.f32 %v1559, %v1645
    %1647 = vmatmul.f32.gmra.mxu0 %v1328
    %v1648 = vpop.f32.mrf.mxu0
    %v1649 = vadd.f32 %v1562, %v1648
    %1650 = vmatmul.f32.gmra.mxu0 %v1330
    %v1651 = vpop.f32.mrf.mxu0
    %v1652 = vadd.f32 %v1565, %v1651
    %1653 = vmatmul.f32.gmra.mxu0 %v1332
    %v1654 = vpop.f32.mrf.mxu0
    %v1655 = vadd.f32 %v1568, %v1654
    %1656 = vdwg.mxu0
    %1657 = vmatpush.msra.mxu0 %v1396
    %1658 = vmatpush.msra.mxu0 %v1394
    %1659 = vmatpush.msra.mxu0 %v1392
    %1660 = vmatpush.msra.mxu0 %v1390
    %1661 = vmatpush.msra.mxu0 %v1388
    %1662 = vmatpush.msra.mxu0 %v1386
    %1663 = vmatpush.msra.mxu0 %v1384
    %1664 = vmatpush.msra.mxu0 %v1382
    %1665 = vmatpush.msra.mxu0 %v1380
    %1666 = vmatpush.msra.mxu0 %v1378
    %1667 = vmatpush.msra.mxu0 %v1376
    %1668 = vmatpush.msra.mxu0 %v1374
    %1669 = vmatpush.msra.mxu0 %v1372
    %1670 = vmatpush.msra.mxu0 %v1370
    %1671 = vmatpush.msra.mxu0 %v1368
    %1672 = vmatpush.msra.mxu0 %v1366
    %1673 = vmatmul.f32.gmra.mxu0 %v1327
    %v1674 = vpop.f32.mrf.mxu0
    %v1675 = vadd.f32 %v1646, %v1674
    %1676 = vmatmul.f32.gmra.mxu0 %v1329
    %v1677 = vpop.f32.mrf.mxu0
    %v1678 = vadd.f32 %v1649, %v1677
    %1679 = vmatmul.f32.gmra.mxu0 %v1331
    %v1680 = vpop.f32.mrf.mxu0
    %v1681 = vadd.f32 %v1652, %v1680
    %1682 = vmatmul.f32.gmra.mxu0 %v1333
    %v1683 = vpop.f32.mrf.mxu0
    %v1684 = vadd.f32 %v1655, %v1683
    %1685 = vdwg.mxu0
    %1686 = vmatpush.msra.mxu0 %v1365
    %1687 = vmatpush.msra.mxu0 %v1363
    %1688 = vmatpush.msra.mxu0 %v1361
    %1689 = vmatpush.msra.mxu0 %v1359
    %1690 = vmatpush.msra.mxu0 %v1357
    %1691 = vmatpush.msra.mxu0 %v1355
    %1692 = vmatpush.msra.mxu0 %v1353
    %1693 = vmatpush.msra.mxu0 %v1351
    %1694 = vmatpush.msra.mxu0 %v1349
    %1695 = vmatpush.msra.mxu0 %v1347
    %1696 = vmatpush.msra.mxu0 %v1345
    %1697 = vmatpush.msra.mxu0 %v1343
    %1698 = vmatpush.msra.mxu0 %v1341
    %1699 = vmatpush.msra.mxu0 %v1339
    %1700 = vmatpush.msra.mxu0 %v1337
    %1701 = vmatpush.msra.mxu0 %v1335
    %1702 = vmatmul.f32.gmra.mxu0 %v1326
    %v1703 = vpop.f32.mrf.mxu0
    %v1704 = vadd.f32 %v1617, %v1703
    %1705 = vmatmul.f32.gmra.mxu0 %v1328
    %v1706 = vpop.f32.mrf.mxu0
    %v1707 = vadd.f32 %v1620, %v1706
    %1708 = vmatmul.f32.gmra.mxu0 %v1330
    %v1709 = vpop.f32.mrf.mxu0
    %v1710 = vadd.f32 %v1623, %v1709
    %1711 = vmatmul.f32.gmra.mxu0 %v1332
    %v1712 = vpop.f32.mrf.mxu0
    %v1713 = vadd.f32 %v1626, %v1712
    %1714 = vdwg.mxu0
    %1715 = vmatpush.msra.mxu0 %v1397
    %1716 = vmatpush.msra.mxu0 %v1395
    %1717 = vmatpush.msra.mxu0 %v1393
    %1718 = vmatpush.msra.mxu0 %v1391
    %1719 = vmatpush.msra.mxu0 %v1389
    %1720 = vmatpush.msra.mxu0 %v1387
    %1721 = vmatpush.msra.mxu0 %v1385
    %1722 = vmatpush.msra.mxu0 %v1383
    %1723 = vmatpush.msra.mxu0 %v1381
    %1724 = vmatpush.msra.mxu0 %v1379
    %1725 = vmatpush.msra.mxu0 %v1377
    %1726 = vmatpush.msra.mxu0 %v1375
    %1727 = vmatpush.msra.mxu0 %v1373
    %1728 = vmatpush.msra.mxu0 %v1371
    %1729 = vmatpush.msra.mxu0 %v1369
    %1730 = vmatpush.msra.mxu0 %v1367
    %1731 = vmatmul.f32.gmra.mxu0 %v1327
    %v1732 = vpop.f32.mrf.mxu0
    %v1733 = vadd.f32 %v1704, %v1732
    %1734 = vmatmul.f32.gmra.mxu0 %v1329
    %v1735 = vpop.f32.mrf.mxu0
    %v1736 = vadd.f32 %v1707, %v1735
    %1737 = vmatmul.f32.gmra.mxu0 %v1331
    %v1738 = vpop.f32.mrf.mxu0
    %v1739 = vadd.f32 %v1710, %v1738
    %1740 = vmatmul.f32.gmra.mxu0 %v1333
    %v1741 = vpop.f32.mrf.mxu0
    %v1742 = vadd.f32 %v1713, %v1741
    %1743 = vdwg.mxu0
    %v1744 = vld [vmem:[#allocation3] sm:$0xfc]
    %v1745 = vld [vmem:[#allocation3 + $0x8] sm:$0xfc]
    %v1746 = vld [vmem:[#allocation3 + $0x20] sm:$0x3]
    %v1747 = vld [vmem:[#allocation3 + $0x28] sm:$0x3]
    %v1748 = vld [vmem:[#allocation3 + $0x30] sm:$0xfc]
    %v1749 = vld [vmem:[#allocation3 + $0x38] sm:$0xfc]
    %v1750 = vld [vmem:[#allocation3 + $0x50] sm:$0x3]
    %v1751 = vld [vmem:[#allocation3 + $0x58] sm:$0x3]
    %vm1760 = vcmask 1045504
    %v1761 = vrot.slane %v1744, 2
    %v1762 = vrot.slane %v1328, 2
    %v1763 = vsel %vm1760, %v1761, %v1762
    %v1764 = vrot.slane %v1745, 2
    %v1765 = vrot.slane %v1329, 2
    %v1766 = vsel %vm1760, %v1764, %v1765
    %v1767 = vrot.slane %v1746, 2
    %v1768 = vsel %vm1760, %v1762, %v1767
    %v1769 = vrot.slane %v1747, 2
    %v1770 = vsel %vm1760, %v1765, %v1769
    %v1771 = vrot.slane %v1748, 2
    %v1772 = vrot.slane %v1332, 2
    %v1773 = vsel %vm1760, %v1771, %v1772
    %v1774 = vrot.slane %v1749, 2
    %v1775 = vrot.slane %v1333, 2
    %v1776 = vsel %vm1760, %v1774, %v1775
    %v1777 = vrot.slane %v1750, 2
    %v1778 = vsel %vm1760, %v1772, %v1777
    %v1779 = vrot.slane %v1751, 2
    %v1780 = vsel %vm1760, %v1775, %v1779
    %s1789 = scalar_lea.vmem %s5, 1024
    %v1790 = vld [vmem:[%s1789] sm:$0xff]
    %v1791 = vld [vmem:[%s1789 + $0x8] sm:$0xff]
    %v1792 = vld [vmem:[%s1789 + $0x10] sm:$0xff]
    %v1793 = vld [vmem:[%s1789 + $0x18] sm:$0xff]
    %v1794 = vld [vmem:[%s1789 + $0x20] sm:$0xff]
    %v1795 = vld [vmem:[%s1789 + $0x28] sm:$0xff]
    %v1796 = vld [vmem:[%s1789 + $0x30] sm:$0xff]
    %v1797 = vld [vmem:[%s1789 + $0x38] sm:$0xff]
    %v1798 = vld [vmem:[%s1789 + $0x40] sm:$0xff]
    %v1799 = vld [vmem:[%s1789 + $0x48] sm:$0xff]
    %v1800 = vld [vmem:[%s1789 + $0x50] sm:$0xff]
    %v1801 = vld [vmem:[%s1789 + $0x58] sm:$0xff]
    %v1802 = vld [vmem:[%s1789 + $0x60] sm:$0xff]
    %v1803 = vld [vmem:[%s1789 + $0x68] sm:$0xff]
    %v1804 = vld [vmem:[%s1789 + $0x70] sm:$0xff]
    %v1805 = vld [vmem:[%s1789 + $0x78] sm:$0xff]
    %v1806 = vld [vmem:[%s1789 + $0x80] sm:$0xff]
    %v1807 = vld [vmem:[%s1789 + $0x88] sm:$0xff]
    %v1808 = vld [vmem:[%s1789 + $0x90] sm:$0xff]
    %v1809 = vld [vmem:[%s1789 + $0x98] sm:$0xff]
    %v1810 = vld [vmem:[%s1789 + $0xa0] sm:$0xff]
    %v1811 = vld [vmem:[%s1789 + $0xa8] sm:$0xff]
    %v1812 = vld [vmem:[%s1789 + $0xb0] sm:$0xff]
    %v1813 = vld [vmem:[%s1789 + $0xb8] sm:$0xff]
    %v1814 = vld [vmem:[%s1789 + $0xc0] sm:$0xff]
    %v1815 = vld [vmem:[%s1789 + $0xc8] sm:$0xff]
    %v1816 = vld [vmem:[%s1789 + $0xd0] sm:$0xff]
    %v1817 = vld [vmem:[%s1789 + $0xd8] sm:$0xff]
    %v1818 = vld [vmem:[%s1789 + $0xe0] sm:$0xff]
    %v1819 = vld [vmem:[%s1789 + $0xe8] sm:$0xff]
    %v1820 = vld [vmem:[%s1789 + $0xf0] sm:$0xff]
    %v1821 = vld [vmem:[%s1789 + $0xf8] sm:$0xff]
    %v1822 = vld [vmem:[%s1789 + $0x100] sm:$0xff]
    %v1823 = vld [vmem:[%s1789 + $0x108] sm:$0xff]
    %v1824 = vld [vmem:[%s1789 + $0x110] sm:$0xff]
    %v1825 = vld [vmem:[%s1789 + $0x118] sm:$0xff]
    %v1826 = vld [vmem:[%s1789 + $0x120] sm:$0xff]
    %v1827 = vld [vmem:[%s1789 + $0x128] sm:$0xff]
    %v1828 = vld [vmem:[%s1789 + $0x130] sm:$0xff]
    %v1829 = vld [vmem:[%s1789 + $0x138] sm:$0xff]
    %v1830 = vld [vmem:[%s1789 + $0x140] sm:$0xff]
    %v1831 = vld [vmem:[%s1789 + $0x148] sm:$0xff]
    %v1832 = vld [vmem:[%s1789 + $0x150] sm:$0xff]
    %v1833 = vld [vmem:[%s1789 + $0x158] sm:$0xff]
    %v1834 = vld [vmem:[%s1789 + $0x160] sm:$0xff]
    %v1835 = vld [vmem:[%s1789 + $0x168] sm:$0xff]
    %v1836 = vld [vmem:[%s1789 + $0x170] sm:$0xff]
    %v1837 = vld [vmem:[%s1789 + $0x178] sm:$0xff]
    %v1838 = vld [vmem:[%s1789 + $0x180] sm:$0xff]
    %v1839 = vld [vmem:[%s1789 + $0x188] sm:$0xff]
    %v1840 = vld [vmem:[%s1789 + $0x190] sm:$0xff]
    %v1841 = vld [vmem:[%s1789 + $0x198] sm:$0xff]
    %v1842 = vld [vmem:[%s1789 + $0x1a0] sm:$0xff]
    %v1843 = vld [vmem:[%s1789 + $0x1a8] sm:$0xff]
    %v1844 = vld [vmem:[%s1789 + $0x1b0] sm:$0xff]
    %v1845 = vld [vmem:[%s1789 + $0x1b8] sm:$0xff]
    %v1846 = vld [vmem:[%s1789 + $0x1c0] sm:$0xff]
    %v1847 = vld [vmem:[%s1789 + $0x1c8] sm:$0xff]
    %v1848 = vld [vmem:[%s1789 + $0x1d0] sm:$0xff]
    %v1849 = vld [vmem:[%s1789 + $0x1d8] sm:$0xff]
    %v1850 = vld [vmem:[%s1789 + $0x1e0] sm:$0xff]
    %v1851 = vld [vmem:[%s1789 + $0x1e8] sm:$0xff]
    %v1852 = vld [vmem:[%s1789 + $0x1f0] sm:$0xff]
    %v1853 = vld [vmem:[%s1789 + $0x1f8] sm:$0xff]
    %1854 = vmatpush.msra.mxu0 %v1820
    %1855 = vmatpush.msra.mxu0 %v1818
    %1856 = vmatpush.msra.mxu0 %v1816
    %1857 = vmatpush.msra.mxu0 %v1814
    %1858 = vmatpush.msra.mxu0 %v1812
    %1859 = vmatpush.msra.mxu0 %v1810
    %1860 = vmatpush.msra.mxu0 %v1808
    %1861 = vmatpush.msra.mxu0 %v1806
    %1862 = vmatpush.msra.mxu0 %v1804
    %1863 = vmatpush.msra.mxu0 %v1802
    %1864 = vmatpush.msra.mxu0 %v1800
    %1865 = vmatpush.msra.mxu0 %v1798
    %1866 = vmatpush.msra.mxu0 %v1796
    %1867 = vmatpush.msra.mxu0 %v1794
    %1868 = vmatpush.msra.mxu0 %v1792
    %1869 = vmatpush.msra.mxu0 %v1790
    %1870 = vmatmul.f32.gmra.mxu0 %v1763
    %v1871 = vpop.f32.mrf.mxu0
    %v1872 = vadd.f32 0.0, %v1871
    %1873 = vmatmul.f32.gmra.mxu0 %v1768
    %v1874 = vpop.f32.mrf.mxu0
    %v1875 = vadd.f32 0.0, %v1874
    %1876 = vmatmul.f32.gmra.mxu0 %v1773
    %v1877 = vpop.f32.mrf.mxu0
    %v1878 = vadd.f32 0.0, %v1877
    %1879 = vmatmul.f32.gmra.mxu0 %v1778
    %v1880 = vpop.f32.mrf.mxu0
    %v1881 = vadd.f32 0.0, %v1880
    %1882 = vdwg.mxu0
    %1883 = vmatpush.msra.mxu0 %v1852
    %1884 = vmatpush.msra.mxu0 %v1850
    %1885 = vmatpush.msra.mxu0 %v1848
    %1886 = vmatpush.msra.mxu0 %v1846
    %1887 = vmatpush.msra.mxu0 %v1844
    %1888 = vmatpush.msra.mxu0 %v1842
    %1889 = vmatpush.msra.mxu0 %v1840
    %1890 = vmatpush.msra.mxu0 %v1838
    %1891 = vmatpush.msra.mxu0 %v1836
    %1892 = vmatpush.msra.mxu0 %v1834
    %1893 = vmatpush.msra.mxu0 %v1832
    %1894 = vmatpush.msra.mxu0 %v1830
    %1895 = vmatpush.msra.mxu0 %v1828
    %1896 = vmatpush.msra.mxu0 %v1826
    %1897 = vmatpush.msra.mxu0 %v1824
    %1898 = vmatpush.msra.mxu0 %v1822
    %1899 = vmatmul.f32.gmra.mxu0 %v1766
    %v1900 = vpop.f32.mrf.mxu0
    %v1901 = vadd.f32 %v1872, %v1900
    %1902 = vmatmul.f32.gmra.mxu0 %v1770
    %v1903 = vpop.f32.mrf.mxu0
    %v1904 = vadd.f32 %v1875, %v1903
    %1905 = vmatmul.f32.gmra.mxu0 %v1776
    %v1906 = vpop.f32.mrf.mxu0
    %v1907 = vadd.f32 %v1878, %v1906
    %1908 = vmatmul.f32.gmra.mxu0 %v1780
    %v1909 = vpop.f32.mrf.mxu0
    %v1910 = vadd.f32 %v1881, %v1909
    %1911 = vdwg.mxu0
    %1912 = vmatpush.msra.mxu0 %v1821
    %1913 = vmatpush.msra.mxu0 %v1819
    %1914 = vmatpush.msra.mxu0 %v1817
    %1915 = vmatpush.msra.mxu0 %v1815
    %1916 = vmatpush.msra.mxu0 %v1813
    %1917 = vmatpush.msra.mxu0 %v1811
    %1918 = vmatpush.msra.mxu0 %v1809
    %1919 = vmatpush.msra.mxu0 %v1807
    %1920 = vmatpush.msra.mxu0 %v1805
    %1921 = vmatpush.msra.mxu0 %v1803
    %1922 = vmatpush.msra.mxu0 %v1801
    %1923 = vmatpush.msra.mxu0 %v1799
    %1924 = vmatpush.msra.mxu0 %v1797
    %1925 = vmatpush.msra.mxu0 %v1795
    %1926 = vmatpush.msra.mxu0 %v1793
    %1927 = vmatpush.msra.mxu0 %v1791
    %1928 = vmatmul.f32.gmra.mxu0 %v1763
    %v1929 = vpop.f32.mrf.mxu0
    %v1930 = vadd.f32 0.0, %v1929
    %1931 = vmatmul.f32.gmra.mxu0 %v1768
    %v1932 = vpop.f32.mrf.mxu0
    %v1933 = vadd.f32 0.0, %v1932
    %1934 = vmatmul.f32.gmra.mxu0 %v1773
    %v1935 = vpop.f32.mrf.mxu0
    %v1936 = vadd.f32 0.0, %v1935
    %1937 = vmatmul.f32.gmra.mxu0 %v1778
    %v1938 = vpop.f32.mrf.mxu0
    %v1939 = vadd.f32 0.0, %v1938
    %1940 = vdwg.mxu0
    %1941 = vmatpush.msra.mxu0 %v1853
    %1942 = vmatpush.msra.mxu0 %v1851
    %1943 = vmatpush.msra.mxu0 %v1849
    %1944 = vmatpush.msra.mxu0 %v1847
    %1945 = vmatpush.msra.mxu0 %v1845
    %1946 = vmatpush.msra.mxu0 %v1843
    %1947 = vmatpush.msra.mxu0 %v1841
    %1948 = vmatpush.msra.mxu0 %v1839
    %1949 = vmatpush.msra.mxu0 %v1837
    %1950 = vmatpush.msra.mxu0 %v1835
    %1951 = vmatpush.msra.mxu0 %v1833
    %1952 = vmatpush.msra.mxu0 %v1831
    %1953 = vmatpush.msra.mxu0 %v1829
    %1954 = vmatpush.msra.mxu0 %v1827
    %1955 = vmatpush.msra.mxu0 %v1825
    %1956 = vmatpush.msra.mxu0 %v1823
    %1957 = vmatmul.f32.gmra.mxu0 %v1766
    %v1958 = vpop.f32.mrf.mxu0
    %v1959 = vadd.f32 %v1930, %v1958
    %1960 = vmatmul.f32.gmra.mxu0 %v1770
    %v1961 = vpop.f32.mrf.mxu0
    %v1962 = vadd.f32 %v1933, %v1961
    %1963 = vmatmul.f32.gmra.mxu0 %v1776
    %v1964 = vpop.f32.mrf.mxu0
    %v1965 = vadd.f32 %v1936, %v1964
    %1966 = vmatmul.f32.gmra.mxu0 %v1780
    %v1967 = vpop.f32.mrf.mxu0
    %v1968 = vadd.f32 %v1939, %v1967
    %1969 = vdwg.mxu0
    %v1970 = vadd.f32 %v1675, %v1901
    %v1971 = vadd.f32 %v1733, %v1959
    %v1972 = vadd.f32 %v1678, %v1904
    %v1973 = vadd.f32 %v1736, %v1962
    %v1974 = vadd.f32 %v1681, %v1907
    %v1975 = vadd.f32 %v1739, %v1965
    %v1976 = vadd.f32 %v1684, %v1910
    %v1977 = vadd.f32 %v1742, %v1968
    %v1978 = vld [vmem:[%s6] sm:$0x3]
    %v1980 = vperm.slane %v1978, 0
    %v1981 = vperm.slane %v1978, 1
    %v1984 = vadd.f32 %v1970, %v1980
    %v1985 = vadd.f32 %v1971, %v1981
    %v1986 = vadd.f32 %v1972, %v1980
    %v1987 = vadd.f32 %v1973, %v1981
    %v1988 = vadd.f32 %v1974, %v1980
    %v1989 = vadd.f32 %v1975, %v1981
    %v1990 = vadd.f32 %v1976, %v1980
    %v1991 = vadd.f32 %v1977, %v1981
    %v1992 = vmax.f32 %v1984, 0.0
    %v1993 = vmax.f32 %v1985, 0.0
    %v1994 = vmax.f32 %v1986, 0.0
    %v1995 = vmax.f32 %v1987, 0.0
    %v1996 = vmax.f32 %v1988, 0.0
    %v1997 = vmax.f32 %v1989, 0.0
    %v1998 = vmax.f32 %v1990, 0.0
    %v1999 = vmax.f32 %v1991, 0.0
    %v2000 = vld [vmem:[#allocation8] sm:$0xff]
    %v2001 = vld [vmem:[#allocation8 + $0x8] sm:$0xff]
    %v2002 = vld [vmem:[#allocation8 + $0x10] sm:$0xff]
    %v2003 = vld [vmem:[#allocation8 + $0x18] sm:$0xff]
    %v2004 = vld [vmem:[#allocation8 + $0x20] sm:$0xff]
    %v2005 = vld [vmem:[#allocation8 + $0x28] sm:$0xff]
    %v2006 = vld [vmem:[#allocation8 + $0x30] sm:$0xff]
    %v2007 = vld [vmem:[#allocation8 + $0x38] sm:$0xff]
    %v2008 = vld [vmem:[#allocation8 + $0x40] sm:$0xff]
    %v2009 = vld [vmem:[#allocation8 + $0x48] sm:$0xff]
    %v2010 = vld [vmem:[#allocation8 + $0x50] sm:$0xff]
    %v2011 = vld [vmem:[#allocation8 + $0x58] sm:$0xff]
    %v2012 = vld [vmem:[#allocation8 + $0x60] sm:$0xff]
    %v2013 = vld [vmem:[#allocation8 + $0x68] sm:$0xff]
    %v2014 = vld [vmem:[#allocation8 + $0x70] sm:$0xff]
    %v2015 = vld [vmem:[#allocation8 + $0x78] sm:$0xff]
    %v2016 = vld [vmem:[#allocation8 + $0x80] sm:$0xff]
    %v2017 = vld [vmem:[#allocation8 + $0x88] sm:$0xff]
    %v2018 = vld [vmem:[#allocation8 + $0x90] sm:$0xff]
    %v2019 = vld [vmem:[#allocation8 + $0x98] sm:$0xff]
    %v2020 = vld [vmem:[#allocation8 + $0xa0] sm:$0xff]
    %v2021 = vld [vmem:[#allocation8 + $0xa8] sm:$0xff]
    %v2022 = vld [vmem:[#allocation8 + $0xb0] sm:$0xff]
    %v2023 = vld [vmem:[#allocation8 + $0xb8] sm:$0xff]
    %v2024 = vld [vmem:[#allocation8 + $0xc0] sm:$0xff]
    %v2025 = vld [vmem:[#allocation8 + $0xc8] sm:$0xff]
    %v2026 = vld [vmem:[#allocation8 + $0xd0] sm:$0xff]
    %v2027 = vld [vmem:[#allocation8 + $0xd8] sm:$0xff]
    %v2028 = vld [vmem:[#allocation8 + $0xe0] sm:$0xff]
    %v2029 = vld [vmem:[#allocation8 + $0xe8] sm:$0xff]
    %v2030 = vld [vmem:[#allocation8 + $0xf0] sm:$0xff]
    %v2031 = vld [vmem:[#allocation8 + $0xf8] sm:$0xff]
    %v2032 = vld [vmem:[#allocation8 + $0x100] sm:$0xff]
    %v2033 = vld [vmem:[#allocation8 + $0x108] sm:$0xff]
    %v2034 = vld [vmem:[#allocation8 + $0x110] sm:$0xff]
    %v2035 = vld [vmem:[#allocation8 + $0x118] sm:$0xff]
    %v2036 = vld [vmem:[#allocation8 + $0x120] sm:$0xff]
    %v2037 = vld [vmem:[#allocation8 + $0x128] sm:$0xff]
    %v2038 = vld [vmem:[#allocation8 + $0x130] sm:$0xff]
    %v2039 = vld [vmem:[#allocation8 + $0x138] sm:$0xff]
    %v2040 = vld [vmem:[#allocation8 + $0x140] sm:$0xff]
    %v2041 = vld [vmem:[#allocation8 + $0x148] sm:$0xff]
    %v2042 = vld [vmem:[#allocation8 + $0x150] sm:$0xff]
    %v2043 = vld [vmem:[#allocation8 + $0x158] sm:$0xff]
    %v2044 = vld [vmem:[#allocation8 + $0x160] sm:$0xff]
    %v2045 = vld [vmem:[#allocation8 + $0x168] sm:$0xff]
    %v2046 = vld [vmem:[#allocation8 + $0x170] sm:$0xff]
    %v2047 = vld [vmem:[#allocation8 + $0x178] sm:$0xff]
    %v2048 = vld [vmem:[#allocation8 + $0x180] sm:$0xff]
    %v2049 = vld [vmem:[#allocation8 + $0x188] sm:$0xff]
    %v2050 = vld [vmem:[#allocation8 + $0x190] sm:$0xff]
    %v2051 = vld [vmem:[#allocation8 + $0x198] sm:$0xff]
    %v2052 = vld [vmem:[#allocation8 + $0x1a0] sm:$0xff]
    %v2053 = vld [vmem:[#allocation8 + $0x1a8] sm:$0xff]
    %v2054 = vld [vmem:[#allocation8 + $0x1b0] sm:$0xff]
    %v2055 = vld [vmem:[#allocation8 + $0x1b8] sm:$0xff]
    %v2056 = vld [vmem:[#allocation8 + $0x1c0] sm:$0xff]
    %v2057 = vld [vmem:[#allocation8 + $0x1c8] sm:$0xff]
    %v2058 = vld [vmem:[#allocation8 + $0x1d0] sm:$0xff]
    %v2059 = vld [vmem:[#allocation8 + $0x1d8] sm:$0xff]
    %v2060 = vld [vmem:[#allocation8 + $0x1e0] sm:$0xff]
    %v2061 = vld [vmem:[#allocation8 + $0x1e8] sm:$0xff]
    %v2062 = vld [vmem:[#allocation8 + $0x1f0] sm:$0xff]
    %v2063 = vld [vmem:[#allocation8 + $0x1f8] sm:$0xff]
    %v2064 = vld [vmem:[#allocation8 + $0x200] sm:$0xff]
    %v2065 = vld [vmem:[#allocation8 + $0x208] sm:$0xff]
    %v2066 = vld [vmem:[#allocation8 + $0x210] sm:$0xff]
    %v2067 = vld [vmem:[#allocation8 + $0x218] sm:$0xff]
    %v2068 = vld [vmem:[#allocation8 + $0x220] sm:$0xff]
    %v2069 = vld [vmem:[#allocation8 + $0x228] sm:$0xff]
    %v2070 = vld [vmem:[#allocation8 + $0x230] sm:$0xff]
    %v2071 = vld [vmem:[#allocation8 + $0x238] sm:$0xff]
    %v2072 = vld [vmem:[#allocation8 + $0x240] sm:$0xff]
    %v2073 = vld [vmem:[#allocation8 + $0x248] sm:$0xff]
    %v2074 = vld [vmem:[#allocation8 + $0x250] sm:$0xff]
    %v2075 = vld [vmem:[#allocation8 + $0x258] sm:$0xff]
    %v2076 = vld [vmem:[#allocation8 + $0x260] sm:$0xff]
    %v2077 = vld [vmem:[#allocation8 + $0x268] sm:$0xff]
    %v2078 = vld [vmem:[#allocation8 + $0x270] sm:$0xff]
    %v2079 = vld [vmem:[#allocation8 + $0x278] sm:$0xff]
    %v2080 = vld [vmem:[#allocation8 + $0x280] sm:$0xff]
    %v2081 = vld [vmem:[#allocation8 + $0x288] sm:$0xff]
    %v2082 = vld [vmem:[#allocation8 + $0x290] sm:$0xff]
    %v2083 = vld [vmem:[#allocation8 + $0x298] sm:$0xff]
    %v2084 = vld [vmem:[#allocation8 + $0x2a0] sm:$0xff]
    %v2085 = vld [vmem:[#allocation8 + $0x2a8] sm:$0xff]
    %v2086 = vld [vmem:[#allocation8 + $0x2b0] sm:$0xff]
    %v2087 = vld [vmem:[#allocation8 + $0x2b8] sm:$0xff]
    %v2088 = vld [vmem:[#allocation8 + $0x2c0] sm:$0xff]
    %v2089 = vld [vmem:[#allocation8 + $0x2c8] sm:$0xff]
    %v2090 = vld [vmem:[#allocation8 + $0x2d0] sm:$0xff]
    %v2091 = vld [vmem:[#allocation8 + $0x2d8] sm:$0xff]
    %v2092 = vld [vmem:[#allocation8 + $0x2e0] sm:$0xff]
    %v2093 = vld [vmem:[#allocation8 + $0x2e8] sm:$0xff]
    %v2094 = vld [vmem:[#allocation8 + $0x2f0] sm:$0xff]
    %v2095 = vld [vmem:[#allocation8 + $0x2f8] sm:$0xff]
    %v2096 = vld [vmem:[#allocation8 + $0x300] sm:$0xff]
    %v2097 = vld [vmem:[#allocation8 + $0x308] sm:$0xff]
    %v2098 = vld [vmem:[#allocation8 + $0x310] sm:$0xff]
    %v2099 = vld [vmem:[#allocation8 + $0x318] sm:$0xff]
    %v2100 = vld [vmem:[#allocation8 + $0x320] sm:$0xff]
    %v2101 = vld [vmem:[#allocation8 + $0x328] sm:$0xff]
    %v2102 = vld [vmem:[#allocation8 + $0x330] sm:$0xff]
    %v2103 = vld [vmem:[#allocation8 + $0x338] sm:$0xff]
    %v2104 = vld [vmem:[#allocation8 + $0x340] sm:$0xff]
    %v2105 = vld [vmem:[#allocation8 + $0x348] sm:$0xff]
    %v2106 = vld [vmem:[#allocation8 + $0x350] sm:$0xff]
    %v2107 = vld [vmem:[#allocation8 + $0x358] sm:$0xff]
    %v2108 = vld [vmem:[#allocation8 + $0x360] sm:$0xff]
    %v2109 = vld [vmem:[#allocation8 + $0x368] sm:$0xff]
    %v2110 = vld [vmem:[#allocation8 + $0x370] sm:$0xff]
    %v2111 = vld [vmem:[#allocation8 + $0x378] sm:$0xff]
    %v2112 = vld [vmem:[#allocation8 + $0x380] sm:$0xff]
    %v2113 = vld [vmem:[#allocation8 + $0x388] sm:$0xff]
    %v2114 = vld [vmem:[#allocation8 + $0x390] sm:$0xff]
    %v2115 = vld [vmem:[#allocation8 + $0x398] sm:$0xff]
    %v2116 = vld [vmem:[#allocation8 + $0x3a0] sm:$0xff]
    %v2117 = vld [vmem:[#allocation8 + $0x3a8] sm:$0xff]
    %v2118 = vld [vmem:[#allocation8 + $0x3b0] sm:$0xff]
    %v2119 = vld [vmem:[#allocation8 + $0x3b8] sm:$0xff]
    %v2120 = vld [vmem:[#allocation8 + $0x3c0] sm:$0xff]
    %v2121 = vld [vmem:[#allocation8 + $0x3c8] sm:$0xff]
    %v2122 = vld [vmem:[#allocation8 + $0x3d0] sm:$0xff]
    %v2123 = vld [vmem:[#allocation8 + $0x3d8] sm:$0xff]
    %v2124 = vld [vmem:[#allocation8 + $0x3e0] sm:$0xff]
    %v2125 = vld [vmem:[#allocation8 + $0x3e8] sm:$0xff]
    %v2126 = vld [vmem:[#allocation8 + $0x3f0] sm:$0xff]
    %v2127 = vld [vmem:[#allocation8 + $0x3f8] sm:$0xff]
    %v2128 = vld [vmem:[%s8] sm:$0xf]
    %v2130 = vperm.slane %v2128, 0
    %v2131 = vperm.slane %v2128, 1
    %v2132 = vperm.slane %v2128, 2
    %v2133 = vperm.slane %v2128, 3
    %2138 = vmatpush.msra.mxu0 %v2060
    %2139 = vmatpush.msra.mxu0 %v2056
    %2140 = vmatpush.msra.mxu0 %v2052
    %2141 = vmatpush.msra.mxu0 %v2048
    %2142 = vmatpush.msra.mxu0 %v2044
    %2143 = vmatpush.msra.mxu0 %v2040
    %2144 = vmatpush.msra.mxu0 %v2036
    %2145 = vmatpush.msra.mxu0 %v2032
    %2146 = vmatpush.msra.mxu0 %v2028
    %2147 = vmatpush.msra.mxu0 %v2024
    %2148 = vmatpush.msra.mxu0 %v2020
    %2149 = vmatpush.msra.mxu0 %v2016
    %2150 = vmatpush.msra.mxu0 %v2012
    %2151 = vmatpush.msra.mxu0 %v2008
    %2152 = vmatpush.msra.mxu0 %v2004
    %2153 = vmatpush.msra.mxu0 %v2000
    %2154 = vmatmul.f32.gmra.mxu0 %v1992
    %v2155 = vpop.f32.mrf.mxu0
    %v2156 = vadd.f32 %v2130, %v2155
    %2157 = vmatmul.f32.gmra.mxu0 %v1994
    %v2158 = vpop.f32.mrf.mxu0
    %v2159 = vadd.f32 %v2130, %v2158
    %2160 = vmatmul.f32.gmra.mxu0 %v1996
    %v2161 = vpop.f32.mrf.mxu0
    %v2162 = vadd.f32 %v2130, %v2161
    %2163 = vmatmul.f32.gmra.mxu0 %v1998
    %v2164 = vpop.f32.mrf.mxu0
    %v2165 = vadd.f32 %v2130, %v2164
    %2166 = vdwg.mxu0
    %2167 = vmatpush.msra.mxu0 %v2124
    %2168 = vmatpush.msra.mxu0 %v2120
    %2169 = vmatpush.msra.mxu0 %v2116
    %2170 = vmatpush.msra.mxu0 %v2112
    %2171 = vmatpush.msra.mxu0 %v2108
    %2172 = vmatpush.msra.mxu0 %v2104
    %2173 = vmatpush.msra.mxu0 %v2100
    %2174 = vmatpush.msra.mxu0 %v2096
    %2175 = vmatpush.msra.mxu0 %v2092
    %2176 = vmatpush.msra.mxu0 %v2088
    %2177 = vmatpush.msra.mxu0 %v2084
    %2178 = vmatpush.msra.mxu0 %v2080
    %2179 = vmatpush.msra.mxu0 %v2076
    %2180 = vmatpush.msra.mxu0 %v2072
    %2181 = vmatpush.msra.mxu0 %v2068
    %2182 = vmatpush.msra.mxu0 %v2064
    %2183 = vmatmul.f32.gmra.mxu0 %v1993
    %v2184 = vpop.f32.mrf.mxu0
    %v2185 = vadd.f32 %v2156, %v2184
    %2186 = vmatmul.f32.gmra.mxu0 %v1995
    %v2187 = vpop.f32.mrf.mxu0
    %v2188 = vadd.f32 %v2159, %v2187
    %2189 = vmatmul.f32.gmra.mxu0 %v1997
    %v2190 = vpop.f32.mrf.mxu0
    %v2191 = vadd.f32 %v2162, %v2190
    %2192 = vmatmul.f32.gmra.mxu0 %v1999
    %v2193 = vpop.f32.mrf.mxu0
    %v2194 = vadd.f32 %v2165, %v2193
    %2195 = vdwg.mxu0
    %2196 = vmatpush.msra.mxu0 %v2061
    %2197 = vmatpush.msra.mxu0 %v2057
    %2198 = vmatpush.msra.mxu0 %v2053
    %2199 = vmatpush.msra.mxu0 %v2049
    %2200 = vmatpush.msra.mxu0 %v2045
    %2201 = vmatpush.msra.mxu0 %v2041
    %2202 = vmatpush.msra.mxu0 %v2037
    %2203 = vmatpush.msra.mxu0 %v2033
    %2204 = vmatpush.msra.mxu0 %v2029
    %2205 = vmatpush.msra.mxu0 %v2025
    %2206 = vmatpush.msra.mxu0 %v2021
    %2207 = vmatpush.msra.mxu0 %v2017
    %2208 = vmatpush.msra.mxu0 %v2013
    %2209 = vmatpush.msra.mxu0 %v2009
    %2210 = vmatpush.msra.mxu0 %v2005
    %2211 = vmatpush.msra.mxu0 %v2001
    %2212 = vmatmul.f32.gmra.mxu0 %v1992
    %v2213 = vpop.f32.mrf.mxu0
    %v2214 = vadd.f32 %v2131, %v2213
    %2215 = vmatmul.f32.gmra.mxu0 %v1994
    %v2216 = vpop.f32.mrf.mxu0
    %v2217 = vadd.f32 %v2131, %v2216
    %2218 = vmatmul.f32.gmra.mxu0 %v1996
    %v2219 = vpop.f32.mrf.mxu0
    %v2220 = vadd.f32 %v2131, %v2219
    %2221 = vmatmul.f32.gmra.mxu0 %v1998
    %v2222 = vpop.f32.mrf.mxu0
    %v2223 = vadd.f32 %v2131, %v2222
    %2224 = vdwg.mxu0
    %2225 = vmatpush.msra.mxu0 %v2125
    %2226 = vmatpush.msra.mxu0 %v2121
    %2227 = vmatpush.msra.mxu0 %v2117
    %2228 = vmatpush.msra.mxu0 %v2113
    %2229 = vmatpush.msra.mxu0 %v2109
    %2230 = vmatpush.msra.mxu0 %v2105
    %2231 = vmatpush.msra.mxu0 %v2101
    %2232 = vmatpush.msra.mxu0 %v2097
    %2233 = vmatpush.msra.mxu0 %v2093
    %2234 = vmatpush.msra.mxu0 %v2089
    %2235 = vmatpush.msra.mxu0 %v2085
    %2236 = vmatpush.msra.mxu0 %v2081
    %2237 = vmatpush.msra.mxu0 %v2077
    %2238 = vmatpush.msra.mxu0 %v2073
    %2239 = vmatpush.msra.mxu0 %v2069
    %2240 = vmatpush.msra.mxu0 %v2065
    %2241 = vmatmul.f32.gmra.mxu0 %v1993
    %v2242 = vpop.f32.mrf.mxu0
    %v2243 = vadd.f32 %v2214, %v2242
    %2244 = vmatmul.f32.gmra.mxu0 %v1995
    %v2245 = vpop.f32.mrf.mxu0
    %v2246 = vadd.f32 %v2217, %v2245
    %2247 = vmatmul.f32.gmra.mxu0 %v1997
    %v2248 = vpop.f32.mrf.mxu0
    %v2249 = vadd.f32 %v2220, %v2248
    %2250 = vmatmul.f32.gmra.mxu0 %v1999
    %v2251 = vpop.f32.mrf.mxu0
    %v2252 = vadd.f32 %v2223, %v2251
    %2253 = vdwg.mxu0
    %2254 = vmatpush.msra.mxu0 %v2062
    %2255 = vmatpush.msra.mxu0 %v2058
    %2256 = vmatpush.msra.mxu0 %v2054
    %2257 = vmatpush.msra.mxu0 %v2050
    %2258 = vmatpush.msra.mxu0 %v2046
    %2259 = vmatpush.msra.mxu0 %v2042
    %2260 = vmatpush.msra.mxu0 %v2038
    %2261 = vmatpush.msra.mxu0 %v2034
    %2262 = vmatpush.msra.mxu0 %v2030
    %2263 = vmatpush.msra.mxu0 %v2026
    %2264 = vmatpush.msra.mxu0 %v2022
    %2265 = vmatpush.msra.mxu0 %v2018
    %2266 = vmatpush.msra.mxu0 %v2014
    %2267 = vmatpush.msra.mxu0 %v2010
    %2268 = vmatpush.msra.mxu0 %v2006
    %2269 = vmatpush.msra.mxu0 %v2002
    %2270 = vmatmul.f32.gmra.mxu0 %v1992
    %v2271 = vpop.f32.mrf.mxu0
    %v2272 = vadd.f32 %v2132, %v2271
    %2273 = vmatmul.f32.gmra.mxu0 %v1994
    %v2274 = vpop.f32.mrf.mxu0
    %v2275 = vadd.f32 %v2132, %v2274
    %2276 = vmatmul.f32.gmra.mxu0 %v1996
    %v2277 = vpop.f32.mrf.mxu0
    %v2278 = vadd.f32 %v2132, %v2277
    %2279 = vmatmul.f32.gmra.mxu0 %v1998
    %v2280 = vpop.f32.mrf.mxu0
    %v2281 = vadd.f32 %v2132, %v2280
    %2282 = vdwg.mxu0
    %2283 = vmatpush.msra.mxu0 %v2126
    %2284 = vmatpush.msra.mxu0 %v2122
    %2285 = vmatpush.msra.mxu0 %v2118
    %2286 = vmatpush.msra.mxu0 %v2114
    %2287 = vmatpush.msra.mxu0 %v2110
    %2288 = vmatpush.msra.mxu0 %v2106
    %2289 = vmatpush.msra.mxu0 %v2102
    %2290 = vmatpush.msra.mxu0 %v2098
    %2291 = vmatpush.msra.mxu0 %v2094
    %2292 = vmatpush.msra.mxu0 %v2090
    %2293 = vmatpush.msra.mxu0 %v2086
    %2294 = vmatpush.msra.mxu0 %v2082
    %2295 = vmatpush.msra.mxu0 %v2078
    %2296 = vmatpush.msra.mxu0 %v2074
    %2297 = vmatpush.msra.mxu0 %v2070
    %2298 = vmatpush.msra.mxu0 %v2066
    %2299 = vmatmul.f32.gmra.mxu0 %v1993
    %v2300 = vpop.f32.mrf.mxu0
    %v2301 = vadd.f32 %v2272, %v2300
    %2302 = vmatmul.f32.gmra.mxu0 %v1995
    %v2303 = vpop.f32.mrf.mxu0
    %v2304 = vadd.f32 %v2275, %v2303
    %2305 = vmatmul.f32.gmra.mxu0 %v1997
    %v2306 = vpop.f32.mrf.mxu0
    %v2307 = vadd.f32 %v2278, %v2306
    %2308 = vmatmul.f32.gmra.mxu0 %v1999
    %v2309 = vpop.f32.mrf.mxu0
    %v2310 = vadd.f32 %v2281, %v2309
    %2311 = vdwg.mxu0
    %2312 = vmatpush.msra.mxu0 %v2063
    %2313 = vmatpush.msra.mxu0 %v2059
    %2314 = vmatpush.msra.mxu0 %v2055
    %2315 = vmatpush.msra.mxu0 %v2051
    %2316 = vmatpush.msra.mxu0 %v2047
    %2317 = vmatpush.msra.mxu0 %v2043
    %2318 = vmatpush.msra.mxu0 %v2039
    %2319 = vmatpush.msra.mxu0 %v2035
    %2320 = vmatpush.msra.mxu0 %v2031
    %2321 = vmatpush.msra.mxu0 %v2027
    %2322 = vmatpush.msra.mxu0 %v2023
    %2323 = vmatpush.msra.mxu0 %v2019
    %2324 = vmatpush.msra.mxu0 %v2015
    %2325 = vmatpush.msra.mxu0 %v2011
    %2326 = vmatpush.msra.mxu0 %v2007
    %2327 = vmatpush.msra.mxu0 %v2003
    %2328 = vmatmul.f32.gmra.mxu0 %v1992
    %v2329 = vpop.f32.mrf.mxu0
    %v2330 = vadd.f32 %v2133, %v2329
    %2331 = vmatmul.f32.gmra.mxu0 %v1994
    %v2332 = vpop.f32.mrf.mxu0
    %v2333 = vadd.f32 %v2133, %v2332
    %2334 = vmatmul.f32.gmra.mxu0 %v1996
    %v2335 = vpop.f32.mrf.mxu0
    %v2336 = vadd.f32 %v2133, %v2335
    %2337 = vmatmul.f32.gmra.mxu0 %v1998
    %v2338 = vpop.f32.mrf.mxu0
    %v2339 = vadd.f32 %v2133, %v2338
    %2340 = vdwg.mxu0
    %2341 = vmatpush.msra.mxu0 %v2127
    %2342 = vmatpush.msra.mxu0 %v2123
    %2343 = vmatpush.msra.mxu0 %v2119
    %2344 = vmatpush.msra.mxu0 %v2115
    %2345 = vmatpush.msra.mxu0 %v2111
    %2346 = vmatpush.msra.mxu0 %v2107
    %2347 = vmatpush.msra.mxu0 %v2103
    %2348 = vmatpush.msra.mxu0 %v2099
    %2349 = vmatpush.msra.mxu0 %v2095
    %2350 = vmatpush.msra.mxu0 %v2091
    %2351 = vmatpush.msra.mxu0 %v2087
    %2352 = vmatpush.msra.mxu0 %v2083
    %2353 = vmatpush.msra.mxu0 %v2079
    %2354 = vmatpush.msra.mxu0 %v2075
    %2355 = vmatpush.msra.mxu0 %v2071
    %2356 = vmatpush.msra.mxu0 %v2067
    %2357 = vmatmul.f32.gmra.mxu0 %v1993
    %v2358 = vpop.f32.mrf.mxu0
    %v2359 = vadd.f32 %v2330, %v2358
    %2360 = vmatmul.f32.gmra.mxu0 %v1995
    %v2361 = vpop.f32.mrf.mxu0
    %v2362 = vadd.f32 %v2333, %v2361
    %2363 = vmatmul.f32.gmra.mxu0 %v1997
    %v2364 = vpop.f32.mrf.mxu0
    %v2365 = vadd.f32 %v2336, %v2364
    %2366 = vmatmul.f32.gmra.mxu0 %v1999
    %v2367 = vpop.f32.mrf.mxu0
    %v2368 = vadd.f32 %v2339, %v2367
    %2369 = vdwg.mxu0
    %v2370 = vmax.f32 %v2185, 0.0
    %v2371 = vmax.f32 %v2243, 0.0
    %v2372 = vmax.f32 %v2301, 0.0
    %v2373 = vmax.f32 %v2359, 0.0
    %v2374 = vmax.f32 %v2188, 0.0
    %v2375 = vmax.f32 %v2246, 0.0
    %v2376 = vmax.f32 %v2304, 0.0
    %v2377 = vmax.f32 %v2362, 0.0
    %v2378 = vmax.f32 %v2191, 0.0
    %v2379 = vmax.f32 %v2249, 0.0
    %v2380 = vmax.f32 %v2307, 0.0
    %v2381 = vmax.f32 %v2365, 0.0
    %v2382 = vmax.f32 %v2194, 0.0
    %v2383 = vmax.f32 %v2252, 0.0
    %v2384 = vmax.f32 %v2310, 0.0
    %v2385 = vmax.f32 %v2368, 0.0
    %v2402 = vrot.slane %v2370, 7
    %v2403 = vrot.slane %v2371, 7
    %v2404 = vrot.slane %v2372, 7
    %v2405 = vrot.slane %v2373, 7
    %v2406 = vrot.slane %v2374, 7
    %v2407 = vsel %vm1289, %v2402, %v2406
    %v2408 = vrot.slane %v2375, 7
    %v2409 = vsel %vm1289, %v2403, %v2408
    %v2410 = vrot.slane %v2376, 7
    %v2411 = vsel %vm1289, %v2404, %v2410
    %v2412 = vrot.slane %v2377, 7
    %v2413 = vsel %vm1289, %v2405, %v2412
    %v2414 = vrot.slane %v2378, 7
    %v2415 = vrot.slane %v2379, 7
    %v2416 = vrot.slane %v2380, 7
    %v2417 = vrot.slane %v2381, 7
    %v2418 = vrot.slane %v2382, 7
    %v2419 = vsel %vm1289, %v2414, %v2418
    %v2420 = vrot.slane %v2383, 7
    %v2421 = vsel %vm1289, %v2415, %v2420
    %v2422 = vrot.slane %v2384, 7
    %v2423 = vsel %vm1289, %v2416, %v2422
    %v2424 = vrot.slane %v2385, 7
    %v2425 = vsel %vm1289, %v2417, %v2424
    %2450 = vst [vmem:[#allocation4] sm:$0xfe] %v2402
    %2451 = vst [vmem:[#allocation4 + $0x8] sm:$0xfe] %v2403
    %2452 = vst [vmem:[#allocation4 + $0x10] sm:$0xfe] %v2404
    %2453 = vst [vmem:[#allocation4 + $0x18] sm:$0xfe] %v2405
    %2454 = vst [vmem:[#allocation4 + $0x20] sm:$0xff] %v2407
    %2455 = vst [vmem:[#allocation4 + $0x28] sm:$0xff] %v2409
    %2456 = vst [vmem:[#allocation4 + $0x30] sm:$0xff] %v2411
    %2457 = vst [vmem:[#allocation4 + $0x38] sm:$0xff] %v2413
    %2458 = vst [vmem:[#allocation4 + $0x40] sm:$0x1] %v2406
    %2459 = vst [vmem:[#allocation4 + $0x48] sm:$0x1] %v2408
    %2460 = vst [vmem:[#allocation4 + $0x50] sm:$0x1] %v2410
    %2461 = vst [vmem:[#allocation4 + $0x58] sm:$0x1] %v2412
    %2462 = vst [vmem:[#allocation4 + $0x60] sm:$0xfe] %v2414
    %2463 = vst [vmem:[#allocation4 + $0x68] sm:$0xfe] %v2415
    %2464 = vst [vmem:[#allocation4 + $0x70] sm:$0xfe] %v2416
    %2465 = vst [vmem:[#allocation4 + $0x78] sm:$0xfe] %v2417
    %2466 = vst [vmem:[#allocation4 + $0x80] sm:$0xff] %v2419
    %2467 = vst [vmem:[#allocation4 + $0x88] sm:$0xff] %v2421
    %2468 = vst [vmem:[#allocation4 + $0x90] sm:$0xff] %v2423
    %2469 = vst [vmem:[#allocation4 + $0x98] sm:$0xff] %v2425
    %2470 = vst [vmem:[#allocation4 + $0xa0] sm:$0x1] %v2418
    %2471 = vst [vmem:[#allocation4 + $0xa8] sm:$0x1] %v2420
    %2472 = vst [vmem:[#allocation4 + $0xb0] sm:$0x1] %v2422
    %2473 = vst [vmem:[#allocation4 + $0xb8] sm:$0x1] %v2424
    %v2474 = vld [vmem:[#allocation4] sm:$0xff]
    %v2475 = vld [vmem:[#allocation4 + $0x8] sm:$0xff]
    %v2476 = vld [vmem:[#allocation4 + $0x10] sm:$0xff]
    %v2477 = vld [vmem:[#allocation4 + $0x18] sm:$0xff]
    %v2478 = vld [vmem:[#allocation4 + $0x20] sm:$0xff]
    %v2479 = vld [vmem:[#allocation4 + $0x28] sm:$0xff]
    %v2480 = vld [vmem:[#allocation4 + $0x30] sm:$0xff]
    %v2481 = vld [vmem:[#allocation4 + $0x38] sm:$0xff]
    %v2482 = vld [vmem:[#allocation4 + $0x60] sm:$0xff]
    %v2483 = vld [vmem:[#allocation4 + $0x68] sm:$0xff]
    %v2484 = vld [vmem:[#allocation4 + $0x70] sm:$0xff]
    %v2485 = vld [vmem:[#allocation4 + $0x78] sm:$0xff]
    %v2486 = vld [vmem:[#allocation4 + $0x80] sm:$0xff]
    %v2487 = vld [vmem:[#allocation4 + $0x88] sm:$0xff]
    %v2488 = vld [vmem:[#allocation4 + $0x90] sm:$0xff]
    %v2489 = vld [vmem:[#allocation4 + $0x98] sm:$0xff]
    %v2490 = vld [vmem:[%s9] sm:$0xff]
    %v2491 = vld [vmem:[%s9 + $0x8] sm:$0xff]
    %v2492 = vld [vmem:[%s9 + $0x10] sm:$0xff]
    %v2493 = vld [vmem:[%s9 + $0x18] sm:$0xff]
    %v2494 = vld [vmem:[%s9 + $0x20] sm:$0xff]
    %v2495 = vld [vmem:[%s9 + $0x28] sm:$0xff]
    %v2496 = vld [vmem:[%s9 + $0x30] sm:$0xff]
    %v2497 = vld [vmem:[%s9 + $0x38] sm:$0xff]
    %v2498 = vld [vmem:[%s9 + $0x40] sm:$0xff]
    %v2499 = vld [vmem:[%s9 + $0x48] sm:$0xff]
    %v2500 = vld [vmem:[%s9 + $0x50] sm:$0xff]
    %v2501 = vld [vmem:[%s9 + $0x58] sm:$0xff]
    %v2502 = vld [vmem:[%s9 + $0x60] sm:$0xff]
    %v2503 = vld [vmem:[%s9 + $0x68] sm:$0xff]
    %v2504 = vld [vmem:[%s9 + $0x70] sm:$0xff]
    %v2505 = vld [vmem:[%s9 + $0x78] sm:$0xff]
    %v2506 = vld [vmem:[%s9 + $0x80] sm:$0xff]
    %v2507 = vld [vmem:[%s9 + $0x88] sm:$0xff]
    %v2508 = vld [vmem:[%s9 + $0x90] sm:$0xff]
    %v2509 = vld [vmem:[%s9 + $0x98] sm:$0xff]
    %v2510 = vld [vmem:[%s9 + $0xa0] sm:$0xff]
    %v2511 = vld [vmem:[%s9 + $0xa8] sm:$0xff]
    %v2512 = vld [vmem:[%s9 + $0xb0] sm:$0xff]
    %v2513 = vld [vmem:[%s9 + $0xb8] sm:$0xff]
    %v2514 = vld [vmem:[%s9 + $0xc0] sm:$0xff]
    %v2515 = vld [vmem:[%s9 + $0xc8] sm:$0xff]
    %v2516 = vld [vmem:[%s9 + $0xd0] sm:$0xff]
    %v2517 = vld [vmem:[%s9 + $0xd8] sm:$0xff]
    %v2518 = vld [vmem:[%s9 + $0xe0] sm:$0xff]
    %v2519 = vld [vmem:[%s9 + $0xe8] sm:$0xff]
    %v2520 = vld [vmem:[%s9 + $0xf0] sm:$0xff]
    %v2521 = vld [vmem:[%s9 + $0xf8] sm:$0xff]
    %v2522 = vld [vmem:[%s9 + $0x100] sm:$0xff]
    %v2523 = vld [vmem:[%s9 + $0x108] sm:$0xff]
    %v2524 = vld [vmem:[%s9 + $0x110] sm:$0xff]
    %v2525 = vld [vmem:[%s9 + $0x118] sm:$0xff]
    %v2526 = vld [vmem:[%s9 + $0x120] sm:$0xff]
    %v2527 = vld [vmem:[%s9 + $0x128] sm:$0xff]
    %v2528 = vld [vmem:[%s9 + $0x130] sm:$0xff]
    %v2529 = vld [vmem:[%s9 + $0x138] sm:$0xff]
    %v2530 = vld [vmem:[%s9 + $0x140] sm:$0xff]
    %v2531 = vld [vmem:[%s9 + $0x148] sm:$0xff]
    %v2532 = vld [vmem:[%s9 + $0x150] sm:$0xff]
    %v2533 = vld [vmem:[%s9 + $0x158] sm:$0xff]
    %v2534 = vld [vmem:[%s9 + $0x160] sm:$0xff]
    %v2535 = vld [vmem:[%s9 + $0x168] sm:$0xff]
    %v2536 = vld [vmem:[%s9 + $0x170] sm:$0xff]
    %v2537 = vld [vmem:[%s9 + $0x178] sm:$0xff]
    %v2538 = vld [vmem:[%s9 + $0x180] sm:$0xff]
    %v2539 = vld [vmem:[%s9 + $0x188] sm:$0xff]
    %v2540 = vld [vmem:[%s9 + $0x190] sm:$0xff]
    %v2541 = vld [vmem:[%s9 + $0x198] sm:$0xff]
    %v2542 = vld [vmem:[%s9 + $0x1a0] sm:$0xff]
    %v2543 = vld [vmem:[%s9 + $0x1a8] sm:$0xff]
    %v2544 = vld [vmem:[%s9 + $0x1b0] sm:$0xff]
    %v2545 = vld [vmem:[%s9 + $0x1b8] sm:$0xff]
    %v2546 = vld [vmem:[%s9 + $0x1c0] sm:$0xff]
    %v2547 = vld [vmem:[%s9 + $0x1c8] sm:$0xff]
    %v2548 = vld [vmem:[%s9 + $0x1d0] sm:$0xff]
    %v2549 = vld [vmem:[%s9 + $0x1d8] sm:$0xff]
    %v2550 = vld [vmem:[%s9 + $0x1e0] sm:$0xff]
    %v2551 = vld [vmem:[%s9 + $0x1e8] sm:$0xff]
    %v2552 = vld [vmem:[%s9 + $0x1f0] sm:$0xff]
    %v2553 = vld [vmem:[%s9 + $0x1f8] sm:$0xff]
    %v2554 = vld [vmem:[#allocation4] sm:$0xfe]
    %v2555 = vld [vmem:[#allocation4 + $0x8] sm:$0xfe]
    %v2556 = vld [vmem:[#allocation4 + $0x10] sm:$0xfe]
    %v2557 = vld [vmem:[#allocation4 + $0x18] sm:$0xfe]
    %v2558 = vld [vmem:[#allocation4 + $0x40] sm:$0x1]
    %v2559 = vld [vmem:[#allocation4 + $0x48] sm:$0x1]
    %v2560 = vld [vmem:[#allocation4 + $0x50] sm:$0x1]
    %v2561 = vld [vmem:[#allocation4 + $0x58] sm:$0x1]
    %v2562 = vld [vmem:[#allocation4 + $0x60] sm:$0xfe]
    %v2563 = vld [vmem:[#allocation4 + $0x68] sm:$0xfe]
    %v2564 = vld [vmem:[#allocation4 + $0x70] sm:$0xfe]
    %v2565 = vld [vmem:[#allocation4 + $0x78] sm:$0xfe]
    %v2566 = vld [vmem:[#allocation4 + $0xa0] sm:$0x1]
    %v2567 = vld [vmem:[#allocation4 + $0xa8] sm:$0x1]
    %v2568 = vld [vmem:[#allocation4 + $0xb0] sm:$0x1]
    %v2569 = vld [vmem:[#allocation4 + $0xb8] sm:$0x1]
    %v2594 = vrot.slane %v2554, 1
    %v2595 = vrot.slane %v2478, 1
    %v2596 = vsel %vm1418, %v2594, %v2595
    %v2597 = vrot.slane %v2555, 1
    %v2598 = vrot.slane %v2479, 1
    %v2599 = vsel %vm1418, %v2597, %v2598
    %v2600 = vrot.slane %v2556, 1
    %v2601 = vrot.slane %v2480, 1
    %v2602 = vsel %vm1418, %v2600, %v2601
    %v2603 = vrot.slane %v2557, 1
    %v2604 = vrot.slane %v2481, 1
    %v2605 = vsel %vm1418, %v2603, %v2604
    %v2606 = vrot.slane %v2558, 1
    %v2607 = vsel %vm1418, %v2595, %v2606
    %v2608 = vrot.slane %v2559, 1
    %v2609 = vsel %vm1418, %v2598, %v2608
    %v2610 = vrot.slane %v2560, 1
    %v2611 = vsel %vm1418, %v2601, %v2610
    %v2612 = vrot.slane %v2561, 1
    %v2613 = vsel %vm1418, %v2604, %v2612
    %v2614 = vrot.slane %v2562, 1
    %v2615 = vrot.slane %v2486, 1
    %v2616 = vsel %vm1418, %v2614, %v2615
    %v2617 = vrot.slane %v2563, 1
    %v2618 = vrot.slane %v2487, 1
    %v2619 = vsel %vm1418, %v2617, %v2618
    %v2620 = vrot.slane %v2564, 1
    %v2621 = vrot.slane %v2488, 1
    %v2622 = vsel %vm1418, %v2620, %v2621
    %v2623 = vrot.slane %v2565, 1
    %v2624 = vrot.slane %v2489, 1
    %v2625 = vsel %vm1418, %v2623, %v2624
    %v2626 = vrot.slane %v2566, 1
    %v2627 = vsel %vm1418, %v2615, %v2626
    %v2628 = vrot.slane %v2567, 1
    %v2629 = vsel %vm1418, %v2618, %v2628
    %v2630 = vrot.slane %v2568, 1
    %v2631 = vsel %vm1418, %v2621, %v2630
    %v2632 = vrot.slane %v2569, 1
    %v2633 = vsel %vm1418, %v2624, %v2632
    %s2650 = scalar_lea.vmem %s9, 512
    %v2651 = vld [vmem:[%s2650] sm:$0xff]
    %v2652 = vld [vmem:[%s2650 + $0x8] sm:$0xff]
    %v2653 = vld [vmem:[%s2650 + $0x10] sm:$0xff]
    %v2654 = vld [vmem:[%s2650 + $0x18] sm:$0xff]
    %v2655 = vld [vmem:[%s2650 + $0x20] sm:$0xff]
    %v2656 = vld [vmem:[%s2650 + $0x28] sm:$0xff]
    %v2657 = vld [vmem:[%s2650 + $0x30] sm:$0xff]
    %v2658 = vld [vmem:[%s2650 + $0x38] sm:$0xff]
    %v2659 = vld [vmem:[%s2650 + $0x40] sm:$0xff]
    %v2660 = vld [vmem:[%s2650 + $0x48] sm:$0xff]
    %v2661 = vld [vmem:[%s2650 + $0x50] sm:$0xff]
    %v2662 = vld [vmem:[%s2650 + $0x58] sm:$0xff]
    %v2663 = vld [vmem:[%s2650 + $0x60] sm:$0xff]
    %v2664 = vld [vmem:[%s2650 + $0x68] sm:$0xff]
    %v2665 = vld [vmem:[%s2650 + $0x70] sm:$0xff]
    %v2666 = vld [vmem:[%s2650 + $0x78] sm:$0xff]
    %v2667 = vld [vmem:[%s2650 + $0x80] sm:$0xff]
    %v2668 = vld [vmem:[%s2650 + $0x88] sm:$0xff]
    %v2669 = vld [vmem:[%s2650 + $0x90] sm:$0xff]
    %v2670 = vld [vmem:[%s2650 + $0x98] sm:$0xff]
    %v2671 = vld [vmem:[%s2650 + $0xa0] sm:$0xff]
    %v2672 = vld [vmem:[%s2650 + $0xa8] sm:$0xff]
    %v2673 = vld [vmem:[%s2650 + $0xb0] sm:$0xff]
    %v2674 = vld [vmem:[%s2650 + $0xb8] sm:$0xff]
    %v2675 = vld [vmem:[%s2650 + $0xc0] sm:$0xff]
    %v2676 = vld [vmem:[%s2650 + $0xc8] sm:$0xff]
    %v2677 = vld [vmem:[%s2650 + $0xd0] sm:$0xff]
    %v2678 = vld [vmem:[%s2650 + $0xd8] sm:$0xff]
    %v2679 = vld [vmem:[%s2650 + $0xe0] sm:$0xff]
    %v2680 = vld [vmem:[%s2650 + $0xe8] sm:$0xff]
    %v2681 = vld [vmem:[%s2650 + $0xf0] sm:$0xff]
    %v2682 = vld [vmem:[%s2650 + $0xf8] sm:$0xff]
    %v2683 = vld [vmem:[%s2650 + $0x100] sm:$0xff]
    %v2684 = vld [vmem:[%s2650 + $0x108] sm:$0xff]
    %v2685 = vld [vmem:[%s2650 + $0x110] sm:$0xff]
    %v2686 = vld [vmem:[%s2650 + $0x118] sm:$0xff]
    %v2687 = vld [vmem:[%s2650 + $0x120] sm:$0xff]
    %v2688 = vld [vmem:[%s2650 + $0x128] sm:$0xff]
    %v2689 = vld [vmem:[%s2650 + $0x130] sm:$0xff]
    %v2690 = vld [vmem:[%s2650 + $0x138] sm:$0xff]
    %v2691 = vld [vmem:[%s2650 + $0x140] sm:$0xff]
    %v2692 = vld [vmem:[%s2650 + $0x148] sm:$0xff]
    %v2693 = vld [vmem:[%s2650 + $0x150] sm:$0xff]
    %v2694 = vld [vmem:[%s2650 + $0x158] sm:$0xff]
    %v2695 = vld [vmem:[%s2650 + $0x160] sm:$0xff]
    %v2696 = vld [vmem:[%s2650 + $0x168] sm:$0xff]
    %v2697 = vld [vmem:[%s2650 + $0x170] sm:$0xff]
    %v2698 = vld [vmem:[%s2650 + $0x178] sm:$0xff]
    %v2699 = vld [vmem:[%s2650 + $0x180] sm:$0xff]
    %v2700 = vld [vmem:[%s2650 + $0x188] sm:$0xff]
    %v2701 = vld [vmem:[%s2650 + $0x190] sm:$0xff]
    %v2702 = vld [vmem:[%s2650 + $0x198] sm:$0xff]
    %v2703 = vld [vmem:[%s2650 + $0x1a0] sm:$0xff]
    %v2704 = vld [vmem:[%s2650 + $0x1a8] sm:$0xff]
    %v2705 = vld [vmem:[%s2650 + $0x1b0] sm:$0xff]
    %v2706 = vld [vmem:[%s2650 + $0x1b8] sm:$0xff]
    %v2707 = vld [vmem:[%s2650 + $0x1c0] sm:$0xff]
    %v2708 = vld [vmem:[%s2650 + $0x1c8] sm:$0xff]
    %v2709 = vld [vmem:[%s2650 + $0x1d0] sm:$0xff]
    %v2710 = vld [vmem:[%s2650 + $0x1d8] sm:$0xff]
    %v2711 = vld [vmem:[%s2650 + $0x1e0] sm:$0xff]
    %v2712 = vld [vmem:[%s2650 + $0x1e8] sm:$0xff]
    %v2713 = vld [vmem:[%s2650 + $0x1f0] sm:$0xff]
    %v2714 = vld [vmem:[%s2650 + $0x1f8] sm:$0xff]
    %2715 = vmatpush.msra.mxu0 %v2666
    %2716 = vmatpush.msra.mxu0 %v2665
    %2717 = vmatpush.msra.mxu0 %v2664
    %2718 = vmatpush.msra.mxu0 %v2663
    %2719 = vmatpush.msra.mxu0 %v2662
    %2720 = vmatpush.msra.mxu0 %v2661
    %2721 = vmatpush.msra.mxu0 %v2660
    %2722 = vmatpush.msra.mxu0 %v2659
    %2723 = vmatpush.msra.mxu0 %v2658
    %2724 = vmatpush.msra.mxu0 %v2657
    %2725 = vmatpush.msra.mxu0 %v2656
    %2726 = vmatpush.msra.mxu0 %v2655
    %2727 = vmatpush.msra.mxu0 %v2654
    %2728 = vmatpush.msra.mxu0 %v2653
    %2729 = vmatpush.msra.mxu0 %v2652
    %2730 = vmatpush.msra.mxu0 %v2651
    %2731 = vmatmul.f32.gmra.mxu0 %v2596
    %v2732 = vpop.f32.mrf.mxu0
    %v2733 = vadd.f32 0.0, %v2732
    %2734 = vmatmul.f32.gmra.mxu0 %v2607
    %v2735 = vpop.f32.mrf.mxu0
    %v2736 = vadd.f32 0.0, %v2735
    %2737 = vmatmul.f32.gmra.mxu0 %v2616
    %v2738 = vpop.f32.mrf.mxu0
    %v2739 = vadd.f32 0.0, %v2738
    %2740 = vmatmul.f32.gmra.mxu0 %v2627
    %v2741 = vpop.f32.mrf.mxu0
    %v2742 = vadd.f32 0.0, %v2741
    %2743 = vdwg.mxu0
    %2744 = vmatpush.msra.mxu0 %v2682
    %2745 = vmatpush.msra.mxu0 %v2681
    %2746 = vmatpush.msra.mxu0 %v2680
    %2747 = vmatpush.msra.mxu0 %v2679
    %2748 = vmatpush.msra.mxu0 %v2678
    %2749 = vmatpush.msra.mxu0 %v2677
    %2750 = vmatpush.msra.mxu0 %v2676
    %2751 = vmatpush.msra.mxu0 %v2675
    %2752 = vmatpush.msra.mxu0 %v2674
    %2753 = vmatpush.msra.mxu0 %v2673
    %2754 = vmatpush.msra.mxu0 %v2672
    %2755 = vmatpush.msra.mxu0 %v2671
    %2756 = vmatpush.msra.mxu0 %v2670
    %2757 = vmatpush.msra.mxu0 %v2669
    %2758 = vmatpush.msra.mxu0 %v2668
    %2759 = vmatpush.msra.mxu0 %v2667
    %2760 = vmatmul.f32.gmra.mxu0 %v2599
    %v2761 = vpop.f32.mrf.mxu0
    %v2762 = vadd.f32 %v2733, %v2761
    %2763 = vmatmul.f32.gmra.mxu0 %v2609
    %v2764 = vpop.f32.mrf.mxu0
    %v2765 = vadd.f32 %v2736, %v2764
    %2766 = vmatmul.f32.gmra.mxu0 %v2619
    %v2767 = vpop.f32.mrf.mxu0
    %v2768 = vadd.f32 %v2739, %v2767
    %2769 = vmatmul.f32.gmra.mxu0 %v2629
    %v2770 = vpop.f32.mrf.mxu0
    %v2771 = vadd.f32 %v2742, %v2770
    %2772 = vdwg.mxu0
    %2773 = vmatpush.msra.mxu0 %v2698
    %2774 = vmatpush.msra.mxu0 %v2697
    %2775 = vmatpush.msra.mxu0 %v2696
    %2776 = vmatpush.msra.mxu0 %v2695
    %2777 = vmatpush.msra.mxu0 %v2694
    %2778 = vmatpush.msra.mxu0 %v2693
    %2779 = vmatpush.msra.mxu0 %v2692
    %2780 = vmatpush.msra.mxu0 %v2691
    %2781 = vmatpush.msra.mxu0 %v2690
    %2782 = vmatpush.msra.mxu0 %v2689
    %2783 = vmatpush.msra.mxu0 %v2688
    %2784 = vmatpush.msra.mxu0 %v2687
    %2785 = vmatpush.msra.mxu0 %v2686
    %2786 = vmatpush.msra.mxu0 %v2685
    %2787 = vmatpush.msra.mxu0 %v2684
    %2788 = vmatpush.msra.mxu0 %v2683
    %2789 = vmatmul.f32.gmra.mxu0 %v2602
    %v2790 = vpop.f32.mrf.mxu0
    %v2791 = vadd.f32 %v2762, %v2790
    %2792 = vmatmul.f32.gmra.mxu0 %v2611
    %v2793 = vpop.f32.mrf.mxu0
    %v2794 = vadd.f32 %v2765, %v2793
    %2795 = vmatmul.f32.gmra.mxu0 %v2622
    %v2796 = vpop.f32.mrf.mxu0
    %v2797 = vadd.f32 %v2768, %v2796
    %2798 = vmatmul.f32.gmra.mxu0 %v2631
    %v2799 = vpop.f32.mrf.mxu0
    %v2800 = vadd.f32 %v2771, %v2799
    %2801 = vdwg.mxu0
    %2802 = vmatpush.msra.mxu0 %v2714
    %2803 = vmatpush.msra.mxu0 %v2713
    %2804 = vmatpush.msra.mxu0 %v2712
    %2805 = vmatpush.msra.mxu0 %v2711
    %2806 = vmatpush.msra.mxu0 %v2710
    %2807 = vmatpush.msra.mxu0 %v2709
    %2808 = vmatpush.msra.mxu0 %v2708
    %2809 = vmatpush.msra.mxu0 %v2707
    %2810 = vmatpush.msra.mxu0 %v2706
    %2811 = vmatpush.msra.mxu0 %v2705
    %2812 = vmatpush.msra.mxu0 %v2704
    %2813 = vmatpush.msra.mxu0 %v2703
    %2814 = vmatpush.msra.mxu0 %v2702
    %2815 = vmatpush.msra.mxu0 %v2701
    %2816 = vmatpush.msra.mxu0 %v2700
    %2817 = vmatpush.msra.mxu0 %v2699
    %2818 = vmatmul.f32.gmra.mxu0 %v2605
    %v2819 = vpop.f32.mrf.mxu0
    %v2820 = vadd.f32 %v2791, %v2819
    %2821 = vmatmul.f32.gmra.mxu0 %v2613
    %v2822 = vpop.f32.mrf.mxu0
    %v2823 = vadd.f32 %v2794, %v2822
    %2824 = vmatmul.f32.gmra.mxu0 %v2625
    %v2825 = vpop.f32.mrf.mxu0
    %v2826 = vadd.f32 %v2797, %v2825
    %2827 = vmatmul.f32.gmra.mxu0 %v2633
    %v2828 = vpop.f32.mrf.mxu0
    %v2829 = vadd.f32 %v2800, %v2828
    %2830 = vdwg.mxu0
    %2831 = vmatpush.msra.mxu0 %v2505
    %2832 = vmatpush.msra.mxu0 %v2504
    %2833 = vmatpush.msra.mxu0 %v2503
    %2834 = vmatpush.msra.mxu0 %v2502
    %2835 = vmatpush.msra.mxu0 %v2501
    %2836 = vmatpush.msra.mxu0 %v2500
    %2837 = vmatpush.msra.mxu0 %v2499
    %2838 = vmatpush.msra.mxu0 %v2498
    %2839 = vmatpush.msra.mxu0 %v2497
    %2840 = vmatpush.msra.mxu0 %v2496
    %2841 = vmatpush.msra.mxu0 %v2495
    %2842 = vmatpush.msra.mxu0 %v2494
    %2843 = vmatpush.msra.mxu0 %v2493
    %2844 = vmatpush.msra.mxu0 %v2492
    %2845 = vmatpush.msra.mxu0 %v2491
    %2846 = vmatpush.msra.mxu0 %v2490
    %2847 = vmatmul.f32.gmra.mxu0 %v2474
    %v2848 = vpop.f32.mrf.mxu0
    %v2849 = vadd.f32 %v2820, %v2848
    %2850 = vmatmul.f32.gmra.mxu0 %v2478
    %v2851 = vpop.f32.mrf.mxu0
    %v2852 = vadd.f32 %v2823, %v2851
    %2853 = vmatmul.f32.gmra.mxu0 %v2482
    %v2854 = vpop.f32.mrf.mxu0
    %v2855 = vadd.f32 %v2826, %v2854
    %2856 = vmatmul.f32.gmra.mxu0 %v2486
    %v2857 = vpop.f32.mrf.mxu0
    %v2858 = vadd.f32 %v2829, %v2857
    %2859 = vdwg.mxu0
    %2860 = vmatpush.msra.mxu0 %v2521
    %2861 = vmatpush.msra.mxu0 %v2520
    %2862 = vmatpush.msra.mxu0 %v2519
    %2863 = vmatpush.msra.mxu0 %v2518
    %2864 = vmatpush.msra.mxu0 %v2517
    %2865 = vmatpush.msra.mxu0 %v2516
    %2866 = vmatpush.msra.mxu0 %v2515
    %2867 = vmatpush.msra.mxu0 %v2514
    %2868 = vmatpush.msra.mxu0 %v2513
    %2869 = vmatpush.msra.mxu0 %v2512
    %2870 = vmatpush.msra.mxu0 %v2511
    %2871 = vmatpush.msra.mxu0 %v2510
    %2872 = vmatpush.msra.mxu0 %v2509
    %2873 = vmatpush.msra.mxu0 %v2508
    %2874 = vmatpush.msra.mxu0 %v2507
    %2875 = vmatpush.msra.mxu0 %v2506
    %2876 = vmatmul.f32.gmra.mxu0 %v2475
    %v2877 = vpop.f32.mrf.mxu0
    %v2878 = vadd.f32 %v2849, %v2877
    %2879 = vmatmul.f32.gmra.mxu0 %v2479
    %v2880 = vpop.f32.mrf.mxu0
    %v2881 = vadd.f32 %v2852, %v2880
    %2882 = vmatmul.f32.gmra.mxu0 %v2483
    %v2883 = vpop.f32.mrf.mxu0
    %v2884 = vadd.f32 %v2855, %v2883
    %2885 = vmatmul.f32.gmra.mxu0 %v2487
    %v2886 = vpop.f32.mrf.mxu0
    %v2887 = vadd.f32 %v2858, %v2886
    %2888 = vdwg.mxu0
    %2889 = vmatpush.msra.mxu0 %v2537
    %2890 = vmatpush.msra.mxu0 %v2536
    %2891 = vmatpush.msra.mxu0 %v2535
    %2892 = vmatpush.msra.mxu0 %v2534
    %2893 = vmatpush.msra.mxu0 %v2533
    %2894 = vmatpush.msra.mxu0 %v2532
    %2895 = vmatpush.msra.mxu0 %v2531
    %2896 = vmatpush.msra.mxu0 %v2530
    %2897 = vmatpush.msra.mxu0 %v2529
    %2898 = vmatpush.msra.mxu0 %v2528
    %2899 = vmatpush.msra.mxu0 %v2527
    %2900 = vmatpush.msra.mxu0 %v2526
    %2901 = vmatpush.msra.mxu0 %v2525
    %2902 = vmatpush.msra.mxu0 %v2524
    %2903 = vmatpush.msra.mxu0 %v2523
    %2904 = vmatpush.msra.mxu0 %v2522
    %2905 = vmatmul.f32.gmra.mxu0 %v2476
    %v2906 = vpop.f32.mrf.mxu0
    %v2907 = vadd.f32 %v2878, %v2906
    %2908 = vmatmul.f32.gmra.mxu0 %v2480
    %v2909 = vpop.f32.mrf.mxu0
    %v2910 = vadd.f32 %v2881, %v2909
    %2911 = vmatmul.f32.gmra.mxu0 %v2484
    %v2912 = vpop.f32.mrf.mxu0
    %v2913 = vadd.f32 %v2884, %v2912
    %2914 = vmatmul.f32.gmra.mxu0 %v2488
    %v2915 = vpop.f32.mrf.mxu0
    %v2916 = vadd.f32 %v2887, %v2915
    %2917 = vdwg.mxu0
    %2918 = vmatpush.msra.mxu0 %v2553
    %2919 = vmatpush.msra.mxu0 %v2552
    %2920 = vmatpush.msra.mxu0 %v2551
    %2921 = vmatpush.msra.mxu0 %v2550
    %2922 = vmatpush.msra.mxu0 %v2549
    %2923 = vmatpush.msra.mxu0 %v2548
    %2924 = vmatpush.msra.mxu0 %v2547
    %2925 = vmatpush.msra.mxu0 %v2546
    %2926 = vmatpush.msra.mxu0 %v2545
    %2927 = vmatpush.msra.mxu0 %v2544
    %2928 = vmatpush.msra.mxu0 %v2543
    %2929 = vmatpush.msra.mxu0 %v2542
    %2930 = vmatpush.msra.mxu0 %v2541
    %2931 = vmatpush.msra.mxu0 %v2540
    %2932 = vmatpush.msra.mxu0 %v2539
    %2933 = vmatpush.msra.mxu0 %v2538
    %2934 = vmatmul.f32.gmra.mxu0 %v2477
    %v2935 = vpop.f32.mrf.mxu0
    %v2936 = vadd.f32 %v2907, %v2935
    %2937 = vmatmul.f32.gmra.mxu0 %v2481
    %v2938 = vpop.f32.mrf.mxu0
    %v2939 = vadd.f32 %v2910, %v2938
    %2940 = vmatmul.f32.gmra.mxu0 %v2485
    %v2941 = vpop.f32.mrf.mxu0
    %v2942 = vadd.f32 %v2913, %v2941
    %2943 = vmatmul.f32.gmra.mxu0 %v2489
    %v2944 = vpop.f32.mrf.mxu0
    %v2945 = vadd.f32 %v2916, %v2944
    %2946 = vdwg.mxu0
    %v2947 = vld [vmem:[#allocation4] sm:$0xfc]
    %v2948 = vld [vmem:[#allocation4 + $0x8] sm:$0xfc]
    %v2949 = vld [vmem:[#allocation4 + $0x10] sm:$0xfc]
    %v2950 = vld [vmem:[#allocation4 + $0x18] sm:$0xfc]
    %v2951 = vld [vmem:[#allocation4 + $0x40] sm:$0x3]
    %v2952 = vld [vmem:[#allocation4 + $0x48] sm:$0x3]
    %v2953 = vld [vmem:[#allocation4 + $0x50] sm:$0x3]
    %v2954 = vld [vmem:[#allocation4 + $0x58] sm:$0x3]
    %v2955 = vld [vmem:[#allocation4 + $0x60] sm:$0xfc]
    %v2956 = vld [vmem:[#allocation4 + $0x68] sm:$0xfc]
    %v2957 = vld [vmem:[#allocation4 + $0x70] sm:$0xfc]
    %v2958 = vld [vmem:[#allocation4 + $0x78] sm:$0xfc]
    %v2959 = vld [vmem:[#allocation4 + $0xa0] sm:$0x3]
    %v2960 = vld [vmem:[#allocation4 + $0xa8] sm:$0x3]
    %v2961 = vld [vmem:[#allocation4 + $0xb0] sm:$0x3]
    %v2962 = vld [vmem:[#allocation4 + $0xb8] sm:$0x3]
    %v2979 = vrot.slane %v2947, 2
    %v2980 = vrot.slane %v2478, 2
    %v2981 = vsel %vm1760, %v2979, %v2980
    %v2982 = vrot.slane %v2948, 2
    %v2983 = vrot.slane %v2479, 2
    %v2984 = vsel %vm1760, %v2982, %v2983
    %v2985 = vrot.slane %v2949, 2
    %v2986 = vrot.slane %v2480, 2
    %v2987 = vsel %vm1760, %v2985, %v2986
    %v2988 = vrot.slane %v2950, 2
    %v2989 = vrot.slane %v2481, 2
    %v2990 = vsel %vm1760, %v2988, %v2989
    %v2991 = vrot.slane %v2951, 2
    %v2992 = vsel %vm1760, %v2980, %v2991
    %v2993 = vrot.slane %v2952, 2
    %v2994 = vsel %vm1760, %v2983, %v2993
    %v2995 = vrot.slane %v2953, 2
    %v2996 = vsel %vm1760, %v2986, %v2995
    %v2997 = vrot.slane %v2954, 2
    %v2998 = vsel %vm1760, %v2989, %v2997
    %v2999 = vrot.slane %v2955, 2
    %v3000 = vrot.slane %v2486, 2
    %v3001 = vsel %vm1760, %v2999, %v3000
    %v3002 = vrot.slane %v2956, 2
    %v3003 = vrot.slane %v2487, 2
    %v3004 = vsel %vm1760, %v3002, %v3003
    %v3005 = vrot.slane %v2957, 2
    %v3006 = vrot.slane %v2488, 2
    %v3007 = vsel %vm1760, %v3005, %v3006
    %v3008 = vrot.slane %v2958, 2
    %v3009 = vrot.slane %v2489, 2
    %v3010 = vsel %vm1760, %v3008, %v3009
    %v3011 = vrot.slane %v2959, 2
    %v3012 = vsel %vm1760, %v3000, %v3011
    %v3013 = vrot.slane %v2960, 2
    %v3014 = vsel %vm1760, %v3003, %v3013
    %v3015 = vrot.slane %v2961, 2
    %v3016 = vsel %vm1760, %v3006, %v3015
    %v3017 = vrot.slane %v2962, 2
    %v3018 = vsel %vm1760, %v3009, %v3017
    %s3035 = scalar_lea.vmem %s9, 1024
    %v3036 = vld [vmem:[%s3035] sm:$0xff]
    %v3037 = vld [vmem:[%s3035 + $0x8] sm:$0xff]
    %v3038 = vld [vmem:[%s3035 + $0x10] sm:$0xff]
    %v3039 = vld [vmem:[%s3035 + $0x18] sm:$0xff]
    %v3040 = vld [vmem:[%s3035 + $0x20] sm:$0xff]
    %v3041 = vld [vmem:[%s3035 + $0x28] sm:$0xff]
    %v3042 = vld [vmem:[%s3035 + $0x30] sm:$0xff]
    %v3043 = vld [vmem:[%s3035 + $0x38] sm:$0xff]
    %v3044 = vld [vmem:[%s3035 + $0x40] sm:$0xff]
    %v3045 = vld [vmem:[%s3035 + $0x48] sm:$0xff]
    %v3046 = vld [vmem:[%s3035 + $0x50] sm:$0xff]
    %v3047 = vld [vmem:[%s3035 + $0x58] sm:$0xff]
    %v3048 = vld [vmem:[%s3035 + $0x60] sm:$0xff]
    %v3049 = vld [vmem:[%s3035 + $0x68] sm:$0xff]
    %v3050 = vld [vmem:[%s3035 + $0x70] sm:$0xff]
    %v3051 = vld [vmem:[%s3035 + $0x78] sm:$0xff]
    %v3052 = vld [vmem:[%s3035 + $0x80] sm:$0xff]
    %v3053 = vld [vmem:[%s3035 + $0x88] sm:$0xff]
    %v3054 = vld [vmem:[%s3035 + $0x90] sm:$0xff]
    %v3055 = vld [vmem:[%s3035 + $0x98] sm:$0xff]
    %v3056 = vld [vmem:[%s3035 + $0xa0] sm:$0xff]
    %v3057 = vld [vmem:[%s3035 + $0xa8] sm:$0xff]
    %v3058 = vld [vmem:[%s3035 + $0xb0] sm:$0xff]
    %v3059 = vld [vmem:[%s3035 + $0xb8] sm:$0xff]
    %v3060 = vld [vmem:[%s3035 + $0xc0] sm:$0xff]
    %v3061 = vld [vmem:[%s3035 + $0xc8] sm:$0xff]
    %v3062 = vld [vmem:[%s3035 + $0xd0] sm:$0xff]
    %v3063 = vld [vmem:[%s3035 + $0xd8] sm:$0xff]
    %v3064 = vld [vmem:[%s3035 + $0xe0] sm:$0xff]
    %v3065 = vld [vmem:[%s3035 + $0xe8] sm:$0xff]
    %v3066 = vld [vmem:[%s3035 + $0xf0] sm:$0xff]
    %v3067 = vld [vmem:[%s3035 + $0xf8] sm:$0xff]
    %v3068 = vld [vmem:[%s3035 + $0x100] sm:$0xff]
    %v3069 = vld [vmem:[%s3035 + $0x108] sm:$0xff]
    %v3070 = vld [vmem:[%s3035 + $0x110] sm:$0xff]
    %v3071 = vld [vmem:[%s3035 + $0x118] sm:$0xff]
    %v3072 = vld [vmem:[%s3035 + $0x120] sm:$0xff]
    %v3073 = vld [vmem:[%s3035 + $0x128] sm:$0xff]
    %v3074 = vld [vmem:[%s3035 + $0x130] sm:$0xff]
    %v3075 = vld [vmem:[%s3035 + $0x138] sm:$0xff]
    %v3076 = vld [vmem:[%s3035 + $0x140] sm:$0xff]
    %v3077 = vld [vmem:[%s3035 + $0x148] sm:$0xff]
    %v3078 = vld [vmem:[%s3035 + $0x150] sm:$0xff]
    %v3079 = vld [vmem:[%s3035 + $0x158] sm:$0xff]
    %v3080 = vld [vmem:[%s3035 + $0x160] sm:$0xff]
    %v3081 = vld [vmem:[%s3035 + $0x168] sm:$0xff]
    %v3082 = vld [vmem:[%s3035 + $0x170] sm:$0xff]
    %v3083 = vld [vmem:[%s3035 + $0x178] sm:$0xff]
    %v3084 = vld [vmem:[%s3035 + $0x180] sm:$0xff]
    %v3085 = vld [vmem:[%s3035 + $0x188] sm:$0xff]
    %v3086 = vld [vmem:[%s3035 + $0x190] sm:$0xff]
    %v3087 = vld [vmem:[%s3035 + $0x198] sm:$0xff]
    %v3088 = vld [vmem:[%s3035 + $0x1a0] sm:$0xff]
    %v3089 = vld [vmem:[%s3035 + $0x1a8] sm:$0xff]
    %v3090 = vld [vmem:[%s3035 + $0x1b0] sm:$0xff]
    %v3091 = vld [vmem:[%s3035 + $0x1b8] sm:$0xff]
    %v3092 = vld [vmem:[%s3035 + $0x1c0] sm:$0xff]
    %v3093 = vld [vmem:[%s3035 + $0x1c8] sm:$0xff]
    %v3094 = vld [vmem:[%s3035 + $0x1d0] sm:$0xff]
    %v3095 = vld [vmem:[%s3035 + $0x1d8] sm:$0xff]
    %v3096 = vld [vmem:[%s3035 + $0x1e0] sm:$0xff]
    %v3097 = vld [vmem:[%s3035 + $0x1e8] sm:$0xff]
    %v3098 = vld [vmem:[%s3035 + $0x1f0] sm:$0xff]
    %v3099 = vld [vmem:[%s3035 + $0x1f8] sm:$0xff]
    %3100 = vmatpush.msra.mxu0 %v3051
    %3101 = vmatpush.msra.mxu0 %v3050
    %3102 = vmatpush.msra.mxu0 %v3049
    %3103 = vmatpush.msra.mxu0 %v3048
    %3104 = vmatpush.msra.mxu0 %v3047
    %3105 = vmatpush.msra.mxu0 %v3046
    %3106 = vmatpush.msra.mxu0 %v3045
    %3107 = vmatpush.msra.mxu0 %v3044
    %3108 = vmatpush.msra.mxu0 %v3043
    %3109 = vmatpush.msra.mxu0 %v3042
    %3110 = vmatpush.msra.mxu0 %v3041
    %3111 = vmatpush.msra.mxu0 %v3040
    %3112 = vmatpush.msra.mxu0 %v3039
    %3113 = vmatpush.msra.mxu0 %v3038
    %3114 = vmatpush.msra.mxu0 %v3037
    %3115 = vmatpush.msra.mxu0 %v3036
    %3116 = vmatmul.f32.gmra.mxu0 %v2981
    %v3117 = vpop.f32.mrf.mxu0
    %v3118 = vadd.f32 0.0, %v3117
    %3119 = vmatmul.f32.gmra.mxu0 %v2992
    %v3120 = vpop.f32.mrf.mxu0
    %v3121 = vadd.f32 0.0, %v3120
    %3122 = vmatmul.f32.gmra.mxu0 %v3001
    %v3123 = vpop.f32.mrf.mxu0
    %v3124 = vadd.f32 0.0, %v3123
    %3125 = vmatmul.f32.gmra.mxu0 %v3012
    %v3126 = vpop.f32.mrf.mxu0
    %v3127 = vadd.f32 0.0, %v3126
    %3128 = vdwg.mxu0
    %3129 = vmatpush.msra.mxu0 %v3067
    %3130 = vmatpush.msra.mxu0 %v3066
    %3131 = vmatpush.msra.mxu0 %v3065
    %3132 = vmatpush.msra.mxu0 %v3064
    %3133 = vmatpush.msra.mxu0 %v3063
    %3134 = vmatpush.msra.mxu0 %v3062
    %3135 = vmatpush.msra.mxu0 %v3061
    %3136 = vmatpush.msra.mxu0 %v3060
    %3137 = vmatpush.msra.mxu0 %v3059
    %3138 = vmatpush.msra.mxu0 %v3058
    %3139 = vmatpush.msra.mxu0 %v3057
    %3140 = vmatpush.msra.mxu0 %v3056
    %3141 = vmatpush.msra.mxu0 %v3055
    %3142 = vmatpush.msra.mxu0 %v3054
    %3143 = vmatpush.msra.mxu0 %v3053
    %3144 = vmatpush.msra.mxu0 %v3052
    %3145 = vmatmul.f32.gmra.mxu0 %v2984
    %v3146 = vpop.f32.mrf.mxu0
    %v3147 = vadd.f32 %v3118, %v3146
    %3148 = vmatmul.f32.gmra.mxu0 %v2994
    %v3149 = vpop.f32.mrf.mxu0
    %v3150 = vadd.f32 %v3121, %v3149
    %3151 = vmatmul.f32.gmra.mxu0 %v3004
    %v3152 = vpop.f32.mrf.mxu0
    %v3153 = vadd.f32 %v3124, %v3152
    %3154 = vmatmul.f32.gmra.mxu0 %v3014
    %v3155 = vpop.f32.mrf.mxu0
    %v3156 = vadd.f32 %v3127, %v3155
    %3157 = vdwg.mxu0
    %3158 = vmatpush.msra.mxu0 %v3083
    %3159 = vmatpush.msra.mxu0 %v3082
    %3160 = vmatpush.msra.mxu0 %v3081
    %3161 = vmatpush.msra.mxu0 %v3080
    %3162 = vmatpush.msra.mxu0 %v3079
    %3163 = vmatpush.msra.mxu0 %v3078
    %3164 = vmatpush.msra.mxu0 %v3077
    %3165 = vmatpush.msra.mxu0 %v3076
    %3166 = vmatpush.msra.mxu0 %v3075
    %3167 = vmatpush.msra.mxu0 %v3074
    %3168 = vmatpush.msra.mxu0 %v3073
    %3169 = vmatpush.msra.mxu0 %v3072
    %3170 = vmatpush.msra.mxu0 %v3071
    %3171 = vmatpush.msra.mxu0 %v3070
    %3172 = vmatpush.msra.mxu0 %v3069
    %3173 = vmatpush.msra.mxu0 %v3068
    %3174 = vmatmul.f32.gmra.mxu0 %v2987
    %v3175 = vpop.f32.mrf.mxu0
    %v3176 = vadd.f32 %v3147, %v3175
    %3177 = vmatmul.f32.gmra.mxu0 %v2996
    %v3178 = vpop.f32.mrf.mxu0
    %v3179 = vadd.f32 %v3150, %v3178
    %3180 = vmatmul.f32.gmra.mxu0 %v3007
    %v3181 = vpop.f32.mrf.mxu0
    %v3182 = vadd.f32 %v3153, %v3181
    %3183 = vmatmul.f32.gmra.mxu0 %v3016
    %v3184 = vpop.f32.mrf.mxu0
    %v3185 = vadd.f32 %v3156, %v3184
    %3186 = vdwg.mxu0
    %3187 = vmatpush.msra.mxu0 %v3099
    %3188 = vmatpush.msra.mxu0 %v3098
    %3189 = vmatpush.msra.mxu0 %v3097
    %3190 = vmatpush.msra.mxu0 %v3096
    %3191 = vmatpush.msra.mxu0 %v3095
    %3192 = vmatpush.msra.mxu0 %v3094
    %3193 = vmatpush.msra.mxu0 %v3093
    %3194 = vmatpush.msra.mxu0 %v3092
    %3195 = vmatpush.msra.mxu0 %v3091
    %3196 = vmatpush.msra.mxu0 %v3090
    %3197 = vmatpush.msra.mxu0 %v3089
    %3198 = vmatpush.msra.mxu0 %v3088
    %3199 = vmatpush.msra.mxu0 %v3087
    %3200 = vmatpush.msra.mxu0 %v3086
    %3201 = vmatpush.msra.mxu0 %v3085
    %3202 = vmatpush.msra.mxu0 %v3084
    %3203 = vmatmul.f32.gmra.mxu0 %v2990
    %v3204 = vpop.f32.mrf.mxu0
    %v3205 = vadd.f32 %v3176, %v3204
    %3206 = vmatmul.f32.gmra.mxu0 %v2998
    %v3207 = vpop.f32.mrf.mxu0
    %v3208 = vadd.f32 %v3179, %v3207
    %3209 = vmatmul.f32.gmra.mxu0 %v3010
    %v3210 = vpop.f32.mrf.mxu0
    %v3211 = vadd.f32 %v3182, %v3210
    %3212 = vmatmul.f32.gmra.mxu0 %v3018
    %v3213 = vpop.f32.mrf.mxu0
    %v3214 = vadd.f32 %v3185, %v3213
    %3215 = vdwg.mxu0
    %v3216 = vadd.f32 %v2936, %v3205
    %v3217 = vadd.f32 %v2939, %v3208
    %v3218 = vadd.f32 %v2942, %v3211
    %v3219 = vadd.f32 %v2945, %v3214
    %v3220 = vld [vmem:[%s10] sm:$0x1]
    %v3222 = vperm.slane %v3220, 0
    %v3224 = vadd.f32 %v3216, %v3222
    %v3225 = vadd.f32 %v3217, %v3222
    %v3226 = vadd.f32 %v3218, %v3222
    %v3227 = vadd.f32 %v3219, %v3222
    %v3228 = vadd.f32 %v3224, %v71
    %v3229 = vadd.f32 %v3225, %v72
    %v3230 = vadd.f32 %v3226, %v73
    %v3231 = vadd.f32 %v3227, %v74
    %3232 = vst.msk [vmem:[#allocation10] sm:$0xff] %vm108, %v3228
    %3233 = vst.msk [vmem:[#allocation10 + $0x8] sm:$0xff] %vm108, %v3229
    %3234 = vst.msk [vmem:[#allocation10 + $0x40] sm:$0xff] %vm108, %v3230
    %3235 = vst.msk [vmem:[#allocation10 + $0x48] sm:$0xff] %vm108, %v3231
    %3240 = vrot.lane.b32.xlu0 %v71, 16
    %v3241 = vpop.permute.xlu0 %3240
    %3242 = vrot.lane.b32.xlu0 %v72, 16
    %v3243 = vpop.permute.xlu0 %3242
    %3244 = vrot.lane.b32.xlu0 %v73, 16
    %v3245 = vpop.permute.xlu0 %3244
    %3246 = vrot.lane.b32.xlu0 %v74, 16
    %v3247 = vpop.permute.xlu0 %3246
    %v3252 = vadd.f32 %v3224, %v3241
    %v3253 = vadd.f32 %v3225, %v3243
    %v3254 = vadd.f32 %v3226, %v3245
    %v3255 = vadd.f32 %v3227, %v3247
    %3260 = vrot.lane.b32.xlu0 %v3252, 112
    %v3261 = vpop.permute.xlu0 %3260
    %3262 = vrot.lane.b32.xlu0 %v3253, 112
    %v3263 = vpop.permute.xlu0 %3262
    %3264 = vrot.lane.b32.xlu0 %v3254, 112
    %v3265 = vpop.permute.xlu0 %3264
    %3266 = vrot.lane.b32.xlu0 %v3255, 112
    %v3267 = vpop.permute.xlu0 %3266
    %s3272 = scalar_lea.vmem [#allocation10], 16
    %3273 = vst.msk [vmem:[%s3272] sm:$0xff] %vm108, %v3261
    %3274 = vst.msk [vmem:[%s3272 + $0x8] sm:$0xff] %vm108, %v3263
    %3275 = vst.msk [vmem:[%s3272 + $0x40] sm:$0xff] %vm108, %v3265
    %3276 = vst.msk [vmem:[%s3272 + $0x48] sm:$0xff] %vm108, %v3267
    %3277 = vrot.lane.b32.xlu0 %v71, 32
    %v3278 = vpop.permute.xlu0 %3277
    %3279 = vrot.lane.b32.xlu0 %v72, 32
    %v3280 = vpop.permute.xlu0 %3279
    %3281 = vrot.lane.b32.xlu0 %v73, 32
    %v3282 = vpop.permute.xlu0 %3281
    %3283 = vrot.lane.b32.xlu0 %v74, 32
    %v3284 = vpop.permute.xlu0 %3283
    %v3289 = vadd.f32 %v3224, %v3278
    %v3290 = vadd.f32 %v3225, %v3280
    %v3291 = vadd.f32 %v3226, %v3282
    %v3292 = vadd.f32 %v3227, %v3284
    %3297 = vrot.lane.b32.xlu0 %v3289, 96
    %v3298 = vpop.permute.xlu0 %3297
    %3299 = vrot.lane.b32.xlu0 %v3290, 96
    %v3300 = vpop.permute.xlu0 %3299
    %3301 = vrot.lane.b32.xlu0 %v3291, 96
    %v3302 = vpop.permute.xlu0 %3301
    %3303 = vrot.lane.b32.xlu0 %v3292, 96
    %v3304 = vpop.permute.xlu0 %3303
    %s3309 = scalar_lea.vmem [#allocation10], 32
    %3310 = vst.msk [vmem:[%s3309] sm:$0xff] %vm108, %v3298
    %3311 = vst.msk [vmem:[%s3309 + $0x8] sm:$0xff] %vm108, %v3300
    %3312 = vst.msk [vmem:[%s3309 + $0x40] sm:$0xff] %vm108, %v3302
    %3313 = vst.msk [vmem:[%s3309 + $0x48] sm:$0xff] %vm108, %v3304
    %3314 = vrot.lane.b32.xlu0 %v71, 48
    %v3315 = vpop.permute.xlu0 %3314
    %3316 = vrot.lane.b32.xlu0 %v72, 48
    %v3317 = vpop.permute.xlu0 %3316
    %3318 = vrot.lane.b32.xlu0 %v73, 48
    %v3319 = vpop.permute.xlu0 %3318
    %3320 = vrot.lane.b32.xlu0 %v74, 48
    %v3321 = vpop.permute.xlu0 %3320
    %v3326 = vadd.f32 %v3224, %v3315
    %v3327 = vadd.f32 %v3225, %v3317
    %v3328 = vadd.f32 %v3226, %v3319
    %v3329 = vadd.f32 %v3227, %v3321
    %3334 = vrot.lane.b32.xlu0 %v3326, 80
    %v3335 = vpop.permute.xlu0 %3334
    %3336 = vrot.lane.b32.xlu0 %v3327, 80
    %v3337 = vpop.permute.xlu0 %3336
    %3338 = vrot.lane.b32.xlu0 %v3328, 80
    %v3339 = vpop.permute.xlu0 %3338
    %3340 = vrot.lane.b32.xlu0 %v3329, 80
    %v3341 = vpop.permute.xlu0 %3340
    %s3346 = scalar_lea.vmem [#allocation10], 48
    %3347 = vst.msk [vmem:[%s3346] sm:$0xff] %vm108, %v3335
    %3348 = vst.msk [vmem:[%s3346 + $0x8] sm:$0xff] %vm108, %v3337
    %3349 = vst.msk [vmem:[%s3346 + $0x40] sm:$0xff] %vm108, %v3339
    %3350 = vst.msk [vmem:[%s3346 + $0x48] sm:$0xff] %vm108, %v3341
    // Predicated region
    $region54: #{tpu_custom_call.1} parent=1 // pred_check
      _
    $region55: #{tpu_custom_call.1} parent=1 // pred_check_branch
      %3352 = sbr.rel (0) target = $region57
    $region56: #{tpu_custom_call.1} parent=1 // pred_region
      %3354 = vsyncadd [#allocation7], 0
      %s3355 = sshll.u32 [#allocation10], 4
      %s3356 = int_to_ptr.vmem [resolvable:$true] %s3355
      %s3357 = sshll.u32 %s11, 4
      %s3358 = int_to_ptr.hbm [resolvable:$true] %s3357
      %3363 = dma.vmem_to_hbm [thread:$0]  %s3356, 2048, %s3358, [#allocation7], 128, 128, 8
    $region57: #{tpu_custom_call.1} parent=1 // pred_fallthru
      _
    // Predicated region
    $region58: #{tpu_custom_call.1} parent=1 // pred_check
      _
    $region59: #{tpu_custom_call.1} parent=1 // pred_check_branch
      %3365 = sbr.rel (0) target = $region61
    $region60: #{tpu_custom_call.1} parent=1 // pred_region
      %3367 = dma.done [#allocation7], 2048
    $region61: #{tpu_custom_call.1} parent=1 // pred_fallthru
      _
    %3368 = vsyncpa [#allocation6], 1
    %3369 = vsyncpa [#allocation9], 1
    %3370 = vsyncpa [#allocation7], 1

</llo_original>
